<compile_context>
chip_gen: v5e
topology: v5e:2x2
jax: 0.10.0
libtpu: 0.0.40
codegen_flags: <defaults>
</compile_context>

<pallas_src>
import jax
import jax.numpy as jnp
from jax.experimental import pallas as pl
from jax.experimental.pallas import tpu as pltpu

# ----------------------------- config -----------------------------------
INPUT_DIM = 1
HIDDEN = 32          # rnn_units
OUTPUT_DIM = 1
SEQ_LEN = 8
HORIZON = 4
NUM_LAYERS = 2
BATCH = 4
NUM_FEATURES = 3
FC_HIDDEN = [128, 128, 64, 64]


# ------------------------- fused forward kernel ---------------------------
def fused_gru_kernel(src_ref, *refs):
    """src_ref: (B, S, F). refs = per-layer GRU params (9 each), FC params (w,b)*5, out.

    Per-layer GRU param order: wz_x, wr_x, wh_x, wz_s, wr_s, wh_s, bz, br, bh.
    Weight refs are read lazily at their use sites so the compiler keeps them in VMEM
    and only materializes what it wants in vregs (avoids giant live ranges / spills).
    """
    out_ref = refs[-1]
    param_refs = refs[:-1]
    n_rnn = 9 * NUM_LAYERS
    rnn_refs = [param_refs[9 * i: 9 * (i + 1)] for i in range(NUM_LAYERS)]
    fc_refs = param_refs[n_rnn:]

    B = src_ref.shape[0]
    H = rnn_refs[0][3].shape[0]          # wz_s is (H, H)
    f32 = jnp.float32

    def dot(a, b):
        return jnp.dot(a, b, preferred_element_type=f32)

    src = src_ref[...]                                      # (B, S, F), tiny

    # ---------------- layer 0: Din == INPUT_DIM == 1 ----------------------
    # Hoist the input-path projections out of the recurrence. K=1 "matmuls" are done
    # as VPU broadcast multiplies (no MXU round trip on the serial chain); biases are
    # folded in here too, so the recurrent step is just: x-proj + state matmul.
    wz_x, wr_x, wh_x, wz_s, wr_s, wh_s, bz, br, bh = rnn_refs[0]
    x_t = [src[:, t, NUM_FEATURES - INPUT_DIM:] for t in range(SEQ_LEN)]   # (B, 1) each
    xz0 = [x * wz_x[...] + bz[...] for x in x_t]            # (B, H) each
    xr0 = [x * wr_x[...] + br[...] for x in x_t]
    xh0 = [x * wh_x[...] + bh[...] for x in x_t]

    s = jnp.zeros((B, H), f32)
    seq = []
    for t in range(SEQ_LEN):
        z = jax.nn.sigmoid(xz0[t] + dot(s, wz_s[...]))
        r = jax.nn.sigmoid(xr0[t] + dot(s, wr_s[...]))
        cand = jnp.tanh(xh0[t] + dot(z * s, wh_s[...]))
        s = r * s + (1.0 - r) * cand
        seq.append(s)

    # ---------------- layers 1..L-1: Din == H ------------------------------
    # Emitted layer-by-layer but in the same (unrolled) basic block: the data
    # dependencies allow the scheduler to interleave layer L step t with layer L-1
    # step t+1, filling idle MXU/EUP/VPU slots on the latency-bound recurrence.
    for layer in range(1, NUM_LAYERS):
        wz_x, wr_x, wh_x, wz_s, wr_s, wh_s, bz, br, bh = rnn_refs[layer]
        s = jnp.zeros((B, H), f32)
        nxt = []
        for t in range(SEQ_LEN):
            xin = seq[t]
            z = jax.nn.sigmoid(dot(xin, wz_x[...]) + dot(s, wz_s[...]) + bz[...])
            r = jax.nn.sigmoid(dot(xin, wr_x[...]) + dot(s, wr_s[...]) + br[...])
            cand = jnp.tanh(dot(xin, wh_x[...]) + dot(z * s, wh_s[...]) + bh[...])
            s = r * s + (1.0 - r) * cand
            nxt.append(s)
        seq = nxt

    # Lane-dense (B, HORIZON*H) = (4, 128) feature slab for the head — equivalent to
    # enc[:, -HORIZON:, :].reshape(B, HORIZON*H), built entirely in VMEM.
    feat = jnp.concatenate(seq[SEQ_LEN - HORIZON:], axis=-1)

    # ---------------- MLP head -------------------------------------------
    # TODO(synk): `fully_connected_layer` is not defined in the reference file;
    # implemented as Linear -> LayerNorm (identity affine) -> tanh per hidden layer,
    # dropout(0.5) skipped (inference mode), final Linear to 1 output.
    h = feat
    n_fc = len(fc_refs) // 2
    for i in range(n_fc - 1):
        w, b = fc_refs[2 * i], fc_refs[2 * i + 1]
        y = dot(h, w[...]) + b[...]
        mu = jnp.mean(y, axis=-1, keepdims=True)
        var = jnp.mean(y * y, axis=-1, keepdims=True) - mu * mu   # single-pass variance
        h = jnp.tanh((y - mu) * jax.lax.rsqrt(var + 1e-5))
    w, b = fc_refs[-2], fc_refs[-1]
    out_ref[...] = (dot(h, w[...]) + b[...]).astype(out_ref.dtype)


@jax.jit
def gru_forward(source, kernel_params):
    """source: (B, seq_len, num_features) -> (B, 1). One fused Pallas kernel call."""
    B = source.shape[0]
    return pl.pallas_call(
        fused_gru_kernel,
        out_shape=jax.ShapeDtypeStruct((B, OUTPUT_DIM), jnp.float32),
        # grid=() : single invocation; every operand is a whole-array VMEM block
        # loaded exactly once (~200 KB total, far below VMEM on v5e/v6e/v7x).
    )(source, *kernel_params)


# ------------------------ parameter initialization ------------------------
def xavier_uniform(key, fan_in, fan_out):
    limit = (6.0 / (fan_in + fan_out)) ** 0.5
    return jax.random.uniform(key, (fan_in, fan_out), jnp.float32, -limit, limit)


def init_params(key):
    """Parameters in the module's concatenated ([x,s] -> 2H) layout (reference form)."""
    params = {"rnn": [], "fc": []}
    dim_list = [INPUT_DIM] + [HIDDEN] * NUM_LAYERS
    for layer in range(NUM_LAYERS):
        din, dout = dim_list[layer], dim_list[layer + 1]
        key, *ks = jax.random.split(key, 7)
        wzr_x = xavier_uniform(ks[0], din, 2 * dout)
        wzr_s = xavier_uniform(ks[1], dout, 2 * dout)
        bzr = jax.random.uniform(ks[2], (1, 2 * dout), jnp.float32, 0.0, 1.0)
        wh_x = xavier_uniform(ks[3], din, dout)
        wh_s = xavier_uniform(ks[4], dout, dout)
        bh = jax.random.uniform(ks[5], (1, dout), jnp.float32, 0.0, 1.0)
        params["rnn"].append((wzr_x, wzr_s, bzr, wh_x, wh_s, bh))

    dims = [HORIZON * HIDDEN] + FC_HIDDEN + [1]
    for i in range(len(dims) - 1):
        key, kw, kb = jax.random.split(key, 3)
        w = xavier_uniform(kw, dims[i], dims[i + 1])
        b = jax.random.uniform(kb, (1, dims[i + 1]), jnp.float32, 0.0, 1.0)
        params["fc"].append((w, b))
    return params


def prepare_kernel_params(params):
    """One-time (off the hot path) split of the concatenated z/r weights into separate
    column blocks, flattened in the order the fused kernel expects."""
    flat = []
    for (wzr_x, wzr_s, bzr, wh_x, wh_s, bh) in params["rnn"]:
        H = wh_s.shape[0]
        flat += [wzr_x[:, :H], wzr_x[:, H:], wh_x,
                 wzr_s[:, :H], wzr_s[:, H:], wh_s,
                 bzr[:, :H], bzr[:, H:], bh]
    for (w, b) in params["fc"]:
        flat += [w, b]
    return tuple(flat)


# --------------------------- pure-JAX reference ----------------------------
def reference_forward(source, params):
    x = source[..., -INPUT_DIM:]
    cur = x
    for (wzr_x, wzr_s, bzr, wh_x, wh_s, bh) in params["rnn"]:
        B = cur.shape[0]
        H = wh_s.shape[0]
        s = jnp.zeros((B, H), jnp.float32)
        outs = []
        for t in range(cur.shape[1]):
            xt = cur[:, t, :]
            zr = jax.nn.sigmoid(xt @ wzr_x + s @ wzr_s + bzr)
            z, r = zr[:, :H], zr[:, H:]
            h_tmp = jnp.tanh(xt @ wh_x + (z * s) @ wh_s + bh)
            s = r * s + (1.0 - r) * h_tmp
            outs.append(s)
        cur = jnp.stack(outs, axis=1)
    feat = cur[:, -HORIZON:, :].reshape(cur.shape[0], HORIZON * HIDDEN)
    h = feat
    for (w, b) in params["fc"][:-1]:
        y = h @ w + b
        mu = jnp.mean(y, axis=-1, keepdims=True)
        var = jnp.mean((y - mu) ** 2, axis=-1, keepdims=True)
        h = jnp.tanh((y - mu) * jax.lax.rsqrt(var + 1e-5))
    w, b = params["fc"][-1]
    return h @ w + b


# ------------------------------- main --------------------------------------
if __name__ == "__main__":
    key = jax.random.PRNGKey(0)
    key_p, key_x = jax.random.split(key)
    params = init_params(key_p)
    kernel_params = prepare_kernel_params(params)
    source = jax.random.normal(key_x, (BATCH, SEQ_LEN, NUM_FEATURES), jnp.float32)

    out = jax.block_until_ready(gru_forward(source, kernel_params))
    assert out.shape == (BATCH, 1), out.shape

    ref = jax.block_until_ready(reference_forward(source, params))
    assert jnp.allclose(out, ref, rtol=1e-4, atol=1e-4), (out, ref)

    print("KERNEL_OK")
</pallas_src>

<mosaic_0001>
module attributes {stable_mosaic.version = 11 : i64} {
  func.func @fused_gru_kernel(%arg0: memref<4x8x3xf32, #tpu.memory_space<vmem>>, %arg1: memref<1x32xf32, #tpu.memory_space<vmem>>, %arg2: memref<1x32xf32, #tpu.memory_space<vmem>>, %arg3: memref<1x32xf32, #tpu.memory_space<vmem>>, %arg4: memref<32x32xf32, #tpu.memory_space<vmem>>, %arg5: memref<32x32xf32, #tpu.memory_space<vmem>>, %arg6: memref<32x32xf32, #tpu.memory_space<vmem>>, %arg7: memref<1x32xf32, #tpu.memory_space<vmem>>, %arg8: memref<1x32xf32, #tpu.memory_space<vmem>>, %arg9: memref<1x32xf32, #tpu.memory_space<vmem>>, %arg10: memref<32x32xf32, #tpu.memory_space<vmem>>, %arg11: memref<32x32xf32, #tpu.memory_space<vmem>>, %arg12: memref<32x32xf32, #tpu.memory_space<vmem>>, %arg13: memref<32x32xf32, #tpu.memory_space<vmem>>, %arg14: memref<32x32xf32, #tpu.memory_space<vmem>>, %arg15: memref<32x32xf32, #tpu.memory_space<vmem>>, %arg16: memref<1x32xf32, #tpu.memory_space<vmem>>, %arg17: memref<1x32xf32, #tpu.memory_space<vmem>>, %arg18: memref<1x32xf32, #tpu.memory_space<vmem>>, %arg19: memref<128x128xf32, #tpu.memory_space<vmem>>, %arg20: memref<1x128xf32, #tpu.memory_space<vmem>>, %arg21: memref<128x128xf32, #tpu.memory_space<vmem>>, %arg22: memref<1x128xf32, #tpu.memory_space<vmem>>, %arg23: memref<128x64xf32, #tpu.memory_space<vmem>>, %arg24: memref<1x64xf32, #tpu.memory_space<vmem>>, %arg25: memref<64x64xf32, #tpu.memory_space<vmem>>, %arg26: memref<1x64xf32, #tpu.memory_space<vmem>>, %arg27: memref<64x1xf32, #tpu.memory_space<vmem>>, %arg28: memref<1x1xf32, #tpu.memory_space<vmem>>, %arg29: memref<4x1xf32, #tpu.memory_space<vmem>>) attributes {dimension_semantics = [], scalar_prefetch = 0 : i64, scratch_operands = 0 : i64, tpu.core_type = #tpu.core_type<tc>} {
    %c0 = arith.constant 0 : index
    %c0_0 = arith.constant 0 : index
    %c0_1 = arith.constant 0 : index
    %0 = vector.load %arg0[%c0, %c0_0, %c0_1] : memref<4x8x3xf32, #tpu.memory_space<vmem>>, vector<4x8x3xf32>
    %1 = vector.extract_strided_slice %0 {offsets = [0, 0, 2], sizes = [4, 1, 1], strides = [1, 1, 1]} : vector<4x8x3xf32> to vector<4x1x1xf32>
    %2 = vector.shape_cast %1 : vector<4x1x1xf32> to vector<4x1xf32>
    %3 = vector.extract_strided_slice %0 {offsets = [0, 1, 2], sizes = [4, 1, 1], strides = [1, 1, 1]} : vector<4x8x3xf32> to vector<4x1x1xf32>
    %4 = vector.shape_cast %3 : vector<4x1x1xf32> to vector<4x1xf32>
    %5 = vector.extract_strided_slice %0 {offsets = [0, 2, 2], sizes = [4, 1, 1], strides = [1, 1, 1]} : vector<4x8x3xf32> to vector<4x1x1xf32>
    %6 = vector.shape_cast %5 : vector<4x1x1xf32> to vector<4x1xf32>
    %7 = vector.extract_strided_slice %0 {offsets = [0, 3, 2], sizes = [4, 1, 1], strides = [1, 1, 1]} : vector<4x8x3xf32> to vector<4x1x1xf32>
    %8 = vector.shape_cast %7 : vector<4x1x1xf32> to vector<4x1xf32>
    %9 = vector.extract_strided_slice %0 {offsets = [0, 4, 2], sizes = [4, 1, 1], strides = [1, 1, 1]} : vector<4x8x3xf32> to vector<4x1x1xf32>
    %10 = vector.shape_cast %9 : vector<4x1x1xf32> to vector<4x1xf32>
    %11 = vector.extract_strided_slice %0 {offsets = [0, 5, 2], sizes = [4, 1, 1], strides = [1, 1, 1]} : vector<4x8x3xf32> to vector<4x1x1xf32>
    %12 = vector.shape_cast %11 : vector<4x1x1xf32> to vector<4x1xf32>
    %13 = vector.extract_strided_slice %0 {offsets = [0, 6, 2], sizes = [4, 1, 1], strides = [1, 1, 1]} : vector<4x8x3xf32> to vector<4x1x1xf32>
    %14 = vector.shape_cast %13 : vector<4x1x1xf32> to vector<4x1xf32>
    %15 = vector.extract_strided_slice %0 {offsets = [0, 7, 2], sizes = [4, 1, 1], strides = [1, 1, 1]} : vector<4x8x3xf32> to vector<4x1x1xf32>
    %16 = vector.shape_cast %15 : vector<4x1x1xf32> to vector<4x1xf32>
    %c0_2 = arith.constant 0 : index
    %c0_3 = arith.constant 0 : index
    %17 = vector.load %arg1[%c0_2, %c0_3] : memref<1x32xf32, #tpu.memory_space<vmem>>, vector<1x32xf32>
    %18 = vector.broadcast %2 : vector<4x1xf32> to vector<4x32xf32>
    %19 = vector.broadcast %17 : vector<1x32xf32> to vector<4x32xf32>
    %20 = arith.mulf %18, %19 : vector<4x32xf32>
    %c0_4 = arith.constant 0 : index
    %c0_5 = arith.constant 0 : index
    %21 = vector.load %arg7[%c0_4, %c0_5] : memref<1x32xf32, #tpu.memory_space<vmem>>, vector<1x32xf32>
    %22 = vector.broadcast %21 : vector<1x32xf32> to vector<4x32xf32>
    %23 = arith.addf %20, %22 : vector<4x32xf32>
    %c0_6 = arith.constant 0 : index
    %c0_7 = arith.constant 0 : index
    %24 = vector.load %arg1[%c0_6, %c0_7] : memref<1x32xf32, #tpu.memory_space<vmem>>, vector<1x32xf32>
    %25 = vector.broadcast %4 : vector<4x1xf32> to vector<4x32xf32>
    %26 = vector.broadcast %24 : vector<1x32xf32> to vector<4x32xf32>
    %27 = arith.mulf %25, %26 : vector<4x32xf32>
    %c0_8 = arith.constant 0 : index
    %c0_9 = arith.constant 0 : index
    %28 = vector.load %arg7[%c0_8, %c0_9] : memref<1x32xf32, #tpu.memory_space<vmem>>, vector<1x32xf32>
    %29 = vector.broadcast %28 : vector<1x32xf32> to vector<4x32xf32>
    %30 = arith.addf %27, %29 : vector<4x32xf32>
    %c0_10 = arith.constant 0 : index
    %c0_11 = arith.constant 0 : index
    %31 = vector.load %arg1[%c0_10, %c0_11] : memref<1x32xf32, #tpu.memory_space<vmem>>, vector<1x32xf32>
    %32 = vector.broadcast %6 : vector<4x1xf32> to vector<4x32xf32>
    %33 = vector.broadcast %31 : vector<1x32xf32> to vector<4x32xf32>
    %34 = arith.mulf %32, %33 : vector<4x32xf32>
    %c0_12 = arith.constant 0 : index
    %c0_13 = arith.constant 0 : index
    %35 = vector.load %arg7[%c0_12, %c0_13] : memref<1x32xf32, #tpu.memory_space<vmem>>, vector<1x32xf32>
    %36 = vector.broadcast %35 : vector<1x32xf32> to vector<4x32xf32>
    %37 = arith.addf %34, %36 : vector<4x32xf32>
    %c0_14 = arith.constant 0 : index
    %c0_15 = arith.constant 0 : index
    %38 = vector.load %arg1[%c0_14, %c0_15] : memref<1x32xf32, #tpu.memory_space<vmem>>, vector<1x32xf32>
    %39 = vector.broadcast %8 : vector<4x1xf32> to vector<4x32xf32>
    %40 = vector.broadcast %38 : vector<1x32xf32> to vector<4x32xf32>
    %41 = arith.mulf %39, %40 : vector<4x32xf32>
    %c0_16 = arith.constant 0 : index
    %c0_17 = arith.constant 0 : index
    %42 = vector.load %arg7[%c0_16, %c0_17] : memref<1x32xf32, #tpu.memory_space<vmem>>, vector<1x32xf32>
    %43 = vector.broadcast %42 : vector<1x32xf32> to vector<4x32xf32>
    %44 = arith.addf %41, %43 : vector<4x32xf32>
    %c0_18 = arith.constant 0 : index
    %c0_19 = arith.constant 0 : index
    %45 = vector.load %arg1[%c0_18, %c0_19] : memref<1x32xf32, #tpu.memory_space<vmem>>, vector<1x32xf32>
    %46 = vector.broadcast %10 : vector<4x1xf32> to vector<4x32xf32>
    %47 = vector.broadcast %45 : vector<1x32xf32> to vector<4x32xf32>
    %48 = arith.mulf %46, %47 : vector<4x32xf32>
    %c0_20 = arith.constant 0 : index
    %c0_21 = arith.constant 0 : index
    %49 = vector.load %arg7[%c0_20, %c0_21] : memref<1x32xf32, #tpu.memory_space<vmem>>, vector<1x32xf32>
    %50 = vector.broadcast %49 : vector<1x32xf32> to vector<4x32xf32>
    %51 = arith.addf %48, %50 : vector<4x32xf32>
    %c0_22 = arith.constant 0 : index
    %c0_23 = arith.constant 0 : index
    %52 = vector.load %arg1[%c0_22, %c0_23] : memref<1x32xf32, #tpu.memory_space<vmem>>, vector<1x32xf32>
    %53 = vector.broadcast %12 : vector<4x1xf32> to vector<4x32xf32>
    %54 = vector.broadcast %52 : vector<1x32xf32> to vector<4x32xf32>
    %55 = arith.mulf %53, %54 : vector<4x32xf32>
    %c0_24 = arith.constant 0 : index
    %c0_25 = arith.constant 0 : index
    %56 = vector.load %arg7[%c0_24, %c0_25] : memref<1x32xf32, #tpu.memory_space<vmem>>, vector<1x32xf32>
    %57 = vector.broadcast %56 : vector<1x32xf32> to vector<4x32xf32>
    %58 = arith.addf %55, %57 : vector<4x32xf32>
    %c0_26 = arith.constant 0 : index
    %c0_27 = arith.constant 0 : index
    %59 = vector.load %arg1[%c0_26, %c0_27] : memref<1x32xf32, #tpu.memory_space<vmem>>, vector<1x32xf32>
    %60 = vector.broadcast %14 : vector<4x1xf32> to vector<4x32xf32>
    %61 = vector.broadcast %59 : vector<1x32xf32> to vector<4x32xf32>
    %62 = arith.mulf %60, %61 : vector<4x32xf32>
    %c0_28 = arith.constant 0 : index
    %c0_29 = arith.constant 0 : index
    %63 = vector.load %arg7[%c0_28, %c0_29] : memref<1x32xf32, #tpu.memory_space<vmem>>, vector<1x32xf32>
    %64 = vector.broadcast %63 : vector<1x32xf32> to vector<4x32xf32>
    %65 = arith.addf %62, %64 : vector<4x32xf32>
    %c0_30 = arith.constant 0 : index
    %c0_31 = arith.constant 0 : index
    %66 = vector.load %arg1[%c0_30, %c0_31] : memref<1x32xf32, #tpu.memory_space<vmem>>, vector<1x32xf32>
    %67 = vector.broadcast %16 : vector<4x1xf32> to vector<4x32xf32>
    %68 = vector.broadcast %66 : vector<1x32xf32> to vector<4x32xf32>
    %69 = arith.mulf %67, %68 : vector<4x32xf32>
    %c0_32 = arith.constant 0 : index
    %c0_33 = arith.constant 0 : index
    %70 = vector.load %arg7[%c0_32, %c0_33] : memref<1x32xf32, #tpu.memory_space<vmem>>, vector<1x32xf32>
    %71 = vector.broadcast %70 : vector<1x32xf32> to vector<4x32xf32>
    %72 = arith.addf %69, %71 : vector<4x32xf32>
    %c0_34 = arith.constant 0 : index
    %c0_35 = arith.constant 0 : index
    %73 = vector.load %arg2[%c0_34, %c0_35] : memref<1x32xf32, #tpu.memory_space<vmem>>, vector<1x32xf32>
    %74 = vector.broadcast %2 : vector<4x1xf32> to vector<4x32xf32>
    %75 = vector.broadcast %73 : vector<1x32xf32> to vector<4x32xf32>
    %76 = arith.mulf %74, %75 : vector<4x32xf32>
    %c0_36 = arith.constant 0 : index
    %c0_37 = arith.constant 0 : index
    %77 = vector.load %arg8[%c0_36, %c0_37] : memref<1x32xf32, #tpu.memory_space<vmem>>, vector<1x32xf32>
    %78 = vector.broadcast %77 : vector<1x32xf32> to vector<4x32xf32>
    %79 = arith.addf %76, %78 : vector<4x32xf32>
    %c0_38 = arith.constant 0 : index
    %c0_39 = arith.constant 0 : index
    %80 = vector.load %arg2[%c0_38, %c0_39] : memref<1x32xf32, #tpu.memory_space<vmem>>, vector<1x32xf32>
    %81 = vector.broadcast %4 : vector<4x1xf32> to vector<4x32xf32>
    %82 = vector.broadcast %80 : vector<1x32xf32> to vector<4x32xf32>
    %83 = arith.mulf %81, %82 : vector<4x32xf32>
    %c0_40 = arith.constant 0 : index
    %c0_41 = arith.constant 0 : index
    %84 = vector.load %arg8[%c0_40, %c0_41] : memref<1x32xf32, #tpu.memory_space<vmem>>, vector<1x32xf32>
    %85 = vector.broadcast %84 : vector<1x32xf32> to vector<4x32xf32>
    %86 = arith.addf %83, %85 : vector<4x32xf32>
    %c0_42 = arith.constant 0 : index
    %c0_43 = arith.constant 0 : index
    %87 = vector.load %arg2[%c0_42, %c0_43] : memref<1x32xf32, #tpu.memory_space<vmem>>, vector<1x32xf32>
    %88 = vector.broadcast %6 : vector<4x1xf32> to vector<4x32xf32>
    %89 = vector.broadcast %87 : vector<1x32xf32> to vector<4x32xf32>
    %90 = arith.mulf %88, %89 : vector<4x32xf32>
    %c0_44 = arith.constant 0 : index
    %c0_45 = arith.constant 0 : index
    %91 = vector.load %arg8[%c0_44, %c0_45] : memref<1x32xf32, #tpu.memory_space<vmem>>, vector<1x32xf32>
    %92 = vector.broadcast %91 : vector<1x32xf32> to vector<4x32xf32>
    %93 = arith.addf %90, %92 : vector<4x32xf32>
    %c0_46 = arith.constant 0 : index
    %c0_47 = arith.constant 0 : index
    %94 = vector.load %arg2[%c0_46, %c0_47] : memref<1x32xf32, #tpu.memory_space<vmem>>, vector<1x32xf32>
    %95 = vector.broadcast %8 : vector<4x1xf32> to vector<4x32xf32>
    %96 = vector.broadcast %94 : vector<1x32xf32> to vector<4x32xf32>
    %97 = arith.mulf %95, %96 : vector<4x32xf32>
    %c0_48 = arith.constant 0 : index
    %c0_49 = arith.constant 0 : index
    %98 = vector.load %arg8[%c0_48, %c0_49] : memref<1x32xf32, #tpu.memory_space<vmem>>, vector<1x32xf32>
    %99 = vector.broadcast %98 : vector<1x32xf32> to vector<4x32xf32>
    %100 = arith.addf %97, %99 : vector<4x32xf32>
    %c0_50 = arith.constant 0 : index
    %c0_51 = arith.constant 0 : index
    %101 = vector.load %arg2[%c0_50, %c0_51] : memref<1x32xf32, #tpu.memory_space<vmem>>, vector<1x32xf32>
    %102 = vector.broadcast %10 : vector<4x1xf32> to vector<4x32xf32>
    %103 = vector.broadcast %101 : vector<1x32xf32> to vector<4x32xf32>
    %104 = arith.mulf %102, %103 : vector<4x32xf32>
    %c0_52 = arith.constant 0 : index
    %c0_53 = arith.constant 0 : index
    %105 = vector.load %arg8[%c0_52, %c0_53] : memref<1x32xf32, #tpu.memory_space<vmem>>, vector<1x32xf32>
    %106 = vector.broadcast %105 : vector<1x32xf32> to vector<4x32xf32>
    %107 = arith.addf %104, %106 : vector<4x32xf32>
    %c0_54 = arith.constant 0 : index
    %c0_55 = arith.constant 0 : index
    %108 = vector.load %arg2[%c0_54, %c0_55] : memref<1x32xf32, #tpu.memory_space<vmem>>, vector<1x32xf32>
    %109 = vector.broadcast %12 : vector<4x1xf32> to vector<4x32xf32>
    %110 = vector.broadcast %108 : vector<1x32xf32> to vector<4x32xf32>
    %111 = arith.mulf %109, %110 : vector<4x32xf32>
    %c0_56 = arith.constant 0 : index
    %c0_57 = arith.constant 0 : index
    %112 = vector.load %arg8[%c0_56, %c0_57] : memref<1x32xf32, #tpu.memory_space<vmem>>, vector<1x32xf32>
    %113 = vector.broadcast %112 : vector<1x32xf32> to vector<4x32xf32>
    %114 = arith.addf %111, %113 : vector<4x32xf32>
    %c0_58 = arith.constant 0 : index
    %c0_59 = arith.constant 0 : index
    %115 = vector.load %arg2[%c0_58, %c0_59] : memref<1x32xf32, #tpu.memory_space<vmem>>, vector<1x32xf32>
    %116 = vector.broadcast %14 : vector<4x1xf32> to vector<4x32xf32>
    %117 = vector.broadcast %115 : vector<1x32xf32> to vector<4x32xf32>
    %118 = arith.mulf %116, %117 : vector<4x32xf32>
    %c0_60 = arith.constant 0 : index
    %c0_61 = arith.constant 0 : index
    %119 = vector.load %arg8[%c0_60, %c0_61] : memref<1x32xf32, #tpu.memory_space<vmem>>, vector<1x32xf32>
    %120 = vector.broadcast %119 : vector<1x32xf32> to vector<4x32xf32>
    %121 = arith.addf %118, %120 : vector<4x32xf32>
    %c0_62 = arith.constant 0 : index
    %c0_63 = arith.constant 0 : index
    %122 = vector.load %arg2[%c0_62, %c0_63] : memref<1x32xf32, #tpu.memory_space<vmem>>, vector<1x32xf32>
    %123 = vector.broadcast %16 : vector<4x1xf32> to vector<4x32xf32>
    %124 = vector.broadcast %122 : vector<1x32xf32> to vector<4x32xf32>
    %125 = arith.mulf %123, %124 : vector<4x32xf32>
    %c0_64 = arith.constant 0 : index
    %c0_65 = arith.constant 0 : index
    %126 = vector.load %arg8[%c0_64, %c0_65] : memref<1x32xf32, #tpu.memory_space<vmem>>, vector<1x32xf32>
    %127 = vector.broadcast %126 : vector<1x32xf32> to vector<4x32xf32>
    %128 = arith.addf %125, %127 : vector<4x32xf32>
    %c0_66 = arith.constant 0 : index
    %c0_67 = arith.constant 0 : index
    %129 = vector.load %arg3[%c0_66, %c0_67] : memref<1x32xf32, #tpu.memory_space<vmem>>, vector<1x32xf32>
    %130 = vector.broadcast %2 : vector<4x1xf32> to vector<4x32xf32>
    %131 = vector.broadcast %129 : vector<1x32xf32> to vector<4x32xf32>
    %132 = arith.mulf %130, %131 : vector<4x32xf32>
    %c0_68 = arith.constant 0 : index
    %c0_69 = arith.constant 0 : index
    %133 = vector.load %arg9[%c0_68, %c0_69] : memref<1x32xf32, #tpu.memory_space<vmem>>, vector<1x32xf32>
    %134 = vector.broadcast %133 : vector<1x32xf32> to vector<4x32xf32>
    %135 = arith.addf %132, %134 : vector<4x32xf32>
    %c0_70 = arith.constant 0 : index
    %c0_71 = arith.constant 0 : index
    %136 = vector.load %arg3[%c0_70, %c0_71] : memref<1x32xf32, #tpu.memory_space<vmem>>, vector<1x32xf32>
    %137 = vector.broadcast %4 : vector<4x1xf32> to vector<4x32xf32>
    %138 = vector.broadcast %136 : vector<1x32xf32> to vector<4x32xf32>
    %139 = arith.mulf %137, %138 : vector<4x32xf32>
    %c0_72 = arith.constant 0 : index
    %c0_73 = arith.constant 0 : index
    %140 = vector.load %arg9[%c0_72, %c0_73] : memref<1x32xf32, #tpu.memory_space<vmem>>, vector<1x32xf32>
    %141 = vector.broadcast %140 : vector<1x32xf32> to vector<4x32xf32>
    %142 = arith.addf %139, %141 : vector<4x32xf32>
    %c0_74 = arith.constant 0 : index
    %c0_75 = arith.constant 0 : index
    %143 = vector.load %arg3[%c0_74, %c0_75] : memref<1x32xf32, #tpu.memory_space<vmem>>, vector<1x32xf32>
    %144 = vector.broadcast %6 : vector<4x1xf32> to vector<4x32xf32>
    %145 = vector.broadcast %143 : vector<1x32xf32> to vector<4x32xf32>
    %146 = arith.mulf %144, %145 : vector<4x32xf32>
    %c0_76 = arith.constant 0 : index
    %c0_77 = arith.constant 0 : index
    %147 = vector.load %arg9[%c0_76, %c0_77] : memref<1x32xf32, #tpu.memory_space<vmem>>, vector<1x32xf32>
    %148 = vector.broadcast %147 : vector<1x32xf32> to vector<4x32xf32>
    %149 = arith.addf %146, %148 : vector<4x32xf32>
    %c0_78 = arith.constant 0 : index
    %c0_79 = arith.constant 0 : index
    %150 = vector.load %arg3[%c0_78, %c0_79] : memref<1x32xf32, #tpu.memory_space<vmem>>, vector<1x32xf32>
    %151 = vector.broadcast %8 : vector<4x1xf32> to vector<4x32xf32>
    %152 = vector.broadcast %150 : vector<1x32xf32> to vector<4x32xf32>
    %153 = arith.mulf %151, %152 : vector<4x32xf32>
    %c0_80 = arith.constant 0 : index
    %c0_81 = arith.constant 0 : index
    %154 = vector.load %arg9[%c0_80, %c0_81] : memref<1x32xf32, #tpu.memory_space<vmem>>, vector<1x32xf32>
    %155 = vector.broadcast %154 : vector<1x32xf32> to vector<4x32xf32>
    %156 = arith.addf %153, %155 : vector<4x32xf32>
    %c0_82 = arith.constant 0 : index
    %c0_83 = arith.constant 0 : index
    %157 = vector.load %arg3[%c0_82, %c0_83] : memref<1x32xf32, #tpu.memory_space<vmem>>, vector<1x32xf32>
    %158 = vector.broadcast %10 : vector<4x1xf32> to vector<4x32xf32>
    %159 = vector.broadcast %157 : vector<1x32xf32> to vector<4x32xf32>
    %160 = arith.mulf %158, %159 : vector<4x32xf32>
    %c0_84 = arith.constant 0 : index
    %c0_85 = arith.constant 0 : index
    %161 = vector.load %arg9[%c0_84, %c0_85] : memref<1x32xf32, #tpu.memory_space<vmem>>, vector<1x32xf32>
    %162 = vector.broadcast %161 : vector<1x32xf32> to vector<4x32xf32>
    %163 = arith.addf %160, %162 : vector<4x32xf32>
    %c0_86 = arith.constant 0 : index
    %c0_87 = arith.constant 0 : index
    %164 = vector.load %arg3[%c0_86, %c0_87] : memref<1x32xf32, #tpu.memory_space<vmem>>, vector<1x32xf32>
    %165 = vector.broadcast %12 : vector<4x1xf32> to vector<4x32xf32>
    %166 = vector.broadcast %164 : vector<1x32xf32> to vector<4x32xf32>
    %167 = arith.mulf %165, %166 : vector<4x32xf32>
    %c0_88 = arith.constant 0 : index
    %c0_89 = arith.constant 0 : index
    %168 = vector.load %arg9[%c0_88, %c0_89] : memref<1x32xf32, #tpu.memory_space<vmem>>, vector<1x32xf32>
    %169 = vector.broadcast %168 : vector<1x32xf32> to vector<4x32xf32>
    %170 = arith.addf %167, %169 : vector<4x32xf32>
    %c0_90 = arith.constant 0 : index
    %c0_91 = arith.constant 0 : index
    %171 = vector.load %arg3[%c0_90, %c0_91] : memref<1x32xf32, #tpu.memory_space<vmem>>, vector<1x32xf32>
    %172 = vector.broadcast %14 : vector<4x1xf32> to vector<4x32xf32>
    %173 = vector.broadcast %171 : vector<1x32xf32> to vector<4x32xf32>
    %174 = arith.mulf %172, %173 : vector<4x32xf32>
    %c0_92 = arith.constant 0 : index
    %c0_93 = arith.constant 0 : index
    %175 = vector.load %arg9[%c0_92, %c0_93] : memref<1x32xf32, #tpu.memory_space<vmem>>, vector<1x32xf32>
    %176 = vector.broadcast %175 : vector<1x32xf32> to vector<4x32xf32>
    %177 = arith.addf %174, %176 : vector<4x32xf32>
    %c0_94 = arith.constant 0 : index
    %c0_95 = arith.constant 0 : index
    %178 = vector.load %arg3[%c0_94, %c0_95] : memref<1x32xf32, #tpu.memory_space<vmem>>, vector<1x32xf32>
    %179 = vector.broadcast %16 : vector<4x1xf32> to vector<4x32xf32>
    %180 = vector.broadcast %178 : vector<1x32xf32> to vector<4x32xf32>
    %181 = arith.mulf %179, %180 : vector<4x32xf32>
    %c0_96 = arith.constant 0 : index
    %c0_97 = arith.constant 0 : index
    %182 = vector.load %arg9[%c0_96, %c0_97] : memref<1x32xf32, #tpu.memory_space<vmem>>, vector<1x32xf32>
    %183 = vector.broadcast %182 : vector<1x32xf32> to vector<4x32xf32>
    %184 = arith.addf %181, %183 : vector<4x32xf32>
    %cst = arith.constant 0.000000e+00 : f32
    %185 = vector.broadcast %cst : f32 to vector<4x32xf32>
    %c0_98 = arith.constant 0 : index
    %c0_99 = arith.constant 0 : index
    %186 = vector.load %arg4[%c0_98, %c0_99] : memref<32x32xf32, #tpu.memory_space<vmem>>, vector<32x32xf32>
    %cst_100 = arith.constant dense<0.000000e+00> : vector<4x32xf32>
    %187 = tpu.matmul %185, %186, %cst_100 {dimension_numbers = #tpu.dot_dimension_numbers<[1], [0], [0], [1], [0, 0, 1, 1], [], []>} : vector<4x32xf32>, vector<32x32xf32>, vector<4x32xf32> -> vector<4x32xf32>
    %188 = arith.addf %23, %187 : vector<4x32xf32>
    %189 = arith.negf %188 : vector<4x32xf32>
    %190 = math.exp %189 : vector<4x32xf32>
    %cst_101 = arith.constant 1.000000e+00 : f32
    %191 = vector.broadcast %cst_101 : f32 to vector<4x32xf32>
    %192 = arith.addf %191, %190 : vector<4x32xf32>
    %193 = arith.divf %191, %192 : vector<4x32xf32>
    %c0_102 = arith.constant 0 : index
    %c0_103 = arith.constant 0 : index
    %194 = vector.load %arg5[%c0_102, %c0_103] : memref<32x32xf32, #tpu.memory_space<vmem>>, vector<32x32xf32>
    %cst_104 = arith.constant dense<0.000000e+00> : vector<4x32xf32>
    %195 = tpu.matmul %185, %194, %cst_104 {dimension_numbers = #tpu.dot_dimension_numbers<[1], [0], [0], [1], [0, 0, 1, 1], [], []>} : vector<4x32xf32>, vector<32x32xf32>, vector<4x32xf32> -> vector<4x32xf32>
    %196 = arith.addf %79, %195 : vector<4x32xf32>
    %197 = arith.negf %196 : vector<4x32xf32>
    %198 = math.exp %197 : vector<4x32xf32>
    %cst_105 = arith.constant 1.000000e+00 : f32
    %199 = vector.broadcast %cst_105 : f32 to vector<4x32xf32>
    %200 = arith.addf %199, %198 : vector<4x32xf32>
    %201 = arith.divf %199, %200 : vector<4x32xf32>
    %202 = arith.mulf %193, %185 : vector<4x32xf32>
    %c0_106 = arith.constant 0 : index
    %c0_107 = arith.constant 0 : index
    %203 = vector.load %arg6[%c0_106, %c0_107] : memref<32x32xf32, #tpu.memory_space<vmem>>, vector<32x32xf32>
    %cst_108 = arith.constant dense<0.000000e+00> : vector<4x32xf32>
    %204 = tpu.matmul %202, %203, %cst_108 {dimension_numbers = #tpu.dot_dimension_numbers<[1], [0], [0], [1], [0, 0, 1, 1], [], []>} : vector<4x32xf32>, vector<32x32xf32>, vector<4x32xf32> -> vector<4x32xf32>
    %205 = arith.addf %135, %204 : vector<4x32xf32>
    %206 = math.tanh %205 : vector<4x32xf32>
    %207 = arith.mulf %201, %185 : vector<4x32xf32>
    %cst_109 = arith.constant 1.000000e+00 : f32
    %208 = vector.broadcast %cst_109 : f32 to vector<4x32xf32>
    %209 = arith.subf %208, %201 : vector<4x32xf32>
    %210 = arith.mulf %209, %206 : vector<4x32xf32>
    %211 = arith.addf %207, %210 : vector<4x32xf32>
    %c0_110 = arith.constant 0 : index
    %c0_111 = arith.constant 0 : index
    %212 = vector.load %arg4[%c0_110, %c0_111] : memref<32x32xf32, #tpu.memory_space<vmem>>, vector<32x32xf32>
    %cst_112 = arith.constant dense<0.000000e+00> : vector<4x32xf32>
    %213 = tpu.matmul %211, %212, %cst_112 {dimension_numbers = #tpu.dot_dimension_numbers<[1], [0], [0], [1], [0, 0, 1, 1], [], []>} : vector<4x32xf32>, vector<32x32xf32>, vector<4x32xf32> -> vector<4x32xf32>
    %214 = arith.addf %30, %213 : vector<4x32xf32>
    %215 = arith.negf %214 : vector<4x32xf32>
    %216 = math.exp %215 : vector<4x32xf32>
    %cst_113 = arith.constant 1.000000e+00 : f32
    %217 = vector.broadcast %cst_113 : f32 to vector<4x32xf32>
    %218 = arith.addf %217, %216 : vector<4x32xf32>
    %219 = arith.divf %217, %218 : vector<4x32xf32>
    %c0_114 = arith.constant 0 : index
    %c0_115 = arith.constant 0 : index
    %220 = vector.load %arg5[%c0_114, %c0_115] : memref<32x32xf32, #tpu.memory_space<vmem>>, vector<32x32xf32>
    %cst_116 = arith.constant dense<0.000000e+00> : vector<4x32xf32>
    %221 = tpu.matmul %211, %220, %cst_116 {dimension_numbers = #tpu.dot_dimension_numbers<[1], [0], [0], [1], [0, 0, 1, 1], [], []>} : vector<4x32xf32>, vector<32x32xf32>, vector<4x32xf32> -> vector<4x32xf32>
    %222 = arith.addf %86, %221 : vector<4x32xf32>
    %223 = arith.negf %222 : vector<4x32xf32>
    %224 = math.exp %223 : vector<4x32xf32>
    %cst_117 = arith.constant 1.000000e+00 : f32
    %225 = vector.broadcast %cst_117 : f32 to vector<4x32xf32>
    %226 = arith.addf %225, %224 : vector<4x32xf32>
    %227 = arith.divf %225, %226 : vector<4x32xf32>
    %228 = arith.mulf %219, %211 : vector<4x32xf32>
    %c0_118 = arith.constant 0 : index
    %c0_119 = arith.constant 0 : index
    %229 = vector.load %arg6[%c0_118, %c0_119] : memref<32x32xf32, #tpu.memory_space<vmem>>, vector<32x32xf32>
    %cst_120 = arith.constant dense<0.000000e+00> : vector<4x32xf32>
    %230 = tpu.matmul %228, %229, %cst_120 {dimension_numbers = #tpu.dot_dimension_numbers<[1], [0], [0], [1], [0, 0, 1, 1], [], []>} : vector<4x32xf32>, vector<32x32xf32>, vector<4x32xf32> -> vector<4x32xf32>
    %231 = arith.addf %142, %230 : vector<4x32xf32>
    %232 = math.tanh %231 : vector<4x32xf32>
    %233 = arith.mulf %227, %211 : vector<4x32xf32>
    %cst_121 = arith.constant 1.000000e+00 : f32
    %234 = vector.broadcast %cst_121 : f32 to vector<4x32xf32>
    %235 = arith.subf %234, %227 : vector<4x32xf32>
    %236 = arith.mulf %235, %232 : vector<4x32xf32>
    %237 = arith.addf %233, %236 : vector<4x32xf32>
    %c0_122 = arith.constant 0 : index
    %c0_123 = arith.constant 0 : index
    %238 = vector.load %arg4[%c0_122, %c0_123] : memref<32x32xf32, #tpu.memory_space<vmem>>, vector<32x32xf32>
    %cst_124 = arith.constant dense<0.000000e+00> : vector<4x32xf32>
    %239 = tpu.matmul %237, %238, %cst_124 {dimension_numbers = #tpu.dot_dimension_numbers<[1], [0], [0], [1], [0, 0, 1, 1], [], []>} : vector<4x32xf32>, vector<32x32xf32>, vector<4x32xf32> -> vector<4x32xf32>
    %240 = arith.addf %37, %239 : vector<4x32xf32>
    %241 = arith.negf %240 : vector<4x32xf32>
    %242 = math.exp %241 : vector<4x32xf32>
    %cst_125 = arith.constant 1.000000e+00 : f32
    %243 = vector.broadcast %cst_125 : f32 to vector<4x32xf32>
    %244 = arith.addf %243, %242 : vector<4x32xf32>
    %245 = arith.divf %243, %244 : vector<4x32xf32>
    %c0_126 = arith.constant 0 : index
    %c0_127 = arith.constant 0 : index
    %246 = vector.load %arg5[%c0_126, %c0_127] : memref<32x32xf32, #tpu.memory_space<vmem>>, vector<32x32xf32>
    %cst_128 = arith.constant dense<0.000000e+00> : vector<4x32xf32>
    %247 = tpu.matmul %237, %246, %cst_128 {dimension_numbers = #tpu.dot_dimension_numbers<[1], [0], [0], [1], [0, 0, 1, 1], [], []>} : vector<4x32xf32>, vector<32x32xf32>, vector<4x32xf32> -> vector<4x32xf32>
    %248 = arith.addf %93, %247 : vector<4x32xf32>
    %249 = arith.negf %248 : vector<4x32xf32>
    %250 = math.exp %249 : vector<4x32xf32>
    %cst_129 = arith.constant 1.000000e+00 : f32
    %251 = vector.broadcast %cst_129 : f32 to vector<4x32xf32>
    %252 = arith.addf %251, %250 : vector<4x32xf32>
    %253 = arith.divf %251, %252 : vector<4x32xf32>
    %254 = arith.mulf %245, %237 : vector<4x32xf32>
    %c0_130 = arith.constant 0 : index
    %c0_131 = arith.constant 0 : index
    %255 = vector.load %arg6[%c0_130, %c0_131] : memref<32x32xf32, #tpu.memory_space<vmem>>, vector<32x32xf32>
    %cst_132 = arith.constant dense<0.000000e+00> : vector<4x32xf32>
    %256 = tpu.matmul %254, %255, %cst_132 {dimension_numbers = #tpu.dot_dimension_numbers<[1], [0], [0], [1], [0, 0, 1, 1], [], []>} : vector<4x32xf32>, vector<32x32xf32>, vector<4x32xf32> -> vector<4x32xf32>
    %257 = arith.addf %149, %256 : vector<4x32xf32>
    %258 = math.tanh %257 : vector<4x32xf32>
    %259 = arith.mulf %253, %237 : vector<4x32xf32>
    %cst_133 = arith.constant 1.000000e+00 : f32
    %260 = vector.broadcast %cst_133 : f32 to vector<4x32xf32>
    %261 = arith.subf %260, %253 : vector<4x32xf32>
    %262 = arith.mulf %261, %258 : vector<4x32xf32>
    %263 = arith.addf %259, %262 : vector<4x32xf32>
    %c0_134 = arith.constant 0 : index
    %c0_135 = arith.constant 0 : index
    %264 = vector.load %arg4[%c0_134, %c0_135] : memref<32x32xf32, #tpu.memory_space<vmem>>, vector<32x32xf32>
    %cst_136 = arith.constant dense<0.000000e+00> : vector<4x32xf32>
    %265 = tpu.matmul %263, %264, %cst_136 {dimension_numbers = #tpu.dot_dimension_numbers<[1], [0], [0], [1], [0, 0, 1, 1], [], []>} : vector<4x32xf32>, vector<32x32xf32>, vector<4x32xf32> -> vector<4x32xf32>
    %266 = arith.addf %44, %265 : vector<4x32xf32>
    %267 = arith.negf %266 : vector<4x32xf32>
    %268 = math.exp %267 : vector<4x32xf32>
    %cst_137 = arith.constant 1.000000e+00 : f32
    %269 = vector.broadcast %cst_137 : f32 to vector<4x32xf32>
    %270 = arith.addf %269, %268 : vector<4x32xf32>
    %271 = arith.divf %269, %270 : vector<4x32xf32>
    %c0_138 = arith.constant 0 : index
    %c0_139 = arith.constant 0 : index
    %272 = vector.load %arg5[%c0_138, %c0_139] : memref<32x32xf32, #tpu.memory_space<vmem>>, vector<32x32xf32>
    %cst_140 = arith.constant dense<0.000000e+00> : vector<4x32xf32>
    %273 = tpu.matmul %263, %272, %cst_140 {dimension_numbers = #tpu.dot_dimension_numbers<[1], [0], [0], [1], [0, 0, 1, 1], [], []>} : vector<4x32xf32>, vector<32x32xf32>, vector<4x32xf32> -> vector<4x32xf32>
    %274 = arith.addf %100, %273 : vector<4x32xf32>
    %275 = arith.negf %274 : vector<4x32xf32>
    %276 = math.exp %275 : vector<4x32xf32>
    %cst_141 = arith.constant 1.000000e+00 : f32
    %277 = vector.broadcast %cst_141 : f32 to vector<4x32xf32>
    %278 = arith.addf %277, %276 : vector<4x32xf32>
    %279 = arith.divf %277, %278 : vector<4x32xf32>
    %280 = arith.mulf %271, %263 : vector<4x32xf32>
    %c0_142 = arith.constant 0 : index
    %c0_143 = arith.constant 0 : index
    %281 = vector.load %arg6[%c0_142, %c0_143] : memref<32x32xf32, #tpu.memory_space<vmem>>, vector<32x32xf32>
    %cst_144 = arith.constant dense<0.000000e+00> : vector<4x32xf32>
    %282 = tpu.matmul %280, %281, %cst_144 {dimension_numbers = #tpu.dot_dimension_numbers<[1], [0], [0], [1], [0, 0, 1, 1], [], []>} : vector<4x32xf32>, vector<32x32xf32>, vector<4x32xf32> -> vector<4x32xf32>
    %283 = arith.addf %156, %282 : vector<4x32xf32>
    %284 = math.tanh %283 : vector<4x32xf32>
    %285 = arith.mulf %279, %263 : vector<4x32xf32>
    %cst_145 = arith.constant 1.000000e+00 : f32
    %286 = vector.broadcast %cst_145 : f32 to vector<4x32xf32>
    %287 = arith.subf %286, %279 : vector<4x32xf32>
    %288 = arith.mulf %287, %284 : vector<4x32xf32>
    %289 = arith.addf %285, %288 : vector<4x32xf32>
    %c0_146 = arith.constant 0 : index
    %c0_147 = arith.constant 0 : index
    %290 = vector.load %arg4[%c0_146, %c0_147] : memref<32x32xf32, #tpu.memory_space<vmem>>, vector<32x32xf32>
    %cst_148 = arith.constant dense<0.000000e+00> : vector<4x32xf32>
    %291 = tpu.matmul %289, %290, %cst_148 {dimension_numbers = #tpu.dot_dimension_numbers<[1], [0], [0], [1], [0, 0, 1, 1], [], []>} : vector<4x32xf32>, vector<32x32xf32>, vector<4x32xf32> -> vector<4x32xf32>
    %292 = arith.addf %51, %291 : vector<4x32xf32>
    %293 = arith.negf %292 : vector<4x32xf32>
    %294 = math.exp %293 : vector<4x32xf32>
    %cst_149 = arith.constant 1.000000e+00 : f32
    %295 = vector.broadcast %cst_149 : f32 to vector<4x32xf32>
    %296 = arith.addf %295, %294 : vector<4x32xf32>
    %297 = arith.divf %295, %296 : vector<4x32xf32>
    %c0_150 = arith.constant 0 : index
    %c0_151 = arith.constant 0 : index
    %298 = vector.load %arg5[%c0_150, %c0_151] : memref<32x32xf32, #tpu.memory_space<vmem>>, vector<32x32xf32>
    %cst_152 = arith.constant dense<0.000000e+00> : vector<4x32xf32>
    %299 = tpu.matmul %289, %298, %cst_152 {dimension_numbers = #tpu.dot_dimension_numbers<[1], [0], [0], [1], [0, 0, 1, 1], [], []>} : vector<4x32xf32>, vector<32x32xf32>, vector<4x32xf32> -> vector<4x32xf32>
    %300 = arith.addf %107, %299 : vector<4x32xf32>
    %301 = arith.negf %300 : vector<4x32xf32>
    %302 = math.exp %301 : vector<4x32xf32>
    %cst_153 = arith.constant 1.000000e+00 : f32
    %303 = vector.broadcast %cst_153 : f32 to vector<4x32xf32>
    %304 = arith.addf %303, %302 : vector<4x32xf32>
    %305 = arith.divf %303, %304 : vector<4x32xf32>
    %306 = arith.mulf %297, %289 : vector<4x32xf32>
    %c0_154 = arith.constant 0 : index
    %c0_155 = arith.constant 0 : index
    %307 = vector.load %arg6[%c0_154, %c0_155] : memref<32x32xf32, #tpu.memory_space<vmem>>, vector<32x32xf32>
    %cst_156 = arith.constant dense<0.000000e+00> : vector<4x32xf32>
    %308 = tpu.matmul %306, %307, %cst_156 {dimension_numbers = #tpu.dot_dimension_numbers<[1], [0], [0], [1], [0, 0, 1, 1], [], []>} : vector<4x32xf32>, vector<32x32xf32>, vector<4x32xf32> -> vector<4x32xf32>
    %309 = arith.addf %163, %308 : vector<4x32xf32>
    %310 = math.tanh %309 : vector<4x32xf32>
    %311 = arith.mulf %305, %289 : vector<4x32xf32>
    %cst_157 = arith.constant 1.000000e+00 : f32
    %312 = vector.broadcast %cst_157 : f32 to vector<4x32xf32>
    %313 = arith.subf %312, %305 : vector<4x32xf32>
    %314 = arith.mulf %313, %310 : vector<4x32xf32>
    %315 = arith.addf %311, %314 : vector<4x32xf32>
    %c0_158 = arith.constant 0 : index
    %c0_159 = arith.constant 0 : index
    %316 = vector.load %arg4[%c0_158, %c0_159] : memref<32x32xf32, #tpu.memory_space<vmem>>, vector<32x32xf32>
    %cst_160 = arith.constant dense<0.000000e+00> : vector<4x32xf32>
    %317 = tpu.matmul %315, %316, %cst_160 {dimension_numbers = #tpu.dot_dimension_numbers<[1], [0], [0], [1], [0, 0, 1, 1], [], []>} : vector<4x32xf32>, vector<32x32xf32>, vector<4x32xf32> -> vector<4x32xf32>
    %318 = arith.addf %58, %317 : vector<4x32xf32>
    %319 = arith.negf %318 : vector<4x32xf32>
    %320 = math.exp %319 : vector<4x32xf32>
    %cst_161 = arith.constant 1.000000e+00 : f32
    %321 = vector.broadcast %cst_161 : f32 to vector<4x32xf32>
    %322 = arith.addf %321, %320 : vector<4x32xf32>
    %323 = arith.divf %321, %322 : vector<4x32xf32>
    %c0_162 = arith.constant 0 : index
    %c0_163 = arith.constant 0 : index
    %324 = vector.load %arg5[%c0_162, %c0_163] : memref<32x32xf32, #tpu.memory_space<vmem>>, vector<32x32xf32>
    %cst_164 = arith.constant dense<0.000000e+00> : vector<4x32xf32>
    %325 = tpu.matmul %315, %324, %cst_164 {dimension_numbers = #tpu.dot_dimension_numbers<[1], [0], [0], [1], [0, 0, 1, 1], [], []>} : vector<4x32xf32>, vector<32x32xf32>, vector<4x32xf32> -> vector<4x32xf32>
    %326 = arith.addf %114, %325 : vector<4x32xf32>
    %327 = arith.negf %326 : vector<4x32xf32>
    %328 = math.exp %327 : vector<4x32xf32>
    %cst_165 = arith.constant 1.000000e+00 : f32
    %329 = vector.broadcast %cst_165 : f32 to vector<4x32xf32>
    %330 = arith.addf %329, %328 : vector<4x32xf32>
    %331 = arith.divf %329, %330 : vector<4x32xf32>
    %332 = arith.mulf %323, %315 : vector<4x32xf32>
    %c0_166 = arith.constant 0 : index
    %c0_167 = arith.constant 0 : index
    %333 = vector.load %arg6[%c0_166, %c0_167] : memref<32x32xf32, #tpu.memory_space<vmem>>, vector<32x32xf32>
    %cst_168 = arith.constant dense<0.000000e+00> : vector<4x32xf32>
    %334 = tpu.matmul %332, %333, %cst_168 {dimension_numbers = #tpu.dot_dimension_numbers<[1], [0], [0], [1], [0, 0, 1, 1], [], []>} : vector<4x32xf32>, vector<32x32xf32>, vector<4x32xf32> -> vector<4x32xf32>
    %335 = arith.addf %170, %334 : vector<4x32xf32>
    %336 = math.tanh %335 : vector<4x32xf32>
    %337 = arith.mulf %331, %315 : vector<4x32xf32>
    %cst_169 = arith.constant 1.000000e+00 : f32
    %338 = vector.broadcast %cst_169 : f32 to vector<4x32xf32>
    %339 = arith.subf %338, %331 : vector<4x32xf32>
    %340 = arith.mulf %339, %336 : vector<4x32xf32>
    %341 = arith.addf %337, %340 : vector<4x32xf32>
    %c0_170 = arith.constant 0 : index
    %c0_171 = arith.constant 0 : index
    %342 = vector.load %arg4[%c0_170, %c0_171] : memref<32x32xf32, #tpu.memory_space<vmem>>, vector<32x32xf32>
    %cst_172 = arith.constant dense<0.000000e+00> : vector<4x32xf32>
    %343 = tpu.matmul %341, %342, %cst_172 {dimension_numbers = #tpu.dot_dimension_numbers<[1], [0], [0], [1], [0, 0, 1, 1], [], []>} : vector<4x32xf32>, vector<32x32xf32>, vector<4x32xf32> -> vector<4x32xf32>
    %344 = arith.addf %65, %343 : vector<4x32xf32>
    %345 = arith.negf %344 : vector<4x32xf32>
    %346 = math.exp %345 : vector<4x32xf32>
    %cst_173 = arith.constant 1.000000e+00 : f32
    %347 = vector.broadcast %cst_173 : f32 to vector<4x32xf32>
    %348 = arith.addf %347, %346 : vector<4x32xf32>
    %349 = arith.divf %347, %348 : vector<4x32xf32>
    %c0_174 = arith.constant 0 : index
    %c0_175 = arith.constant 0 : index
    %350 = vector.load %arg5[%c0_174, %c0_175] : memref<32x32xf32, #tpu.memory_space<vmem>>, vector<32x32xf32>
    %cst_176 = arith.constant dense<0.000000e+00> : vector<4x32xf32>
    %351 = tpu.matmul %341, %350, %cst_176 {dimension_numbers = #tpu.dot_dimension_numbers<[1], [0], [0], [1], [0, 0, 1, 1], [], []>} : vector<4x32xf32>, vector<32x32xf32>, vector<4x32xf32> -> vector<4x32xf32>
    %352 = arith.addf %121, %351 : vector<4x32xf32>
    %353 = arith.negf %352 : vector<4x32xf32>
    %354 = math.exp %353 : vector<4x32xf32>
    %cst_177 = arith.constant 1.000000e+00 : f32
    %355 = vector.broadcast %cst_177 : f32 to vector<4x32xf32>
    %356 = arith.addf %355, %354 : vector<4x32xf32>
    %357 = arith.divf %355, %356 : vector<4x32xf32>
    %358 = arith.mulf %349, %341 : vector<4x32xf32>
    %c0_178 = arith.constant 0 : index
    %c0_179 = arith.constant 0 : index
    %359 = vector.load %arg6[%c0_178, %c0_179] : memref<32x32xf32, #tpu.memory_space<vmem>>, vector<32x32xf32>
    %cst_180 = arith.constant dense<0.000000e+00> : vector<4x32xf32>
    %360 = tpu.matmul %358, %359, %cst_180 {dimension_numbers = #tpu.dot_dimension_numbers<[1], [0], [0], [1], [0, 0, 1, 1], [], []>} : vector<4x32xf32>, vector<32x32xf32>, vector<4x32xf32> -> vector<4x32xf32>
    %361 = arith.addf %177, %360 : vector<4x32xf32>
    %362 = math.tanh %361 : vector<4x32xf32>
    %363 = arith.mulf %357, %341 : vector<4x32xf32>
    %cst_181 = arith.constant 1.000000e+00 : f32
    %364 = vector.broadcast %cst_181 : f32 to vector<4x32xf32>
    %365 = arith.subf %364, %357 : vector<4x32xf32>
    %366 = arith.mulf %365, %362 : vector<4x32xf32>
    %367 = arith.addf %363, %366 : vector<4x32xf32>
    %c0_182 = arith.constant 0 : index
    %c0_183 = arith.constant 0 : index
    %368 = vector.load %arg4[%c0_182, %c0_183] : memref<32x32xf32, #tpu.memory_space<vmem>>, vector<32x32xf32>
    %cst_184 = arith.constant dense<0.000000e+00> : vector<4x32xf32>
    %369 = tpu.matmul %367, %368, %cst_184 {dimension_numbers = #tpu.dot_dimension_numbers<[1], [0], [0], [1], [0, 0, 1, 1], [], []>} : vector<4x32xf32>, vector<32x32xf32>, vector<4x32xf32> -> vector<4x32xf32>
    %370 = arith.addf %72, %369 : vector<4x32xf32>
    %371 = arith.negf %370 : vector<4x32xf32>
    %372 = math.exp %371 : vector<4x32xf32>
    %cst_185 = arith.constant 1.000000e+00 : f32
    %373 = vector.broadcast %cst_185 : f32 to vector<4x32xf32>
    %374 = arith.addf %373, %372 : vector<4x32xf32>
    %375 = arith.divf %373, %374 : vector<4x32xf32>
    %c0_186 = arith.constant 0 : index
    %c0_187 = arith.constant 0 : index
    %376 = vector.load %arg5[%c0_186, %c0_187] : memref<32x32xf32, #tpu.memory_space<vmem>>, vector<32x32xf32>
    %cst_188 = arith.constant dense<0.000000e+00> : vector<4x32xf32>
    %377 = tpu.matmul %367, %376, %cst_188 {dimension_numbers = #tpu.dot_dimension_numbers<[1], [0], [0], [1], [0, 0, 1, 1], [], []>} : vector<4x32xf32>, vector<32x32xf32>, vector<4x32xf32> -> vector<4x32xf32>
    %378 = arith.addf %128, %377 : vector<4x32xf32>
    %379 = arith.negf %378 : vector<4x32xf32>
    %380 = math.exp %379 : vector<4x32xf32>
    %cst_189 = arith.constant 1.000000e+00 : f32
    %381 = vector.broadcast %cst_189 : f32 to vector<4x32xf32>
    %382 = arith.addf %381, %380 : vector<4x32xf32>
    %383 = arith.divf %381, %382 : vector<4x32xf32>
    %384 = arith.mulf %375, %367 : vector<4x32xf32>
    %c0_190 = arith.constant 0 : index
    %c0_191 = arith.constant 0 : index
    %385 = vector.load %arg6[%c0_190, %c0_191] : memref<32x32xf32, #tpu.memory_space<vmem>>, vector<32x32xf32>
    %cst_192 = arith.constant dense<0.000000e+00> : vector<4x32xf32>
    %386 = tpu.matmul %384, %385, %cst_192 {dimension_numbers = #tpu.dot_dimension_numbers<[1], [0], [0], [1], [0, 0, 1, 1], [], []>} : vector<4x32xf32>, vector<32x32xf32>, vector<4x32xf32> -> vector<4x32xf32>
    %387 = arith.addf %184, %386 : vector<4x32xf32>
    %388 = math.tanh %387 : vector<4x32xf32>
    %389 = arith.mulf %383, %367 : vector<4x32xf32>
    %cst_193 = arith.constant 1.000000e+00 : f32
    %390 = vector.broadcast %cst_193 : f32 to vector<4x32xf32>
    %391 = arith.subf %390, %383 : vector<4x32xf32>
    %392 = arith.mulf %391, %388 : vector<4x32xf32>
    %393 = arith.addf %389, %392 : vector<4x32xf32>
    %cst_194 = arith.constant 0.000000e+00 : f32
    %394 = vector.broadcast %cst_194 : f32 to vector<4x32xf32>
    %c0_195 = arith.constant 0 : index
    %c0_196 = arith.constant 0 : index
    %395 = vector.load %arg10[%c0_195, %c0_196] : memref<32x32xf32, #tpu.memory_space<vmem>>, vector<32x32xf32>
    %cst_197 = arith.constant dense<0.000000e+00> : vector<4x32xf32>
    %396 = tpu.matmul %211, %395, %cst_197 {dimension_numbers = #tpu.dot_dimension_numbers<[1], [0], [0], [1], [0, 0, 1, 1], [], []>} : vector<4x32xf32>, vector<32x32xf32>, vector<4x32xf32> -> vector<4x32xf32>
    %c0_198 = arith.constant 0 : index
    %c0_199 = arith.constant 0 : index
    %397 = vector.load %arg13[%c0_198, %c0_199] : memref<32x32xf32, #tpu.memory_space<vmem>>, vector<32x32xf32>
    %cst_200 = arith.constant dense<0.000000e+00> : vector<4x32xf32>
    %398 = tpu.matmul %394, %397, %cst_200 {dimension_numbers = #tpu.dot_dimension_numbers<[1], [0], [0], [1], [0, 0, 1, 1], [], []>} : vector<4x32xf32>, vector<32x32xf32>, vector<4x32xf32> -> vector<4x32xf32>
    %399 = arith.addf %396, %398 : vector<4x32xf32>
    %c0_201 = arith.constant 0 : index
    %c0_202 = arith.constant 0 : index
    %400 = vector.load %arg16[%c0_201, %c0_202] : memref<1x32xf32, #tpu.memory_space<vmem>>, vector<1x32xf32>
    %401 = vector.broadcast %400 : vector<1x32xf32> to vector<4x32xf32>
    %402 = arith.addf %399, %401 : vector<4x32xf32>
    %403 = arith.negf %402 : vector<4x32xf32>
    %404 = math.exp %403 : vector<4x32xf32>
    %cst_203 = arith.constant 1.000000e+00 : f32
    %405 = vector.broadcast %cst_203 : f32 to vector<4x32xf32>
    %406 = arith.addf %405, %404 : vector<4x32xf32>
    %407 = arith.divf %405, %406 : vector<4x32xf32>
    %c0_204 = arith.constant 0 : index
    %c0_205 = arith.constant 0 : index
    %408 = vector.load %arg11[%c0_204, %c0_205] : memref<32x32xf32, #tpu.memory_space<vmem>>, vector<32x32xf32>
    %cst_206 = arith.constant dense<0.000000e+00> : vector<4x32xf32>
    %409 = tpu.matmul %211, %408, %cst_206 {dimension_numbers = #tpu.dot_dimension_numbers<[1], [0], [0], [1], [0, 0, 1, 1], [], []>} : vector<4x32xf32>, vector<32x32xf32>, vector<4x32xf32> -> vector<4x32xf32>
    %c0_207 = arith.constant 0 : index
    %c0_208 = arith.constant 0 : index
    %410 = vector.load %arg14[%c0_207, %c0_208] : memref<32x32xf32, #tpu.memory_space<vmem>>, vector<32x32xf32>
    %cst_209 = arith.constant dense<0.000000e+00> : vector<4x32xf32>
    %411 = tpu.matmul %394, %410, %cst_209 {dimension_numbers = #tpu.dot_dimension_numbers<[1], [0], [0], [1], [0, 0, 1, 1], [], []>} : vector<4x32xf32>, vector<32x32xf32>, vector<4x32xf32> -> vector<4x32xf32>
    %412 = arith.addf %409, %411 : vector<4x32xf32>
    %c0_210 = arith.constant 0 : index
    %c0_211 = arith.constant 0 : index
    %413 = vector.load %arg17[%c0_210, %c0_211] : memref<1x32xf32, #tpu.memory_space<vmem>>, vector<1x32xf32>
    %414 = vector.broadcast %413 : vector<1x32xf32> to vector<4x32xf32>
    %415 = arith.addf %412, %414 : vector<4x32xf32>
    %416 = arith.negf %415 : vector<4x32xf32>
    %417 = math.exp %416 : vector<4x32xf32>
    %cst_212 = arith.constant 1.000000e+00 : f32
    %418 = vector.broadcast %cst_212 : f32 to vector<4x32xf32>
    %419 = arith.addf %418, %417 : vector<4x32xf32>
    %420 = arith.divf %418, %419 : vector<4x32xf32>
    %c0_213 = arith.constant 0 : index
    %c0_214 = arith.constant 0 : index
    %421 = vector.load %arg12[%c0_213, %c0_214] : memref<32x32xf32, #tpu.memory_space<vmem>>, vector<32x32xf32>
    %cst_215 = arith.constant dense<0.000000e+00> : vector<4x32xf32>
    %422 = tpu.matmul %211, %421, %cst_215 {dimension_numbers = #tpu.dot_dimension_numbers<[1], [0], [0], [1], [0, 0, 1, 1], [], []>} : vector<4x32xf32>, vector<32x32xf32>, vector<4x32xf32> -> vector<4x32xf32>
    %423 = arith.mulf %407, %394 : vector<4x32xf32>
    %c0_216 = arith.constant 0 : index
    %c0_217 = arith.constant 0 : index
    %424 = vector.load %arg15[%c0_216, %c0_217] : memref<32x32xf32, #tpu.memory_space<vmem>>, vector<32x32xf32>
    %cst_218 = arith.constant dense<0.000000e+00> : vector<4x32xf32>
    %425 = tpu.matmul %423, %424, %cst_218 {dimension_numbers = #tpu.dot_dimension_numbers<[1], [0], [0], [1], [0, 0, 1, 1], [], []>} : vector<4x32xf32>, vector<32x32xf32>, vector<4x32xf32> -> vector<4x32xf32>
    %426 = arith.addf %422, %425 : vector<4x32xf32>
    %c0_219 = arith.constant 0 : index
    %c0_220 = arith.constant 0 : index
    %427 = vector.load %arg18[%c0_219, %c0_220] : memref<1x32xf32, #tpu.memory_space<vmem>>, vector<1x32xf32>
    %428 = vector.broadcast %427 : vector<1x32xf32> to vector<4x32xf32>
    %429 = arith.addf %426, %428 : vector<4x32xf32>
    %430 = math.tanh %429 : vector<4x32xf32>
    %431 = arith.mulf %420, %394 : vector<4x32xf32>
    %cst_221 = arith.constant 1.000000e+00 : f32
    %432 = vector.broadcast %cst_221 : f32 to vector<4x32xf32>
    %433 = arith.subf %432, %420 : vector<4x32xf32>
    %434 = arith.mulf %433, %430 : vector<4x32xf32>
    %435 = arith.addf %431, %434 : vector<4x32xf32>
    %c0_222 = arith.constant 0 : index
    %c0_223 = arith.constant 0 : index
    %436 = vector.load %arg10[%c0_222, %c0_223] : memref<32x32xf32, #tpu.memory_space<vmem>>, vector<32x32xf32>
    %cst_224 = arith.constant dense<0.000000e+00> : vector<4x32xf32>
    %437 = tpu.matmul %237, %436, %cst_224 {dimension_numbers = #tpu.dot_dimension_numbers<[1], [0], [0], [1], [0, 0, 1, 1], [], []>} : vector<4x32xf32>, vector<32x32xf32>, vector<4x32xf32> -> vector<4x32xf32>
    %c0_225 = arith.constant 0 : index
    %c0_226 = arith.constant 0 : index
    %438 = vector.load %arg13[%c0_225, %c0_226] : memref<32x32xf32, #tpu.memory_space<vmem>>, vector<32x32xf32>
    %cst_227 = arith.constant dense<0.000000e+00> : vector<4x32xf32>
    %439 = tpu.matmul %435, %438, %cst_227 {dimension_numbers = #tpu.dot_dimension_numbers<[1], [0], [0], [1], [0, 0, 1, 1], [], []>} : vector<4x32xf32>, vector<32x32xf32>, vector<4x32xf32> -> vector<4x32xf32>
    %440 = arith.addf %437, %439 : vector<4x32xf32>
    %c0_228 = arith.constant 0 : index
    %c0_229 = arith.constant 0 : index
    %441 = vector.load %arg16[%c0_228, %c0_229] : memref<1x32xf32, #tpu.memory_space<vmem>>, vector<1x32xf32>
    %442 = vector.broadcast %441 : vector<1x32xf32> to vector<4x32xf32>
    %443 = arith.addf %440, %442 : vector<4x32xf32>
    %444 = arith.negf %443 : vector<4x32xf32>
    %445 = math.exp %444 : vector<4x32xf32>
    %cst_230 = arith.constant 1.000000e+00 : f32
    %446 = vector.broadcast %cst_230 : f32 to vector<4x32xf32>
    %447 = arith.addf %446, %445 : vector<4x32xf32>
    %448 = arith.divf %446, %447 : vector<4x32xf32>
    %c0_231 = arith.constant 0 : index
    %c0_232 = arith.constant 0 : index
    %449 = vector.load %arg11[%c0_231, %c0_232] : memref<32x32xf32, #tpu.memory_space<vmem>>, vector<32x32xf32>
    %cst_233 = arith.constant dense<0.000000e+00> : vector<4x32xf32>
    %450 = tpu.matmul %237, %449, %cst_233 {dimension_numbers = #tpu.dot_dimension_numbers<[1], [0], [0], [1], [0, 0, 1, 1], [], []>} : vector<4x32xf32>, vector<32x32xf32>, vector<4x32xf32> -> vector<4x32xf32>
    %c0_234 = arith.constant 0 : index
    %c0_235 = arith.constant 0 : index
    %451 = vector.load %arg14[%c0_234, %c0_235] : memref<32x32xf32, #tpu.memory_space<vmem>>, vector<32x32xf32>
    %cst_236 = arith.constant dense<0.000000e+00> : vector<4x32xf32>
    %452 = tpu.matmul %435, %451, %cst_236 {dimension_numbers = #tpu.dot_dimension_numbers<[1], [0], [0], [1], [0, 0, 1, 1], [], []>} : vector<4x32xf32>, vector<32x32xf32>, vector<4x32xf32> -> vector<4x32xf32>
    %453 = arith.addf %450, %452 : vector<4x32xf32>
    %c0_237 = arith.constant 0 : index
    %c0_238 = arith.constant 0 : index
    %454 = vector.load %arg17[%c0_237, %c0_238] : memref<1x32xf32, #tpu.memory_space<vmem>>, vector<1x32xf32>
    %455 = vector.broadcast %454 : vector<1x32xf32> to vector<4x32xf32>
    %456 = arith.addf %453, %455 : vector<4x32xf32>
    %457 = arith.negf %456 : vector<4x32xf32>
    %458 = math.exp %457 : vector<4x32xf32>
    %cst_239 = arith.constant 1.000000e+00 : f32
    %459 = vector.broadcast %cst_239 : f32 to vector<4x32xf32>
    %460 = arith.addf %459, %458 : vector<4x32xf32>
    %461 = arith.divf %459, %460 : vector<4x32xf32>
    %c0_240 = arith.constant 0 : index
    %c0_241 = arith.constant 0 : index
    %462 = vector.load %arg12[%c0_240, %c0_241] : memref<32x32xf32, #tpu.memory_space<vmem>>, vector<32x32xf32>
    %cst_242 = arith.constant dense<0.000000e+00> : vector<4x32xf32>
    %463 = tpu.matmul %237, %462, %cst_242 {dimension_numbers = #tpu.dot_dimension_numbers<[1], [0], [0], [1], [0, 0, 1, 1], [], []>} : vector<4x32xf32>, vector<32x32xf32>, vector<4x32xf32> -> vector<4x32xf32>
    %464 = arith.mulf %448, %435 : vector<4x32xf32>
    %c0_243 = arith.constant 0 : index
    %c0_244 = arith.constant 0 : index
    %465 = vector.load %arg15[%c0_243, %c0_244] : memref<32x32xf32, #tpu.memory_space<vmem>>, vector<32x32xf32>
    %cst_245 = arith.constant dense<0.000000e+00> : vector<4x32xf32>
    %466 = tpu.matmul %464, %465, %cst_245 {dimension_numbers = #tpu.dot_dimension_numbers<[1], [0], [0], [1], [0, 0, 1, 1], [], []>} : vector<4x32xf32>, vector<32x32xf32>, vector<4x32xf32> -> vector<4x32xf32>
    %467 = arith.addf %463, %466 : vector<4x32xf32>
    %c0_246 = arith.constant 0 : index
    %c0_247 = arith.constant 0 : index
    %468 = vector.load %arg18[%c0_246, %c0_247] : memref<1x32xf32, #tpu.memory_space<vmem>>, vector<1x32xf32>
    %469 = vector.broadcast %468 : vector<1x32xf32> to vector<4x32xf32>
    %470 = arith.addf %467, %469 : vector<4x32xf32>
    %471 = math.tanh %470 : vector<4x32xf32>
    %472 = arith.mulf %461, %435 : vector<4x32xf32>
    %cst_248 = arith.constant 1.000000e+00 : f32
    %473 = vector.broadcast %cst_248 : f32 to vector<4x32xf32>
    %474 = arith.subf %473, %461 : vector<4x32xf32>
    %475 = arith.mulf %474, %471 : vector<4x32xf32>
    %476 = arith.addf %472, %475 : vector<4x32xf32>
    %c0_249 = arith.constant 0 : index
    %c0_250 = arith.constant 0 : index
    %477 = vector.load %arg10[%c0_249, %c0_250] : memref<32x32xf32, #tpu.memory_space<vmem>>, vector<32x32xf32>
    %cst_251 = arith.constant dense<0.000000e+00> : vector<4x32xf32>
    %478 = tpu.matmul %263, %477, %cst_251 {dimension_numbers = #tpu.dot_dimension_numbers<[1], [0], [0], [1], [0, 0, 1, 1], [], []>} : vector<4x32xf32>, vector<32x32xf32>, vector<4x32xf32> -> vector<4x32xf32>
    %c0_252 = arith.constant 0 : index
    %c0_253 = arith.constant 0 : index
    %479 = vector.load %arg13[%c0_252, %c0_253] : memref<32x32xf32, #tpu.memory_space<vmem>>, vector<32x32xf32>
    %cst_254 = arith.constant dense<0.000000e+00> : vector<4x32xf32>
    %480 = tpu.matmul %476, %479, %cst_254 {dimension_numbers = #tpu.dot_dimension_numbers<[1], [0], [0], [1], [0, 0, 1, 1], [], []>} : vector<4x32xf32>, vector<32x32xf32>, vector<4x32xf32> -> vector<4x32xf32>
    %481 = arith.addf %478, %480 : vector<4x32xf32>
    %c0_255 = arith.constant 0 : index
    %c0_256 = arith.constant 0 : index
    %482 = vector.load %arg16[%c0_255, %c0_256] : memref<1x32xf32, #tpu.memory_space<vmem>>, vector<1x32xf32>
    %483 = vector.broadcast %482 : vector<1x32xf32> to vector<4x32xf32>
    %484 = arith.addf %481, %483 : vector<4x32xf32>
    %485 = arith.negf %484 : vector<4x32xf32>
    %486 = math.exp %485 : vector<4x32xf32>
    %cst_257 = arith.constant 1.000000e+00 : f32
    %487 = vector.broadcast %cst_257 : f32 to vector<4x32xf32>
    %488 = arith.addf %487, %486 : vector<4x32xf32>
    %489 = arith.divf %487, %488 : vector<4x32xf32>
    %c0_258 = arith.constant 0 : index
    %c0_259 = arith.constant 0 : index
    %490 = vector.load %arg11[%c0_258, %c0_259] : memref<32x32xf32, #tpu.memory_space<vmem>>, vector<32x32xf32>
    %cst_260 = arith.constant dense<0.000000e+00> : vector<4x32xf32>
    %491 = tpu.matmul %263, %490, %cst_260 {dimension_numbers = #tpu.dot_dimension_numbers<[1], [0], [0], [1], [0, 0, 1, 1], [], []>} : vector<4x32xf32>, vector<32x32xf32>, vector<4x32xf32> -> vector<4x32xf32>
    %c0_261 = arith.constant 0 : index
    %c0_262 = arith.constant 0 : index
    %492 = vector.load %arg14[%c0_261, %c0_262] : memref<32x32xf32, #tpu.memory_space<vmem>>, vector<32x32xf32>
    %cst_263 = arith.constant dense<0.000000e+00> : vector<4x32xf32>
    %493 = tpu.matmul %476, %492, %cst_263 {dimension_numbers = #tpu.dot_dimension_numbers<[1], [0], [0], [1], [0, 0, 1, 1], [], []>} : vector<4x32xf32>, vector<32x32xf32>, vector<4x32xf32> -> vector<4x32xf32>
    %494 = arith.addf %491, %493 : vector<4x32xf32>
    %c0_264 = arith.constant 0 : index
    %c0_265 = arith.constant 0 : index
    %495 = vector.load %arg17[%c0_264, %c0_265] : memref<1x32xf32, #tpu.memory_space<vmem>>, vector<1x32xf32>
    %496 = vector.broadcast %495 : vector<1x32xf32> to vector<4x32xf32>
    %497 = arith.addf %494, %496 : vector<4x32xf32>
    %498 = arith.negf %497 : vector<4x32xf32>
    %499 = math.exp %498 : vector<4x32xf32>
    %cst_266 = arith.constant 1.000000e+00 : f32
    %500 = vector.broadcast %cst_266 : f32 to vector<4x32xf32>
    %501 = arith.addf %500, %499 : vector<4x32xf32>
    %502 = arith.divf %500, %501 : vector<4x32xf32>
    %c0_267 = arith.constant 0 : index
    %c0_268 = arith.constant 0 : index
    %503 = vector.load %arg12[%c0_267, %c0_268] : memref<32x32xf32, #tpu.memory_space<vmem>>, vector<32x32xf32>
    %cst_269 = arith.constant dense<0.000000e+00> : vector<4x32xf32>
    %504 = tpu.matmul %263, %503, %cst_269 {dimension_numbers = #tpu.dot_dimension_numbers<[1], [0], [0], [1], [0, 0, 1, 1], [], []>} : vector<4x32xf32>, vector<32x32xf32>, vector<4x32xf32> -> vector<4x32xf32>
    %505 = arith.mulf %489, %476 : vector<4x32xf32>
    %c0_270 = arith.constant 0 : index
    %c0_271 = arith.constant 0 : index
    %506 = vector.load %arg15[%c0_270, %c0_271] : memref<32x32xf32, #tpu.memory_space<vmem>>, vector<32x32xf32>
    %cst_272 = arith.constant dense<0.000000e+00> : vector<4x32xf32>
    %507 = tpu.matmul %505, %506, %cst_272 {dimension_numbers = #tpu.dot_dimension_numbers<[1], [0], [0], [1], [0, 0, 1, 1], [], []>} : vector<4x32xf32>, vector<32x32xf32>, vector<4x32xf32> -> vector<4x32xf32>
    %508 = arith.addf %504, %507 : vector<4x32xf32>
    %c0_273 = arith.constant 0 : index
    %c0_274 = arith.constant 0 : index
    %509 = vector.load %arg18[%c0_273, %c0_274] : memref<1x32xf32, #tpu.memory_space<vmem>>, vector<1x32xf32>
    %510 = vector.broadcast %509 : vector<1x32xf32> to vector<4x32xf32>
    %511 = arith.addf %508, %510 : vector<4x32xf32>
    %512 = math.tanh %511 : vector<4x32xf32>
    %513 = arith.mulf %502, %476 : vector<4x32xf32>
    %cst_275 = arith.constant 1.000000e+00 : f32
    %514 = vector.broadcast %cst_275 : f32 to vector<4x32xf32>
    %515 = arith.subf %514, %502 : vector<4x32xf32>
    %516 = arith.mulf %515, %512 : vector<4x32xf32>
    %517 = arith.addf %513, %516 : vector<4x32xf32>
    %c0_276 = arith.constant 0 : index
    %c0_277 = arith.constant 0 : index
    %518 = vector.load %arg10[%c0_276, %c0_277] : memref<32x32xf32, #tpu.memory_space<vmem>>, vector<32x32xf32>
    %cst_278 = arith.constant dense<0.000000e+00> : vector<4x32xf32>
    %519 = tpu.matmul %289, %518, %cst_278 {dimension_numbers = #tpu.dot_dimension_numbers<[1], [0], [0], [1], [0, 0, 1, 1], [], []>} : vector<4x32xf32>, vector<32x32xf32>, vector<4x32xf32> -> vector<4x32xf32>
    %c0_279 = arith.constant 0 : index
    %c0_280 = arith.constant 0 : index
    %520 = vector.load %arg13[%c0_279, %c0_280] : memref<32x32xf32, #tpu.memory_space<vmem>>, vector<32x32xf32>
    %cst_281 = arith.constant dense<0.000000e+00> : vector<4x32xf32>
    %521 = tpu.matmul %517, %520, %cst_281 {dimension_numbers = #tpu.dot_dimension_numbers<[1], [0], [0], [1], [0, 0, 1, 1], [], []>} : vector<4x32xf32>, vector<32x32xf32>, vector<4x32xf32> -> vector<4x32xf32>
    %522 = arith.addf %519, %521 : vector<4x32xf32>
    %c0_282 = arith.constant 0 : index
    %c0_283 = arith.constant 0 : index
    %523 = vector.load %arg16[%c0_282, %c0_283] : memref<1x32xf32, #tpu.memory_space<vmem>>, vector<1x32xf32>
    %524 = vector.broadcast %523 : vector<1x32xf32> to vector<4x32xf32>
    %525 = arith.addf %522, %524 : vector<4x32xf32>
    %526 = arith.negf %525 : vector<4x32xf32>
    %527 = math.exp %526 : vector<4x32xf32>
    %cst_284 = arith.constant 1.000000e+00 : f32
    %528 = vector.broadcast %cst_284 : f32 to vector<4x32xf32>
    %529 = arith.addf %528, %527 : vector<4x32xf32>
    %530 = arith.divf %528, %529 : vector<4x32xf32>
    %c0_285 = arith.constant 0 : index
    %c0_286 = arith.constant 0 : index
    %531 = vector.load %arg11[%c0_285, %c0_286] : memref<32x32xf32, #tpu.memory_space<vmem>>, vector<32x32xf32>
    %cst_287 = arith.constant dense<0.000000e+00> : vector<4x32xf32>
    %532 = tpu.matmul %289, %531, %cst_287 {dimension_numbers = #tpu.dot_dimension_numbers<[1], [0], [0], [1], [0, 0, 1, 1], [], []>} : vector<4x32xf32>, vector<32x32xf32>, vector<4x32xf32> -> vector<4x32xf32>
    %c0_288 = arith.constant 0 : index
    %c0_289 = arith.constant 0 : index
    %533 = vector.load %arg14[%c0_288, %c0_289] : memref<32x32xf32, #tpu.memory_space<vmem>>, vector<32x32xf32>
    %cst_290 = arith.constant dense<0.000000e+00> : vector<4x32xf32>
    %534 = tpu.matmul %517, %533, %cst_290 {dimension_numbers = #tpu.dot_dimension_numbers<[1], [0], [0], [1], [0, 0, 1, 1], [], []>} : vector<4x32xf32>, vector<32x32xf32>, vector<4x32xf32> -> vector<4x32xf32>
    %535 = arith.addf %532, %534 : vector<4x32xf32>
    %c0_291 = arith.constant 0 : index
    %c0_292 = arith.constant 0 : index
    %536 = vector.load %arg17[%c0_291, %c0_292] : memref<1x32xf32, #tpu.memory_space<vmem>>, vector<1x32xf32>
    %537 = vector.broadcast %536 : vector<1x32xf32> to vector<4x32xf32>
    %538 = arith.addf %535, %537 : vector<4x32xf32>
    %539 = arith.negf %538 : vector<4x32xf32>
    %540 = math.exp %539 : vector<4x32xf32>
    %cst_293 = arith.constant 1.000000e+00 : f32
    %541 = vector.broadcast %cst_293 : f32 to vector<4x32xf32>
    %542 = arith.addf %541, %540 : vector<4x32xf32>
    %543 = arith.divf %541, %542 : vector<4x32xf32>
    %c0_294 = arith.constant 0 : index
    %c0_295 = arith.constant 0 : index
    %544 = vector.load %arg12[%c0_294, %c0_295] : memref<32x32xf32, #tpu.memory_space<vmem>>, vector<32x32xf32>
    %cst_296 = arith.constant dense<0.000000e+00> : vector<4x32xf32>
    %545 = tpu.matmul %289, %544, %cst_296 {dimension_numbers = #tpu.dot_dimension_numbers<[1], [0], [0], [1], [0, 0, 1, 1], [], []>} : vector<4x32xf32>, vector<32x32xf32>, vector<4x32xf32> -> vector<4x32xf32>
    %546 = arith.mulf %530, %517 : vector<4x32xf32>
    %c0_297 = arith.constant 0 : index
    %c0_298 = arith.constant 0 : index
    %547 = vector.load %arg15[%c0_297, %c0_298] : memref<32x32xf32, #tpu.memory_space<vmem>>, vector<32x32xf32>
    %cst_299 = arith.constant dense<0.000000e+00> : vector<4x32xf32>
    %548 = tpu.matmul %546, %547, %cst_299 {dimension_numbers = #tpu.dot_dimension_numbers<[1], [0], [0], [1], [0, 0, 1, 1], [], []>} : vector<4x32xf32>, vector<32x32xf32>, vector<4x32xf32> -> vector<4x32xf32>
    %549 = arith.addf %545, %548 : vector<4x32xf32>
    %c0_300 = arith.constant 0 : index
    %c0_301 = arith.constant 0 : index
    %550 = vector.load %arg18[%c0_300, %c0_301] : memref<1x32xf32, #tpu.memory_space<vmem>>, vector<1x32xf32>
    %551 = vector.broadcast %550 : vector<1x32xf32> to vector<4x32xf32>
    %552 = arith.addf %549, %551 : vector<4x32xf32>
    %553 = math.tanh %552 : vector<4x32xf32>
    %554 = arith.mulf %543, %517 : vector<4x32xf32>
    %cst_302 = arith.constant 1.000000e+00 : f32
    %555 = vector.broadcast %cst_302 : f32 to vector<4x32xf32>
    %556 = arith.subf %555, %543 : vector<4x32xf32>
    %557 = arith.mulf %556, %553 : vector<4x32xf32>
    %558 = arith.addf %554, %557 : vector<4x32xf32>
    %c0_303 = arith.constant 0 : index
    %c0_304 = arith.constant 0 : index
    %559 = vector.load %arg10[%c0_303, %c0_304] : memref<32x32xf32, #tpu.memory_space<vmem>>, vector<32x32xf32>
    %cst_305 = arith.constant dense<0.000000e+00> : vector<4x32xf32>
    %560 = tpu.matmul %315, %559, %cst_305 {dimension_numbers = #tpu.dot_dimension_numbers<[1], [0], [0], [1], [0, 0, 1, 1], [], []>} : vector<4x32xf32>, vector<32x32xf32>, vector<4x32xf32> -> vector<4x32xf32>
    %c0_306 = arith.constant 0 : index
    %c0_307 = arith.constant 0 : index
    %561 = vector.load %arg13[%c0_306, %c0_307] : memref<32x32xf32, #tpu.memory_space<vmem>>, vector<32x32xf32>
    %cst_308 = arith.constant dense<0.000000e+00> : vector<4x32xf32>
    %562 = tpu.matmul %558, %561, %cst_308 {dimension_numbers = #tpu.dot_dimension_numbers<[1], [0], [0], [1], [0, 0, 1, 1], [], []>} : vector<4x32xf32>, vector<32x32xf32>, vector<4x32xf32> -> vector<4x32xf32>
    %563 = arith.addf %560, %562 : vector<4x32xf32>
    %c0_309 = arith.constant 0 : index
    %c0_310 = arith.constant 0 : index
    %564 = vector.load %arg16[%c0_309, %c0_310] : memref<1x32xf32, #tpu.memory_space<vmem>>, vector<1x32xf32>
    %565 = vector.broadcast %564 : vector<1x32xf32> to vector<4x32xf32>
    %566 = arith.addf %563, %565 : vector<4x32xf32>
    %567 = arith.negf %566 : vector<4x32xf32>
    %568 = math.exp %567 : vector<4x32xf32>
    %cst_311 = arith.constant 1.000000e+00 : f32
    %569 = vector.broadcast %cst_311 : f32 to vector<4x32xf32>
    %570 = arith.addf %569, %568 : vector<4x32xf32>
    %571 = arith.divf %569, %570 : vector<4x32xf32>
    %c0_312 = arith.constant 0 : index
    %c0_313 = arith.constant 0 : index
    %572 = vector.load %arg11[%c0_312, %c0_313] : memref<32x32xf32, #tpu.memory_space<vmem>>, vector<32x32xf32>
    %cst_314 = arith.constant dense<0.000000e+00> : vector<4x32xf32>
    %573 = tpu.matmul %315, %572, %cst_314 {dimension_numbers = #tpu.dot_dimension_numbers<[1], [0], [0], [1], [0, 0, 1, 1], [], []>} : vector<4x32xf32>, vector<32x32xf32>, vector<4x32xf32> -> vector<4x32xf32>
    %c0_315 = arith.constant 0 : index
    %c0_316 = arith.constant 0 : index
    %574 = vector.load %arg14[%c0_315, %c0_316] : memref<32x32xf32, #tpu.memory_space<vmem>>, vector<32x32xf32>
    %cst_317 = arith.constant dense<0.000000e+00> : vector<4x32xf32>
    %575 = tpu.matmul %558, %574, %cst_317 {dimension_numbers = #tpu.dot_dimension_numbers<[1], [0], [0], [1], [0, 0, 1, 1], [], []>} : vector<4x32xf32>, vector<32x32xf32>, vector<4x32xf32> -> vector<4x32xf32>
    %576 = arith.addf %573, %575 : vector<4x32xf32>
    %c0_318 = arith.constant 0 : index
    %c0_319 = arith.constant 0 : index
    %577 = vector.load %arg17[%c0_318, %c0_319] : memref<1x32xf32, #tpu.memory_space<vmem>>, vector<1x32xf32>
    %578 = vector.broadcast %577 : vector<1x32xf32> to vector<4x32xf32>
    %579 = arith.addf %576, %578 : vector<4x32xf32>
    %580 = arith.negf %579 : vector<4x32xf32>
    %581 = math.exp %580 : vector<4x32xf32>
    %cst_320 = arith.constant 1.000000e+00 : f32
    %582 = vector.broadcast %cst_320 : f32 to vector<4x32xf32>
    %583 = arith.addf %582, %581 : vector<4x32xf32>
    %584 = arith.divf %582, %583 : vector<4x32xf32>
    %c0_321 = arith.constant 0 : index
    %c0_322 = arith.constant 0 : index
    %585 = vector.load %arg12[%c0_321, %c0_322] : memref<32x32xf32, #tpu.memory_space<vmem>>, vector<32x32xf32>
    %cst_323 = arith.constant dense<0.000000e+00> : vector<4x32xf32>
    %586 = tpu.matmul %315, %585, %cst_323 {dimension_numbers = #tpu.dot_dimension_numbers<[1], [0], [0], [1], [0, 0, 1, 1], [], []>} : vector<4x32xf32>, vector<32x32xf32>, vector<4x32xf32> -> vector<4x32xf32>
    %587 = arith.mulf %571, %558 : vector<4x32xf32>
    %c0_324 = arith.constant 0 : index
    %c0_325 = arith.constant 0 : index
    %588 = vector.load %arg15[%c0_324, %c0_325] : memref<32x32xf32, #tpu.memory_space<vmem>>, vector<32x32xf32>
    %cst_326 = arith.constant dense<0.000000e+00> : vector<4x32xf32>
    %589 = tpu.matmul %587, %588, %cst_326 {dimension_numbers = #tpu.dot_dimension_numbers<[1], [0], [0], [1], [0, 0, 1, 1], [], []>} : vector<4x32xf32>, vector<32x32xf32>, vector<4x32xf32> -> vector<4x32xf32>
    %590 = arith.addf %586, %589 : vector<4x32xf32>
    %c0_327 = arith.constant 0 : index
    %c0_328 = arith.constant 0 : index
    %591 = vector.load %arg18[%c0_327, %c0_328] : memref<1x32xf32, #tpu.memory_space<vmem>>, vector<1x32xf32>
    %592 = vector.broadcast %591 : vector<1x32xf32> to vector<4x32xf32>
    %593 = arith.addf %590, %592 : vector<4x32xf32>
    %594 = math.tanh %593 : vector<4x32xf32>
    %595 = arith.mulf %584, %558 : vector<4x32xf32>
    %cst_329 = arith.constant 1.000000e+00 : f32
    %596 = vector.broadcast %cst_329 : f32 to vector<4x32xf32>
    %597 = arith.subf %596, %584 : vector<4x32xf32>
    %598 = arith.mulf %597, %594 : vector<4x32xf32>
    %599 = arith.addf %595, %598 : vector<4x32xf32>
    %c0_330 = arith.constant 0 : index
    %c0_331 = arith.constant 0 : index
    %600 = vector.load %arg10[%c0_330, %c0_331] : memref<32x32xf32, #tpu.memory_space<vmem>>, vector<32x32xf32>
    %cst_332 = arith.constant dense<0.000000e+00> : vector<4x32xf32>
    %601 = tpu.matmul %341, %600, %cst_332 {dimension_numbers = #tpu.dot_dimension_numbers<[1], [0], [0], [1], [0, 0, 1, 1], [], []>} : vector<4x32xf32>, vector<32x32xf32>, vector<4x32xf32> -> vector<4x32xf32>
    %c0_333 = arith.constant 0 : index
    %c0_334 = arith.constant 0 : index
    %602 = vector.load %arg13[%c0_333, %c0_334] : memref<32x32xf32, #tpu.memory_space<vmem>>, vector<32x32xf32>
    %cst_335 = arith.constant dense<0.000000e+00> : vector<4x32xf32>
    %603 = tpu.matmul %599, %602, %cst_335 {dimension_numbers = #tpu.dot_dimension_numbers<[1], [0], [0], [1], [0, 0, 1, 1], [], []>} : vector<4x32xf32>, vector<32x32xf32>, vector<4x32xf32> -> vector<4x32xf32>
    %604 = arith.addf %601, %603 : vector<4x32xf32>
    %c0_336 = arith.constant 0 : index
    %c0_337 = arith.constant 0 : index
    %605 = vector.load %arg16[%c0_336, %c0_337] : memref<1x32xf32, #tpu.memory_space<vmem>>, vector<1x32xf32>
    %606 = vector.broadcast %605 : vector<1x32xf32> to vector<4x32xf32>
    %607 = arith.addf %604, %606 : vector<4x32xf32>
    %608 = arith.negf %607 : vector<4x32xf32>
    %609 = math.exp %608 : vector<4x32xf32>
    %cst_338 = arith.constant 1.000000e+00 : f32
    %610 = vector.broadcast %cst_338 : f32 to vector<4x32xf32>
    %611 = arith.addf %610, %609 : vector<4x32xf32>
    %612 = arith.divf %610, %611 : vector<4x32xf32>
    %c0_339 = arith.constant 0 : index
    %c0_340 = arith.constant 0 : index
    %613 = vector.load %arg11[%c0_339, %c0_340] : memref<32x32xf32, #tpu.memory_space<vmem>>, vector<32x32xf32>
    %cst_341 = arith.constant dense<0.000000e+00> : vector<4x32xf32>
    %614 = tpu.matmul %341, %613, %cst_341 {dimension_numbers = #tpu.dot_dimension_numbers<[1], [0], [0], [1], [0, 0, 1, 1], [], []>} : vector<4x32xf32>, vector<32x32xf32>, vector<4x32xf32> -> vector<4x32xf32>
    %c0_342 = arith.constant 0 : index
    %c0_343 = arith.constant 0 : index
    %615 = vector.load %arg14[%c0_342, %c0_343] : memref<32x32xf32, #tpu.memory_space<vmem>>, vector<32x32xf32>
    %cst_344 = arith.constant dense<0.000000e+00> : vector<4x32xf32>
    %616 = tpu.matmul %599, %615, %cst_344 {dimension_numbers = #tpu.dot_dimension_numbers<[1], [0], [0], [1], [0, 0, 1, 1], [], []>} : vector<4x32xf32>, vector<32x32xf32>, vector<4x32xf32> -> vector<4x32xf32>
    %617 = arith.addf %614, %616 : vector<4x32xf32>
    %c0_345 = arith.constant 0 : index
    %c0_346 = arith.constant 0 : index
    %618 = vector.load %arg17[%c0_345, %c0_346] : memref<1x32xf32, #tpu.memory_space<vmem>>, vector<1x32xf32>
    %619 = vector.broadcast %618 : vector<1x32xf32> to vector<4x32xf32>
    %620 = arith.addf %617, %619 : vector<4x32xf32>
    %621 = arith.negf %620 : vector<4x32xf32>
    %622 = math.exp %621 : vector<4x32xf32>
    %cst_347 = arith.constant 1.000000e+00 : f32
    %623 = vector.broadcast %cst_347 : f32 to vector<4x32xf32>
    %624 = arith.addf %623, %622 : vector<4x32xf32>
    %625 = arith.divf %623, %624 : vector<4x32xf32>
    %c0_348 = arith.constant 0 : index
    %c0_349 = arith.constant 0 : index
    %626 = vector.load %arg12[%c0_348, %c0_349] : memref<32x32xf32, #tpu.memory_space<vmem>>, vector<32x32xf32>
    %cst_350 = arith.constant dense<0.000000e+00> : vector<4x32xf32>
    %627 = tpu.matmul %341, %626, %cst_350 {dimension_numbers = #tpu.dot_dimension_numbers<[1], [0], [0], [1], [0, 0, 1, 1], [], []>} : vector<4x32xf32>, vector<32x32xf32>, vector<4x32xf32> -> vector<4x32xf32>
    %628 = arith.mulf %612, %599 : vector<4x32xf32>
    %c0_351 = arith.constant 0 : index
    %c0_352 = arith.constant 0 : index
    %629 = vector.load %arg15[%c0_351, %c0_352] : memref<32x32xf32, #tpu.memory_space<vmem>>, vector<32x32xf32>
    %cst_353 = arith.constant dense<0.000000e+00> : vector<4x32xf32>
    %630 = tpu.matmul %628, %629, %cst_353 {dimension_numbers = #tpu.dot_dimension_numbers<[1], [0], [0], [1], [0, 0, 1, 1], [], []>} : vector<4x32xf32>, vector<32x32xf32>, vector<4x32xf32> -> vector<4x32xf32>
    %631 = arith.addf %627, %630 : vector<4x32xf32>
    %c0_354 = arith.constant 0 : index
    %c0_355 = arith.constant 0 : index
    %632 = vector.load %arg18[%c0_354, %c0_355] : memref<1x32xf32, #tpu.memory_space<vmem>>, vector<1x32xf32>
    %633 = vector.broadcast %632 : vector<1x32xf32> to vector<4x32xf32>
    %634 = arith.addf %631, %633 : vector<4x32xf32>
    %635 = math.tanh %634 : vector<4x32xf32>
    %636 = arith.mulf %625, %599 : vector<4x32xf32>
    %cst_356 = arith.constant 1.000000e+00 : f32
    %637 = vector.broadcast %cst_356 : f32 to vector<4x32xf32>
    %638 = arith.subf %637, %625 : vector<4x32xf32>
    %639 = arith.mulf %638, %635 : vector<4x32xf32>
    %640 = arith.addf %636, %639 : vector<4x32xf32>
    %c0_357 = arith.constant 0 : index
    %c0_358 = arith.constant 0 : index
    %641 = vector.load %arg10[%c0_357, %c0_358] : memref<32x32xf32, #tpu.memory_space<vmem>>, vector<32x32xf32>
    %cst_359 = arith.constant dense<0.000000e+00> : vector<4x32xf32>
    %642 = tpu.matmul %367, %641, %cst_359 {dimension_numbers = #tpu.dot_dimension_numbers<[1], [0], [0], [1], [0, 0, 1, 1], [], []>} : vector<4x32xf32>, vector<32x32xf32>, vector<4x32xf32> -> vector<4x32xf32>
    %c0_360 = arith.constant 0 : index
    %c0_361 = arith.constant 0 : index
    %643 = vector.load %arg13[%c0_360, %c0_361] : memref<32x32xf32, #tpu.memory_space<vmem>>, vector<32x32xf32>
    %cst_362 = arith.constant dense<0.000000e+00> : vector<4x32xf32>
    %644 = tpu.matmul %640, %643, %cst_362 {dimension_numbers = #tpu.dot_dimension_numbers<[1], [0], [0], [1], [0, 0, 1, 1], [], []>} : vector<4x32xf32>, vector<32x32xf32>, vector<4x32xf32> -> vector<4x32xf32>
    %645 = arith.addf %642, %644 : vector<4x32xf32>
    %c0_363 = arith.constant 0 : index
    %c0_364 = arith.constant 0 : index
    %646 = vector.load %arg16[%c0_363, %c0_364] : memref<1x32xf32, #tpu.memory_space<vmem>>, vector<1x32xf32>
    %647 = vector.broadcast %646 : vector<1x32xf32> to vector<4x32xf32>
    %648 = arith.addf %645, %647 : vector<4x32xf32>
    %649 = arith.negf %648 : vector<4x32xf32>
    %650 = math.exp %649 : vector<4x32xf32>
    %cst_365 = arith.constant 1.000000e+00 : f32
    %651 = vector.broadcast %cst_365 : f32 to vector<4x32xf32>
    %652 = arith.addf %651, %650 : vector<4x32xf32>
    %653 = arith.divf %651, %652 : vector<4x32xf32>
    %c0_366 = arith.constant 0 : index
    %c0_367 = arith.constant 0 : index
    %654 = vector.load %arg11[%c0_366, %c0_367] : memref<32x32xf32, #tpu.memory_space<vmem>>, vector<32x32xf32>
    %cst_368 = arith.constant dense<0.000000e+00> : vector<4x32xf32>
    %655 = tpu.matmul %367, %654, %cst_368 {dimension_numbers = #tpu.dot_dimension_numbers<[1], [0], [0], [1], [0, 0, 1, 1], [], []>} : vector<4x32xf32>, vector<32x32xf32>, vector<4x32xf32> -> vector<4x32xf32>
    %c0_369 = arith.constant 0 : index
    %c0_370 = arith.constant 0 : index
    %656 = vector.load %arg14[%c0_369, %c0_370] : memref<32x32xf32, #tpu.memory_space<vmem>>, vector<32x32xf32>
    %cst_371 = arith.constant dense<0.000000e+00> : vector<4x32xf32>
    %657 = tpu.matmul %640, %656, %cst_371 {dimension_numbers = #tpu.dot_dimension_numbers<[1], [0], [0], [1], [0, 0, 1, 1], [], []>} : vector<4x32xf32>, vector<32x32xf32>, vector<4x32xf32> -> vector<4x32xf32>
    %658 = arith.addf %655, %657 : vector<4x32xf32>
    %c0_372 = arith.constant 0 : index
    %c0_373 = arith.constant 0 : index
    %659 = vector.load %arg17[%c0_372, %c0_373] : memref<1x32xf32, #tpu.memory_space<vmem>>, vector<1x32xf32>
    %660 = vector.broadcast %659 : vector<1x32xf32> to vector<4x32xf32>
    %661 = arith.addf %658, %660 : vector<4x32xf32>
    %662 = arith.negf %661 : vector<4x32xf32>
    %663 = math.exp %662 : vector<4x32xf32>
    %cst_374 = arith.constant 1.000000e+00 : f32
    %664 = vector.broadcast %cst_374 : f32 to vector<4x32xf32>
    %665 = arith.addf %664, %663 : vector<4x32xf32>
    %666 = arith.divf %664, %665 : vector<4x32xf32>
    %c0_375 = arith.constant 0 : index
    %c0_376 = arith.constant 0 : index
    %667 = vector.load %arg12[%c0_375, %c0_376] : memref<32x32xf32, #tpu.memory_space<vmem>>, vector<32x32xf32>
    %cst_377 = arith.constant dense<0.000000e+00> : vector<4x32xf32>
    %668 = tpu.matmul %367, %667, %cst_377 {dimension_numbers = #tpu.dot_dimension_numbers<[1], [0], [0], [1], [0, 0, 1, 1], [], []>} : vector<4x32xf32>, vector<32x32xf32>, vector<4x32xf32> -> vector<4x32xf32>
    %669 = arith.mulf %653, %640 : vector<4x32xf32>
    %c0_378 = arith.constant 0 : index
    %c0_379 = arith.constant 0 : index
    %670 = vector.load %arg15[%c0_378, %c0_379] : memref<32x32xf32, #tpu.memory_space<vmem>>, vector<32x32xf32>
    %cst_380 = arith.constant dense<0.000000e+00> : vector<4x32xf32>
    %671 = tpu.matmul %669, %670, %cst_380 {dimension_numbers = #tpu.dot_dimension_numbers<[1], [0], [0], [1], [0, 0, 1, 1], [], []>} : vector<4x32xf32>, vector<32x32xf32>, vector<4x32xf32> -> vector<4x32xf32>
    %672 = arith.addf %668, %671 : vector<4x32xf32>
    %c0_381 = arith.constant 0 : index
    %c0_382 = arith.constant 0 : index
    %673 = vector.load %arg18[%c0_381, %c0_382] : memref<1x32xf32, #tpu.memory_space<vmem>>, vector<1x32xf32>
    %674 = vector.broadcast %673 : vector<1x32xf32> to vector<4x32xf32>
    %675 = arith.addf %672, %674 : vector<4x32xf32>
    %676 = math.tanh %675 : vector<4x32xf32>
    %677 = arith.mulf %666, %640 : vector<4x32xf32>
    %cst_383 = arith.constant 1.000000e+00 : f32
    %678 = vector.broadcast %cst_383 : f32 to vector<4x32xf32>
    %679 = arith.subf %678, %666 : vector<4x32xf32>
    %680 = arith.mulf %679, %676 : vector<4x32xf32>
    %681 = arith.addf %677, %680 : vector<4x32xf32>
    %c0_384 = arith.constant 0 : index
    %c0_385 = arith.constant 0 : index
    %682 = vector.load %arg10[%c0_384, %c0_385] : memref<32x32xf32, #tpu.memory_space<vmem>>, vector<32x32xf32>
    %cst_386 = arith.constant dense<0.000000e+00> : vector<4x32xf32>
    %683 = tpu.matmul %393, %682, %cst_386 {dimension_numbers = #tpu.dot_dimension_numbers<[1], [0], [0], [1], [0, 0, 1, 1], [], []>} : vector<4x32xf32>, vector<32x32xf32>, vector<4x32xf32> -> vector<4x32xf32>
    %c0_387 = arith.constant 0 : index
    %c0_388 = arith.constant 0 : index
    %684 = vector.load %arg13[%c0_387, %c0_388] : memref<32x32xf32, #tpu.memory_space<vmem>>, vector<32x32xf32>
    %cst_389 = arith.constant dense<0.000000e+00> : vector<4x32xf32>
    %685 = tpu.matmul %681, %684, %cst_389 {dimension_numbers = #tpu.dot_dimension_numbers<[1], [0], [0], [1], [0, 0, 1, 1], [], []>} : vector<4x32xf32>, vector<32x32xf32>, vector<4x32xf32> -> vector<4x32xf32>
    %686 = arith.addf %683, %685 : vector<4x32xf32>
    %c0_390 = arith.constant 0 : index
    %c0_391 = arith.constant 0 : index
    %687 = vector.load %arg16[%c0_390, %c0_391] : memref<1x32xf32, #tpu.memory_space<vmem>>, vector<1x32xf32>
    %688 = vector.broadcast %687 : vector<1x32xf32> to vector<4x32xf32>
    %689 = arith.addf %686, %688 : vector<4x32xf32>
    %690 = arith.negf %689 : vector<4x32xf32>
    %691 = math.exp %690 : vector<4x32xf32>
    %cst_392 = arith.constant 1.000000e+00 : f32
    %692 = vector.broadcast %cst_392 : f32 to vector<4x32xf32>
    %693 = arith.addf %692, %691 : vector<4x32xf32>
    %694 = arith.divf %692, %693 : vector<4x32xf32>
    %c0_393 = arith.constant 0 : index
    %c0_394 = arith.constant 0 : index
    %695 = vector.load %arg11[%c0_393, %c0_394] : memref<32x32xf32, #tpu.memory_space<vmem>>, vector<32x32xf32>
    %cst_395 = arith.constant dense<0.000000e+00> : vector<4x32xf32>
    %696 = tpu.matmul %393, %695, %cst_395 {dimension_numbers = #tpu.dot_dimension_numbers<[1], [0], [0], [1], [0, 0, 1, 1], [], []>} : vector<4x32xf32>, vector<32x32xf32>, vector<4x32xf32> -> vector<4x32xf32>
    %c0_396 = arith.constant 0 : index
    %c0_397 = arith.constant 0 : index
    %697 = vector.load %arg14[%c0_396, %c0_397] : memref<32x32xf32, #tpu.memory_space<vmem>>, vector<32x32xf32>
    %cst_398 = arith.constant dense<0.000000e+00> : vector<4x32xf32>
    %698 = tpu.matmul %681, %697, %cst_398 {dimension_numbers = #tpu.dot_dimension_numbers<[1], [0], [0], [1], [0, 0, 1, 1], [], []>} : vector<4x32xf32>, vector<32x32xf32>, vector<4x32xf32> -> vector<4x32xf32>
    %699 = arith.addf %696, %698 : vector<4x32xf32>
    %c0_399 = arith.constant 0 : index
    %c0_400 = arith.constant 0 : index
    %700 = vector.load %arg17[%c0_399, %c0_400] : memref<1x32xf32, #tpu.memory_space<vmem>>, vector<1x32xf32>
    %701 = vector.broadcast %700 : vector<1x32xf32> to vector<4x32xf32>
    %702 = arith.addf %699, %701 : vector<4x32xf32>
    %703 = arith.negf %702 : vector<4x32xf32>
    %704 = math.exp %703 : vector<4x32xf32>
    %cst_401 = arith.constant 1.000000e+00 : f32
    %705 = vector.broadcast %cst_401 : f32 to vector<4x32xf32>
    %706 = arith.addf %705, %704 : vector<4x32xf32>
    %707 = arith.divf %705, %706 : vector<4x32xf32>
    %c0_402 = arith.constant 0 : index
    %c0_403 = arith.constant 0 : index
    %708 = vector.load %arg12[%c0_402, %c0_403] : memref<32x32xf32, #tpu.memory_space<vmem>>, vector<32x32xf32>
    %cst_404 = arith.constant dense<0.000000e+00> : vector<4x32xf32>
    %709 = tpu.matmul %393, %708, %cst_404 {dimension_numbers = #tpu.dot_dimension_numbers<[1], [0], [0], [1], [0, 0, 1, 1], [], []>} : vector<4x32xf32>, vector<32x32xf32>, vector<4x32xf32> -> vector<4x32xf32>
    %710 = arith.mulf %694, %681 : vector<4x32xf32>
    %c0_405 = arith.constant 0 : index
    %c0_406 = arith.constant 0 : index
    %711 = vector.load %arg15[%c0_405, %c0_406] : memref<32x32xf32, #tpu.memory_space<vmem>>, vector<32x32xf32>
    %cst_407 = arith.constant dense<0.000000e+00> : vector<4x32xf32>
    %712 = tpu.matmul %710, %711, %cst_407 {dimension_numbers = #tpu.dot_dimension_numbers<[1], [0], [0], [1], [0, 0, 1, 1], [], []>} : vector<4x32xf32>, vector<32x32xf32>, vector<4x32xf32> -> vector<4x32xf32>
    %713 = arith.addf %709, %712 : vector<4x32xf32>
    %c0_408 = arith.constant 0 : index
    %c0_409 = arith.constant 0 : index
    %714 = vector.load %arg18[%c0_408, %c0_409] : memref<1x32xf32, #tpu.memory_space<vmem>>, vector<1x32xf32>
    %715 = vector.broadcast %714 : vector<1x32xf32> to vector<4x32xf32>
    %716 = arith.addf %713, %715 : vector<4x32xf32>
    %717 = math.tanh %716 : vector<4x32xf32>
    %718 = arith.mulf %707, %681 : vector<4x32xf32>
    %cst_410 = arith.constant 1.000000e+00 : f32
    %719 = vector.broadcast %cst_410 : f32 to vector<4x32xf32>
    %720 = arith.subf %719, %707 : vector<4x32xf32>
    %721 = arith.mulf %720, %717 : vector<4x32xf32>
    %722 = arith.addf %718, %721 : vector<4x32xf32>
    %723 = tpu.concatenate %599, %640, %681, %722 in 1 : vector<4x32xf32>, vector<4x32xf32>, vector<4x32xf32>, vector<4x32xf32> -> vector<4x128xf32>
    %c0_411 = arith.constant 0 : index
    %c0_412 = arith.constant 0 : index
    %724 = vector.load %arg19[%c0_411, %c0_412] : memref<128x128xf32, #tpu.memory_space<vmem>>, vector<128x128xf32>
    %cst_413 = arith.constant dense<0.000000e+00> : vector<4x128xf32>
    %725 = tpu.matmul %723, %724, %cst_413 {dimension_numbers = #tpu.dot_dimension_numbers<[1], [0], [0], [1], [0, 0, 1, 1], [], []>} : vector<4x128xf32>, vector<128x128xf32>, vector<4x128xf32> -> vector<4x128xf32>
    %c0_414 = arith.constant 0 : index
    %c0_415 = arith.constant 0 : index
    %726 = vector.load %arg20[%c0_414, %c0_415] : memref<1x128xf32, #tpu.memory_space<vmem>>, vector<1x128xf32>
    %727 = vector.broadcast %726 : vector<1x128xf32> to vector<4x128xf32>
    %728 = arith.addf %725, %727 : vector<4x128xf32>
    %cst_416 = arith.constant dense<0.000000e+00> : vector<4xf32>
    %729 = vector.multi_reduction <add>, %728, %cst_416 [1] : vector<4x128xf32> to vector<4xf32>
    %730 = vector.shape_cast %729 : vector<4xf32> to vector<4x1xf32>
    %cst_417 = arith.constant 1.280000e+02 : f32
    %731 = vector.broadcast %cst_417 : f32 to vector<4x1xf32>
    %732 = arith.divf %730, %731 : vector<4x1xf32>
    %733 = arith.mulf %728, %728 : vector<4x128xf32>
    %cst_418 = arith.constant dense<0.000000e+00> : vector<4xf32>
    %734 = vector.multi_reduction <add>, %733, %cst_418 [1] : vector<4x128xf32> to vector<4xf32>
    %735 = vector.shape_cast %734 : vector<4xf32> to vector<4x1xf32>
    %cst_419 = arith.constant 1.280000e+02 : f32
    %736 = vector.broadcast %cst_419 : f32 to vector<4x1xf32>
    %737 = arith.divf %735, %736 : vector<4x1xf32>
    %738 = arith.mulf %732, %732 : vector<4x1xf32>
    %739 = arith.subf %737, %738 : vector<4x1xf32>
    %740 = vector.broadcast %732 : vector<4x1xf32> to vector<4x128xf32>
    %741 = arith.subf %728, %740 : vector<4x128xf32>
    %cst_420 = arith.constant 9.99999974E-6 : f32
    %742 = vector.broadcast %cst_420 : f32 to vector<4x1xf32>
    %743 = arith.addf %739, %742 : vector<4x1xf32>
    %744 = math.rsqrt %743 : vector<4x1xf32>
    %745 = vector.broadcast %744 : vector<4x1xf32> to vector<4x128xf32>
    %746 = arith.mulf %741, %745 : vector<4x128xf32>
    %747 = math.tanh %746 : vector<4x128xf32>
    %c0_421 = arith.constant 0 : index
    %c0_422 = arith.constant 0 : index
    %748 = vector.load %arg21[%c0_421, %c0_422] : memref<128x128xf32, #tpu.memory_space<vmem>>, vector<128x128xf32>
    %cst_423 = arith.constant dense<0.000000e+00> : vector<4x128xf32>
    %749 = tpu.matmul %747, %748, %cst_423 {dimension_numbers = #tpu.dot_dimension_numbers<[1], [0], [0], [1], [0, 0, 1, 1], [], []>} : vector<4x128xf32>, vector<128x128xf32>, vector<4x128xf32> -> vector<4x128xf32>
    %c0_424 = arith.constant 0 : index
    %c0_425 = arith.constant 0 : index
    %750 = vector.load %arg22[%c0_424, %c0_425] : memref<1x128xf32, #tpu.memory_space<vmem>>, vector<1x128xf32>
    %751 = vector.broadcast %750 : vector<1x128xf32> to vector<4x128xf32>
    %752 = arith.addf %749, %751 : vector<4x128xf32>
    %cst_426 = arith.constant dense<0.000000e+00> : vector<4xf32>
    %753 = vector.multi_reduction <add>, %752, %cst_426 [1] : vector<4x128xf32> to vector<4xf32>
    %754 = vector.shape_cast %753 : vector<4xf32> to vector<4x1xf32>
    %cst_427 = arith.constant 1.280000e+02 : f32
    %755 = vector.broadcast %cst_427 : f32 to vector<4x1xf32>
    %756 = arith.divf %754, %755 : vector<4x1xf32>
    %757 = arith.mulf %752, %752 : vector<4x128xf32>
    %cst_428 = arith.constant dense<0.000000e+00> : vector<4xf32>
    %758 = vector.multi_reduction <add>, %757, %cst_428 [1] : vector<4x128xf32> to vector<4xf32>
    %759 = vector.shape_cast %758 : vector<4xf32> to vector<4x1xf32>
    %cst_429 = arith.constant 1.280000e+02 : f32
    %760 = vector.broadcast %cst_429 : f32 to vector<4x1xf32>
    %761 = arith.divf %759, %760 : vector<4x1xf32>
    %762 = arith.mulf %756, %756 : vector<4x1xf32>
    %763 = arith.subf %761, %762 : vector<4x1xf32>
    %764 = vector.broadcast %756 : vector<4x1xf32> to vector<4x128xf32>
    %765 = arith.subf %752, %764 : vector<4x128xf32>
    %cst_430 = arith.constant 9.99999974E-6 : f32
    %766 = vector.broadcast %cst_430 : f32 to vector<4x1xf32>
    %767 = arith.addf %763, %766 : vector<4x1xf32>
    %768 = math.rsqrt %767 : vector<4x1xf32>
    %769 = vector.broadcast %768 : vector<4x1xf32> to vector<4x128xf32>
    %770 = arith.mulf %765, %769 : vector<4x128xf32>
    %771 = math.tanh %770 : vector<4x128xf32>
    %c0_431 = arith.constant 0 : index
    %c0_432 = arith.constant 0 : index
    %772 = vector.load %arg23[%c0_431, %c0_432] : memref<128x64xf32, #tpu.memory_space<vmem>>, vector<128x64xf32>
    %cst_433 = arith.constant dense<0.000000e+00> : vector<4x64xf32>
    %773 = tpu.matmul %771, %772, %cst_433 {dimension_numbers = #tpu.dot_dimension_numbers<[1], [0], [0], [1], [0, 0, 1, 1], [], []>} : vector<4x128xf32>, vector<128x64xf32>, vector<4x64xf32> -> vector<4x64xf32>
    %c0_434 = arith.constant 0 : index
    %c0_435 = arith.constant 0 : index
    %774 = vector.load %arg24[%c0_434, %c0_435] : memref<1x64xf32, #tpu.memory_space<vmem>>, vector<1x64xf32>
    %775 = vector.broadcast %774 : vector<1x64xf32> to vector<4x64xf32>
    %776 = arith.addf %773, %775 : vector<4x64xf32>
    %cst_436 = arith.constant dense<0.000000e+00> : vector<4xf32>
    %777 = vector.multi_reduction <add>, %776, %cst_436 [1] : vector<4x64xf32> to vector<4xf32>
    %778 = vector.shape_cast %777 : vector<4xf32> to vector<4x1xf32>
    %cst_437 = arith.constant 6.400000e+01 : f32
    %779 = vector.broadcast %cst_437 : f32 to vector<4x1xf32>
    %780 = arith.divf %778, %779 : vector<4x1xf32>
    %781 = arith.mulf %776, %776 : vector<4x64xf32>
    %cst_438 = arith.constant dense<0.000000e+00> : vector<4xf32>
    %782 = vector.multi_reduction <add>, %781, %cst_438 [1] : vector<4x64xf32> to vector<4xf32>
    %783 = vector.shape_cast %782 : vector<4xf32> to vector<4x1xf32>
    %cst_439 = arith.constant 6.400000e+01 : f32
    %784 = vector.broadcast %cst_439 : f32 to vector<4x1xf32>
    %785 = arith.divf %783, %784 : vector<4x1xf32>
    %786 = arith.mulf %780, %780 : vector<4x1xf32>
    %787 = arith.subf %785, %786 : vector<4x1xf32>
    %788 = vector.broadcast %780 : vector<4x1xf32> to vector<4x64xf32>
    %789 = arith.subf %776, %788 : vector<4x64xf32>
    %cst_440 = arith.constant 9.99999974E-6 : f32
    %790 = vector.broadcast %cst_440 : f32 to vector<4x1xf32>
    %791 = arith.addf %787, %790 : vector<4x1xf32>
    %792 = math.rsqrt %791 : vector<4x1xf32>
    %793 = vector.broadcast %792 : vector<4x1xf32> to vector<4x64xf32>
    %794 = arith.mulf %789, %793 : vector<4x64xf32>
    %795 = math.tanh %794 : vector<4x64xf32>
    %c0_441 = arith.constant 0 : index
    %c0_442 = arith.constant 0 : index
    %796 = vector.load %arg25[%c0_441, %c0_442] : memref<64x64xf32, #tpu.memory_space<vmem>>, vector<64x64xf32>
    %cst_443 = arith.constant dense<0.000000e+00> : vector<4x64xf32>
    %797 = tpu.matmul %795, %796, %cst_443 {dimension_numbers = #tpu.dot_dimension_numbers<[1], [0], [0], [1], [0, 0, 1, 1], [], []>} : vector<4x64xf32>, vector<64x64xf32>, vector<4x64xf32> -> vector<4x64xf32>
    %c0_444 = arith.constant 0 : index
    %c0_445 = arith.constant 0 : index
    %798 = vector.load %arg26[%c0_444, %c0_445] : memref<1x64xf32, #tpu.memory_space<vmem>>, vector<1x64xf32>
    %799 = vector.broadcast %798 : vector<1x64xf32> to vector<4x64xf32>
    %800 = arith.addf %797, %799 : vector<4x64xf32>
    %cst_446 = arith.constant dense<0.000000e+00> : vector<4xf32>
    %801 = vector.multi_reduction <add>, %800, %cst_446 [1] : vector<4x64xf32> to vector<4xf32>
    %802 = vector.shape_cast %801 : vector<4xf32> to vector<4x1xf32>
    %cst_447 = arith.constant 6.400000e+01 : f32
    %803 = vector.broadcast %cst_447 : f32 to vector<4x1xf32>
    %804 = arith.divf %802, %803 : vector<4x1xf32>
    %805 = arith.mulf %800, %800 : vector<4x64xf32>
    %cst_448 = arith.constant dense<0.000000e+00> : vector<4xf32>
    %806 = vector.multi_reduction <add>, %805, %cst_448 [1] : vector<4x64xf32> to vector<4xf32>
    %807 = vector.shape_cast %806 : vector<4xf32> to vector<4x1xf32>
    %cst_449 = arith.constant 6.400000e+01 : f32
    %808 = vector.broadcast %cst_449 : f32 to vector<4x1xf32>
    %809 = arith.divf %807, %808 : vector<4x1xf32>
    %810 = arith.mulf %804, %804 : vector<4x1xf32>
    %811 = arith.subf %809, %810 : vector<4x1xf32>
    %812 = vector.broadcast %804 : vector<4x1xf32> to vector<4x64xf32>
    %813 = arith.subf %800, %812 : vector<4x64xf32>
    %cst_450 = arith.constant 9.99999974E-6 : f32
    %814 = vector.broadcast %cst_450 : f32 to vector<4x1xf32>
    %815 = arith.addf %811, %814 : vector<4x1xf32>
    %816 = math.rsqrt %815 : vector<4x1xf32>
    %817 = vector.broadcast %816 : vector<4x1xf32> to vector<4x64xf32>
    %818 = arith.mulf %813, %817 : vector<4x64xf32>
    %819 = math.tanh %818 : vector<4x64xf32>
    %c0_451 = arith.constant 0 : index
    %c0_452 = arith.constant 0 : index
    %820 = vector.load %arg27[%c0_451, %c0_452] : memref<64x1xf32, #tpu.memory_space<vmem>>, vector<64x1xf32>
    %cst_453 = arith.constant dense<0.000000e+00> : vector<4x1xf32>
    %821 = tpu.matmul %819, %820, %cst_453 {dimension_numbers = #tpu.dot_dimension_numbers<[1], [0], [0], [1], [0, 0, 1, 1], [], []>} : vector<4x64xf32>, vector<64x1xf32>, vector<4x1xf32> -> vector<4x1xf32>
    %c0_454 = arith.constant 0 : index
    %c0_455 = arith.constant 0 : index
    %822 = vector.load %arg28[%c0_454, %c0_455] : memref<1x1xf32, #tpu.memory_space<vmem>>, vector<1x1xf32>
    %823 = vector.broadcast %822 : vector<1x1xf32> to vector<4x1xf32>
    %824 = arith.addf %821, %823 : vector<4x1xf32>
    %c0_456 = arith.constant 0 : index
    %c0_457 = arith.constant 0 : index
    %825 = vector.load %arg29[%c0_456, %c0_457] : memref<4x1xf32, #tpu.memory_space<vmem>>, vector<4x1xf32>
    tpu.vector_store %arg29[%c0_456, %c0_457], %824 {strides = array<i32>} : memref<4x1xf32, #tpu.memory_space<vmem>>, vector<4x1xf32>,
    return
  }
}

</mosaic_0001>

<llo_original>
// kernel: gru_forward.1
$region0: #{gru_forward.1}
  #allocation0 [shape = 'u32[]', space=smem, size = 0x4, offset = 0x4, fixed_abs, tag = 'smem constant byte address 0x4 - core index']
  #allocation1 [shape = 'u32[72,128]{1,0:T(1,128)}', space=vmem, size = 0x9000, scoped, tag = 'internal scratch']
  #allocation2 [shape = 'f32[1,1]{1,0:T(1,128)S(1)}', space=vmem, size = 0x200, scoped, tag = 'scoped memory for gru_forward.1']
  %s0 = inlined_call_operand.smem [shape: u32[30], index: -1, kind: input, shape index: {}]
  %s1 = sld [smem:[%s0]]
  %s2 = scalar_lea.smem %s0, 1
  %s3 = sld [smem:[%s2]]
  %s4 = scalar_lea.smem %s0, 2
  %s5 = sld [smem:[%s4]]
  %s6 = scalar_lea.smem %s0, 3
  %s7 = sld [smem:[%s6]]
  %s8 = scalar_lea.smem %s0, 4
  %s9 = sld [smem:[%s8]]
  %s10 = scalar_lea.smem %s0, 5
  %s11 = sld [smem:[%s10]]
  %s12 = scalar_lea.smem %s0, 6
  %s13 = sld [smem:[%s12]]
  %s14 = scalar_lea.smem %s0, 7
  %s15 = sld [smem:[%s14]]
  %s16 = scalar_lea.smem %s0, 8
  %s17 = sld [smem:[%s16]]
  %s18 = scalar_lea.smem %s0, 9
  %s19 = sld [smem:[%s18]]
  %s20 = scalar_lea.smem %s0, 10
  %s21 = sld [smem:[%s20]]
  %s22 = scalar_lea.smem %s0, 11
  %s23 = sld [smem:[%s22]]
  %s24 = scalar_lea.smem %s0, 12
  %s25 = sld [smem:[%s24]]
  %s26 = scalar_lea.smem %s0, 13
  %s27 = sld [smem:[%s26]]
  %s28 = scalar_lea.smem %s0, 14
  %s29 = sld [smem:[%s28]]
  %s30 = scalar_lea.smem %s0, 15
  %s31 = sld [smem:[%s30]]
  %s32 = scalar_lea.smem %s0, 16
  %s33 = sld [smem:[%s32]]
  %s34 = scalar_lea.smem %s0, 17
  %s35 = sld [smem:[%s34]]
  %s36 = scalar_lea.smem %s0, 18
  %s37 = sld [smem:[%s36]]
  %s38 = scalar_lea.smem %s0, 19
  %s39 = sld [smem:[%s38]]
  %s40 = scalar_lea.smem %s0, 20
  %s41 = sld [smem:[%s40]]
  %s42 = scalar_lea.smem %s0, 21
  %s43 = sld [smem:[%s42]]
  %s44 = scalar_lea.smem %s0, 22
  %s45 = sld [smem:[%s44]]
  %s46 = scalar_lea.smem %s0, 23
  %s47 = sld [smem:[%s46]]
  %s48 = scalar_lea.smem %s0, 24
  %s49 = sld [smem:[%s48]]
  %s50 = scalar_lea.smem %s0, 25
  %s51 = sld [smem:[%s50]]
  %s52 = scalar_lea.smem %s0, 26
  %s53 = sld [smem:[%s52]]
  %s54 = scalar_lea.smem %s0, 27
  %s55 = sld [smem:[%s54]]
  %s56 = scalar_lea.smem %s0, 28
  %s57 = sld [smem:[%s56]]
  %s58 = scalar_lea.smem %s0, 29
  %s59 = sld [smem:[%s58]]
  %s60 = sld [smem:[#allocation0]]
  $region206: #{gru_forward.1} parent=0
    _
  %s62 = ssub.s32 1, %s60
  %s63 = scalar_select 0, %s62, %s60
  %v64 = vstv %s57
  %65 = vst [vmem:[#allocation2] sm:$0x1] %v64
  $region1: #{gru_forward.1} parent=0
    #allocation3 [shape = 'u8[512]{0}', space=vmem, size = 0x400, scoped, tag = 'input window, operand 1, single buffered']
    #allocation4 [shape = 's32[1]{0}', space=sflag, size = 0x4, scoped, tag = 'scoped memory for gru_forward.1']
    #allocation5 [shape = 'u8[512]{0}', space=vmem, size = 0x400, scoped, tag = 'input window, operand 2, single buffered']
    #allocation6 [shape = 's32[1]{0}', space=sflag, size = 0x4, scoped, tag = 'scoped memory for gru_forward.1']
    #allocation7 [shape = 'u8[512]{0}', space=vmem, size = 0x400, scoped, tag = 'input window, operand 3, single buffered']
    #allocation8 [shape = 'u8[16384]{0}', space=vmem, size = 0x4000, scoped, tag = 'input window, operand 4, single buffered']
    #allocation9 [shape = 's32[1]{0}', space=sflag, size = 0x4, scoped, tag = 'scoped memory for gru_forward.1']
    #allocation10 [shape = 'u8[16384]{0}', space=vmem, size = 0x4000, scoped, tag = 'input window, operand 5, single buffered']
    #allocation11 [shape = 'u8[16384]{0}', space=vmem, size = 0x4000, scoped, tag = 'input window, operand 6, single buffered']
    #allocation12 [shape = 's32[1]{0}', space=sflag, size = 0x4, scoped, tag = 'scoped memory for gru_forward.1']
    #allocation13 [shape = 'u8[512]{0}', space=vmem, size = 0x400, scoped, tag = 'input window, operand 7, single buffered']
    #allocation14 [shape = 'u8[512]{0}', space=vmem, size = 0x400, scoped, tag = 'input window, operand 8, single buffered']
    #allocation15 [shape = 's32[1]{0}', space=sflag, size = 0x4, scoped, tag = 'scoped memory for gru_forward.1']
    #allocation16 [shape = 'u8[512]{0}', space=vmem, size = 0x400, scoped, tag = 'input window, operand 9, single buffered']
    #allocation17 [shape = 'u8[16384]{0}', space=vmem, size = 0x4000, scoped, tag = 'input window, operand 10, single buffered']
    #allocation18 [shape = 's32[1]{0}', space=sflag, size = 0x4, scoped, tag = 'scoped memory for gru_forward.1']
    #allocation19 [shape = 'u8[16384]{0}', space=vmem, size = 0x4000, scoped, tag = 'input window, operand 11, single buffered']
    #allocation20 [shape = 'u8[16384]{0}', space=vmem, size = 0x4000, scoped, tag = 'input window, operand 12, single buffered']
    #allocation21 [shape = 's32[1]{0}', space=sflag, size = 0x4, scoped, tag = 'scoped memory for gru_forward.1']
    #allocation22 [shape = 'u8[16384]{0}', space=vmem, size = 0x4000, scoped, tag = 'input window, operand 13, single buffered']
    #allocation23 [shape = 'u8[16384]{0}', space=vmem, size = 0x4000, scoped, tag = 'input window, operand 14, single buffered']
    #allocation24 [shape = 's32[1]{0}', space=sflag, size = 0x4, scoped, tag = 'scoped memory for gru_forward.1']
    #allocation25 [shape = 'u8[16384]{0}', space=vmem, size = 0x4000, scoped, tag = 'input window, operand 15, single buffered']
    #allocation26 [shape = 'u8[512]{0}', space=vmem, size = 0x400, scoped, tag = 'input window, operand 16, single buffered']
    #allocation27 [shape = 's32[1]{0}', space=sflag, size = 0x4, scoped, tag = 'scoped memory for gru_forward.1']
    #allocation28 [shape = 'u8[512]{0}', space=vmem, size = 0x400, scoped, tag = 'input window, operand 17, single buffered']
    #allocation29 [shape = 'u8[512]{0}', space=vmem, size = 0x400, scoped, tag = 'input window, operand 18, single buffered']
    #allocation30 [shape = 's32[1]{0}', space=sflag, size = 0x4, scoped, tag = 'scoped memory for gru_forward.1']
    #allocation31 [shape = 'u8[512]{0}', space=vmem, size = 0x400, scoped, tag = 'input window, operand 20, single buffered']
    #allocation32 [shape = 'u8[32768]{0}', space=vmem, size = 0x8000, scoped, tag = 'input window, operand 25, single buffered']
    #allocation33 [shape = 's32[1]{0}', space=sflag, size = 0x4, scoped, tag = 'scoped memory for gru_forward.1']
    %66 = vsyncpa [#allocation4], 0
    %67 = vsyncpa [#allocation6], 0
    %68 = vsyncpa [#allocation9], 0
    %69 = vsyncpa [#allocation12], 0
    %70 = vsyncpa [#allocation15], 0
    %71 = vsyncpa [#allocation18], 0
    %72 = vsyncpa [#allocation21], 0
    %73 = vsyncpa [#allocation24], 0
    %74 = vsyncpa [#allocation27], 0
    %75 = vsyncpa [#allocation30], 0
    %76 = vsyncpa [#allocation33], 0
    // Predicated region
    $region2: #{gru_forward.1} parent=1 // pred_check
      _
    $region3: #{gru_forward.1} parent=1 // pred_check_branch
      %78 = sbr.rel (0) target = $region5
    $region4: #{gru_forward.1} parent=1 // pred_region
      _
    $region5: #{gru_forward.1} parent=1 // pred_fallthru
      _
    // Predicated region
    $region6: #{gru_forward.1} parent=1 // pred_check
      _
    $region7: #{gru_forward.1} parent=1 // pred_check_branch
      %80 = sbr.rel (0) target = $region9
    $region8: #{gru_forward.1} parent=1 // pred_region
      %82 = vsyncadd [#allocation4], 0
      %s84 = sshll.u32 %s3, 4
      %s85 = int_to_ptr.hbm [resolvable:$true] %s84
      %s86 = sshll.u32 [#allocation3], 4
      %s87 = int_to_ptr.vmem [resolvable:$true] %s86
      %89 = dma.hbm_to_vmem [thread:$0]  %s85, 16, %s87, [#allocation4]
    $region9: #{gru_forward.1} parent=1 // pred_fallthru
      _
    // Predicated region
    $region10: #{gru_forward.1} parent=1 // pred_check
      _
    $region11: #{gru_forward.1} parent=1 // pred_check_branch
      %91 = sbr.rel (0) target = $region13
    $region12: #{gru_forward.1} parent=1 // pred_region
      %93 = vsyncadd [#allocation6], 0
      %s95 = sshll.u32 %s5, 4
      %s96 = int_to_ptr.hbm [resolvable:$true] %s95
      %s97 = sshll.u32 [#allocation5], 4
      %s98 = int_to_ptr.vmem [resolvable:$true] %s97
      %100 = dma.hbm_to_vmem [thread:$0]  %s96, 16, %s98, [#allocation6]
    $region13: #{gru_forward.1} parent=1 // pred_fallthru
      _
    // Predicated region
    $region14: #{gru_forward.1} parent=1 // pred_check
      _
    $region15: #{gru_forward.1} parent=1 // pred_check_branch
      %102 = sbr.rel (0) target = $region17
    $region16: #{gru_forward.1} parent=1 // pred_region
      %104 = vsyncadd [#allocation6], 0
      %s106 = sshll.u32 %s7, 4
      %s107 = int_to_ptr.hbm [resolvable:$true] %s106
      %s108 = sshll.u32 [#allocation7], 4
      %s109 = int_to_ptr.vmem [resolvable:$true] %s108
      %111 = dma.hbm_to_vmem [thread:$0]  %s107, 16, %s109, [#allocation6]
    $region17: #{gru_forward.1} parent=1 // pred_fallthru
      _
    // Predicated region
    $region18: #{gru_forward.1} parent=1 // pred_check
      _
    $region19: #{gru_forward.1} parent=1 // pred_check_branch
      %113 = sbr.rel (0) target = $region21
    $region20: #{gru_forward.1} parent=1 // pred_region
      %115 = vsyncadd [#allocation9], 0
      %s116 = sshll.u32 %s9, 4
      %s117 = int_to_ptr.hbm [resolvable:$true] %s116
      %s118 = sshll.u32 [#allocation8], 4
      %s119 = int_to_ptr.vmem [resolvable:$true] %s118
      %124 = dma.hbm_to_vmem [thread:$0]  %s117, 512, %s119, [#allocation9], 128, 128, 8
    $region21: #{gru_forward.1} parent=1 // pred_fallthru
      _
    // Predicated region
    $region22: #{gru_forward.1} parent=1 // pred_check
      _
    $region23: #{gru_forward.1} parent=1 // pred_check_branch
      %126 = sbr.rel (0) target = $region25
    $region24: #{gru_forward.1} parent=1 // pred_region
      %128 = vsyncadd [#allocation9], 0
      %s129 = sshll.u32 %s11, 4
      %s130 = int_to_ptr.hbm [resolvable:$true] %s129
      %s131 = sshll.u32 [#allocation10], 4
      %s132 = int_to_ptr.vmem [resolvable:$true] %s131
      %137 = dma.hbm_to_vmem [thread:$0]  %s130, 512, %s132, [#allocation9], 128, 128, 8
    $region25: #{gru_forward.1} parent=1 // pred_fallthru
      _
    // Predicated region
    $region26: #{gru_forward.1} parent=1 // pred_check
      _
    $region27: #{gru_forward.1} parent=1 // pred_check_branch
      %139 = sbr.rel (0) target = $region29
    $region28: #{gru_forward.1} parent=1 // pred_region
      %141 = vsyncadd [#allocation12], 0
      %s142 = sshll.u32 %s13, 4
      %s143 = int_to_ptr.hbm [resolvable:$true] %s142
      %s144 = sshll.u32 [#allocation11], 4
      %s145 = int_to_ptr.vmem [resolvable:$true] %s144
      %150 = dma.hbm_to_vmem [thread:$0]  %s143, 512, %s145, [#allocation12], 128, 128, 8
    $region29: #{gru_forward.1} parent=1 // pred_fallthru
      _
    // Predicated region
    $region30: #{gru_forward.1} parent=1 // pred_check
      _
    $region31: #{gru_forward.1} parent=1 // pred_check_branch
      %152 = sbr.rel (0) target = $region33
    $region32: #{gru_forward.1} parent=1 // pred_region
      %154 = vsyncadd [#allocation12], 0
      %s156 = sshll.u32 %s15, 4
      %s157 = int_to_ptr.hbm [resolvable:$true] %s156
      %s158 = sshll.u32 [#allocation13], 4
      %s159 = int_to_ptr.vmem [resolvable:$true] %s158
      %161 = dma.hbm_to_vmem [thread:$0]  %s157, 16, %s159, [#allocation12]
    $region33: #{gru_forward.1} parent=1 // pred_fallthru
      _
    // Predicated region
    $region34: #{gru_forward.1} parent=1 // pred_check
      _
    $region35: #{gru_forward.1} parent=1 // pred_check_branch
      %163 = sbr.rel (0) target = $region37
    $region36: #{gru_forward.1} parent=1 // pred_region
      %165 = vsyncadd [#allocation15], 0
      %s167 = sshll.u32 %s17, 4
      %s168 = int_to_ptr.hbm [resolvable:$true] %s167
      %s169 = sshll.u32 [#allocation14], 4
      %s170 = int_to_ptr.vmem [resolvable:$true] %s169
      %172 = dma.hbm_to_vmem [thread:$0]  %s168, 16, %s170, [#allocation15]
    $region37: #{gru_forward.1} parent=1 // pred_fallthru
      _
    // Predicated region
    $region38: #{gru_forward.1} parent=1 // pred_check
      _
    $region39: #{gru_forward.1} parent=1 // pred_check_branch
      %174 = sbr.rel (0) target = $region41
    $region40: #{gru_forward.1} parent=1 // pred_region
      %176 = vsyncadd [#allocation15], 0
      %s178 = sshll.u32 %s19, 4
      %s179 = int_to_ptr.hbm [resolvable:$true] %s178
      %s180 = sshll.u32 [#allocation16], 4
      %s181 = int_to_ptr.vmem [resolvable:$true] %s180
      %183 = dma.hbm_to_vmem [thread:$0]  %s179, 16, %s181, [#allocation15]
    $region41: #{gru_forward.1} parent=1 // pred_fallthru
      _
    // Predicated region
    $region42: #{gru_forward.1} parent=1 // pred_check
      _
    $region43: #{gru_forward.1} parent=1 // pred_check_branch
      %185 = sbr.rel (0) target = $region45
    $region44: #{gru_forward.1} parent=1 // pred_region
      %187 = vsyncadd [#allocation18], 0
      %s188 = sshll.u32 %s21, 4
      %s189 = int_to_ptr.hbm [resolvable:$true] %s188
      %s190 = sshll.u32 [#allocation17], 4
      %s191 = int_to_ptr.vmem [resolvable:$true] %s190
      %196 = dma.hbm_to_vmem [thread:$0]  %s189, 512, %s191, [#allocation18], 128, 128, 8
    $region45: #{gru_forward.1} parent=1 // pred_fallthru
      _
    // Predicated region
    $region46: #{gru_forward.1} parent=1 // pred_check
      _
    $region47: #{gru_forward.1} parent=1 // pred_check_branch
      %198 = sbr.rel (0) target = $region49
    $region48: #{gru_forward.1} parent=1 // pred_region
      %200 = vsyncadd [#allocation18], 0
      %s201 = sshll.u32 %s23, 4
      %s202 = int_to_ptr.hbm [resolvable:$true] %s201
      %s203 = sshll.u32 [#allocation19], 4
      %s204 = int_to_ptr.vmem [resolvable:$true] %s203
      %209 = dma.hbm_to_vmem [thread:$0]  %s202, 512, %s204, [#allocation18], 128, 128, 8
    $region49: #{gru_forward.1} parent=1 // pred_fallthru
      _
    // Predicated region
    $region50: #{gru_forward.1} parent=1 // pred_check
      _
    $region51: #{gru_forward.1} parent=1 // pred_check_branch
      %211 = sbr.rel (0) target = $region53
    $region52: #{gru_forward.1} parent=1 // pred_region
      %213 = vsyncadd [#allocation21], 0
      %s214 = sshll.u32 %s25, 4
      %s215 = int_to_ptr.hbm [resolvable:$true] %s214
      %s216 = sshll.u32 [#allocation20], 4
      %s217 = int_to_ptr.vmem [resolvable:$true] %s216
      %222 = dma.hbm_to_vmem [thread:$0]  %s215, 512, %s217, [#allocation21], 128, 128, 8
    $region53: #{gru_forward.1} parent=1 // pred_fallthru
      _
    // Predicated region
    $region54: #{gru_forward.1} parent=1 // pred_check
      _
    $region55: #{gru_forward.1} parent=1 // pred_check_branch
      %224 = sbr.rel (0) target = $region57
    $region56: #{gru_forward.1} parent=1 // pred_region
      %226 = vsyncadd [#allocation21], 0
      %s227 = sshll.u32 %s27, 4
      %s228 = int_to_ptr.hbm [resolvable:$true] %s227
      %s229 = sshll.u32 [#allocation22], 4
      %s230 = int_to_ptr.vmem [resolvable:$true] %s229
      %235 = dma.hbm_to_vmem [thread:$0]  %s228, 512, %s230, [#allocation21], 128, 128, 8
    $region57: #{gru_forward.1} parent=1 // pred_fallthru
      _
    // Predicated region
    $region58: #{gru_forward.1} parent=1 // pred_check
      _
    $region59: #{gru_forward.1} parent=1 // pred_check_branch
      %237 = sbr.rel (0) target = $region61
    $region60: #{gru_forward.1} parent=1 // pred_region
      %239 = vsyncadd [#allocation24], 0
      %s240 = sshll.u32 %s29, 4
      %s241 = int_to_ptr.hbm [resolvable:$true] %s240
      %s242 = sshll.u32 [#allocation23], 4
      %s243 = int_to_ptr.vmem [resolvable:$true] %s242
      %248 = dma.hbm_to_vmem [thread:$0]  %s241, 512, %s243, [#allocation24], 128, 128, 8
    $region61: #{gru_forward.1} parent=1 // pred_fallthru
      _
    // Predicated region
    $region62: #{gru_forward.1} parent=1 // pred_check
      _
    $region63: #{gru_forward.1} parent=1 // pred_check_branch
      %250 = sbr.rel (0) target = $region65
    $region64: #{gru_forward.1} parent=1 // pred_region
      %252 = vsyncadd [#allocation24], 0
      %s253 = sshll.u32 %s31, 4
      %s254 = int_to_ptr.hbm [resolvable:$true] %s253
      %s255 = sshll.u32 [#allocation25], 4
      %s256 = int_to_ptr.vmem [resolvable:$true] %s255
      %261 = dma.hbm_to_vmem [thread:$0]  %s254, 512, %s256, [#allocation24], 128, 128, 8
    $region65: #{gru_forward.1} parent=1 // pred_fallthru
      _
    // Predicated region
    $region66: #{gru_forward.1} parent=1 // pred_check
      _
    $region67: #{gru_forward.1} parent=1 // pred_check_branch
      %263 = sbr.rel (0) target = $region69
    $region68: #{gru_forward.1} parent=1 // pred_region
      %265 = vsyncadd [#allocation27], 0
      %s267 = sshll.u32 %s33, 4
      %s268 = int_to_ptr.hbm [resolvable:$true] %s267
      %s269 = sshll.u32 [#allocation26], 4
      %s270 = int_to_ptr.vmem [resolvable:$true] %s269
      %272 = dma.hbm_to_vmem [thread:$0]  %s268, 16, %s270, [#allocation27]
    $region69: #{gru_forward.1} parent=1 // pred_fallthru
      _
    // Predicated region
    $region70: #{gru_forward.1} parent=1 // pred_check
      _
    $region71: #{gru_forward.1} parent=1 // pred_check_branch
      %274 = sbr.rel (0) target = $region73
    $region72: #{gru_forward.1} parent=1 // pred_region
      %276 = vsyncadd [#allocation27], 0
      %s278 = sshll.u32 %s35, 4
      %s279 = int_to_ptr.hbm [resolvable:$true] %s278
      %s280 = sshll.u32 [#allocation28], 4
      %s281 = int_to_ptr.vmem [resolvable:$true] %s280
      %283 = dma.hbm_to_vmem [thread:$0]  %s279, 16, %s281, [#allocation27]
    $region73: #{gru_forward.1} parent=1 // pred_fallthru
      _
    // Predicated region
    $region74: #{gru_forward.1} parent=1 // pred_check
      _
    $region75: #{gru_forward.1} parent=1 // pred_check_branch
      %285 = sbr.rel (0) target = $region77
    $region76: #{gru_forward.1} parent=1 // pred_region
      %287 = vsyncadd [#allocation30], 0
      %s289 = sshll.u32 %s37, 4
      %s290 = int_to_ptr.hbm [resolvable:$true] %s289
      %s291 = sshll.u32 [#allocation29], 4
      %s292 = int_to_ptr.vmem [resolvable:$true] %s291
      %294 = dma.hbm_to_vmem [thread:$0]  %s290, 16, %s292, [#allocation30]
    $region77: #{gru_forward.1} parent=1 // pred_fallthru
      _
    // Predicated region
    $region78: #{gru_forward.1} parent=1 // pred_check
      _
    $region79: #{gru_forward.1} parent=1 // pred_check_branch
      %296 = sbr.rel (0) target = $region81
    $region80: #{gru_forward.1} parent=1 // pred_region
      _
    $region81: #{gru_forward.1} parent=1 // pred_fallthru
      _
    // Predicated region
    $region82: #{gru_forward.1} parent=1 // pred_check
      _
    $region83: #{gru_forward.1} parent=1 // pred_check_branch
      %298 = sbr.rel (0) target = $region85
    $region84: #{gru_forward.1} parent=1 // pred_region
      %300 = vsyncadd [#allocation30], 0
      %s302 = sshll.u32 %s41, 4
      %s303 = int_to_ptr.hbm [resolvable:$true] %s302
      %s304 = sshll.u32 [#allocation31], 4
      %s305 = int_to_ptr.vmem [resolvable:$true] %s304
      %307 = dma.hbm_to_vmem [thread:$0]  %s303, 16, %s305, [#allocation30]
    $region85: #{gru_forward.1} parent=1 // pred_fallthru
      _
    // Predicated region
    $region86: #{gru_forward.1} parent=1 // pred_check
      _
    $region87: #{gru_forward.1} parent=1 // pred_check_branch
      %309 = sbr.rel (0) target = $region89
    $region88: #{gru_forward.1} parent=1 // pred_region
      _
    $region89: #{gru_forward.1} parent=1 // pred_fallthru
      _
    // Predicated region
    $region90: #{gru_forward.1} parent=1 // pred_check
      _
    $region91: #{gru_forward.1} parent=1 // pred_check_branch
      %311 = sbr.rel (0) target = $region93
    $region92: #{gru_forward.1} parent=1 // pred_region
      _
    $region93: #{gru_forward.1} parent=1 // pred_fallthru
      _
    // Predicated region
    $region94: #{gru_forward.1} parent=1 // pred_check
      _
    $region95: #{gru_forward.1} parent=1 // pred_check_branch
      %313 = sbr.rel (0) target = $region97
    $region96: #{gru_forward.1} parent=1 // pred_region
      _
    $region97: #{gru_forward.1} parent=1 // pred_fallthru
      _
    // Predicated region
    $region98: #{gru_forward.1} parent=1 // pred_check
      _
    $region99: #{gru_forward.1} parent=1 // pred_check_branch
      %315 = sbr.rel (0) target = $region101
    $region100: #{gru_forward.1} parent=1 // pred_region
      _
    $region101: #{gru_forward.1} parent=1 // pred_fallthru
      _
    // Predicated region
    $region102: #{gru_forward.1} parent=1 // pred_check
      _
    $region103: #{gru_forward.1} parent=1 // pred_check_branch
      %317 = sbr.rel (0) target = $region105
    $region104: #{gru_forward.1} parent=1 // pred_region
      %319 = vsyncadd [#allocation33], 0
      %s320 = sshll.u32 %s51, 4
      %s321 = int_to_ptr.hbm [resolvable:$true] %s320
      %s322 = sshll.u32 [#allocation32], 4
      %s323 = int_to_ptr.vmem [resolvable:$true] %s322
      %328 = dma.hbm_to_vmem [thread:$0]  %s321, 1024, %s323, [#allocation33], 128, 128, 8
    $region105: #{gru_forward.1} parent=1 // pred_fallthru
      _
    // Predicated region
    $region106: #{gru_forward.1} parent=1 // pred_check
      _
    $region107: #{gru_forward.1} parent=1 // pred_check_branch
      %330 = sbr.rel (0) target = $region109
    $region108: #{gru_forward.1} parent=1 // pred_region
      _
    $region109: #{gru_forward.1} parent=1 // pred_fallthru
      _
    // Predicated region
    $region110: #{gru_forward.1} parent=1 // pred_check
      _
    $region111: #{gru_forward.1} parent=1 // pred_check_branch
      %332 = sbr.rel (0) target = $region113
    $region112: #{gru_forward.1} parent=1 // pred_region
      _
    $region113: #{gru_forward.1} parent=1 // pred_fallthru
      _
    // Predicated region
    $region114: #{gru_forward.1} parent=1 // pred_check
      _
    $region115: #{gru_forward.1} parent=1 // pred_check_branch
      %334 = sbr.rel (0) target = $region117
    $region116: #{gru_forward.1} parent=1 // pred_region
      _
    $region117: #{gru_forward.1} parent=1 // pred_fallthru
      _
    // Predicated region
    $region118: #{gru_forward.1} parent=1 // pred_check
      _
    $region119: #{gru_forward.1} parent=1 // pred_check_branch
      %336 = sbr.rel (0) target = $region121
    $region120: #{gru_forward.1} parent=1 // pred_region
      %338 = dma.done [#allocation4], 16
    $region121: #{gru_forward.1} parent=1 // pred_fallthru
      _
    // Predicated region
    $region122: #{gru_forward.1} parent=1 // pred_check
      _
    $region123: #{gru_forward.1} parent=1 // pred_check_branch
      %340 = sbr.rel (0) target = $region125
    $region124: #{gru_forward.1} parent=1 // pred_region
      %342 = dma.done [#allocation6], 16
    $region125: #{gru_forward.1} parent=1 // pred_fallthru
      _
    // Predicated region
    $region126: #{gru_forward.1} parent=1 // pred_check
      _
    $region127: #{gru_forward.1} parent=1 // pred_check_branch
      %344 = sbr.rel (0) target = $region129
    $region128: #{gru_forward.1} parent=1 // pred_region
      %346 = dma.done [#allocation6], 16
    $region129: #{gru_forward.1} parent=1 // pred_fallthru
      _
    // Predicated region
    $region130: #{gru_forward.1} parent=1 // pred_check
      _
    $region131: #{gru_forward.1} parent=1 // pred_check_branch
      %348 = sbr.rel (0) target = $region133
    $region132: #{gru_forward.1} parent=1 // pred_region
      %350 = dma.done [#allocation9], 512
    $region133: #{gru_forward.1} parent=1 // pred_fallthru
      _
    // Predicated region
    $region134: #{gru_forward.1} parent=1 // pred_check
      _
    $region135: #{gru_forward.1} parent=1 // pred_check_branch
      %352 = sbr.rel (0) target = $region137
    $region136: #{gru_forward.1} parent=1 // pred_region
      %354 = dma.done [#allocation9], 512
    $region137: #{gru_forward.1} parent=1 // pred_fallthru
      _
    // Predicated region
    $region138: #{gru_forward.1} parent=1 // pred_check
      _
    $region139: #{gru_forward.1} parent=1 // pred_check_branch
      %356 = sbr.rel (0) target = $region141
    $region140: #{gru_forward.1} parent=1 // pred_region
      %358 = dma.done [#allocation12], 512
    $region141: #{gru_forward.1} parent=1 // pred_fallthru
      _
    // Predicated region
    $region142: #{gru_forward.1} parent=1 // pred_check
      _
    $region143: #{gru_forward.1} parent=1 // pred_check_branch
      %360 = sbr.rel (0) target = $region145
    $region144: #{gru_forward.1} parent=1 // pred_region
      %362 = dma.done [#allocation12], 16
    $region145: #{gru_forward.1} parent=1 // pred_fallthru
      _
    // Predicated region
    $region146: #{gru_forward.1} parent=1 // pred_check
      _
    $region147: #{gru_forward.1} parent=1 // pred_check_branch
      %364 = sbr.rel (0) target = $region149
    $region148: #{gru_forward.1} parent=1 // pred_region
      %366 = dma.done [#allocation15], 16
    $region149: #{gru_forward.1} parent=1 // pred_fallthru
      _
    // Predicated region
    $region150: #{gru_forward.1} parent=1 // pred_check
      _
    $region151: #{gru_forward.1} parent=1 // pred_check_branch
      %368 = sbr.rel (0) target = $region153
    $region152: #{gru_forward.1} parent=1 // pred_region
      %370 = dma.done [#allocation15], 16
    $region153: #{gru_forward.1} parent=1 // pred_fallthru
      _
    // Predicated region
    $region154: #{gru_forward.1} parent=1 // pred_check
      _
    $region155: #{gru_forward.1} parent=1 // pred_check_branch
      %372 = sbr.rel (0) target = $region157
    $region156: #{gru_forward.1} parent=1 // pred_region
      %374 = dma.done [#allocation18], 512
    $region157: #{gru_forward.1} parent=1 // pred_fallthru
      _
    // Predicated region
    $region158: #{gru_forward.1} parent=1 // pred_check
      _
    $region159: #{gru_forward.1} parent=1 // pred_check_branch
      %376 = sbr.rel (0) target = $region161
    $region160: #{gru_forward.1} parent=1 // pred_region
      %378 = dma.done [#allocation18], 512
    $region161: #{gru_forward.1} parent=1 // pred_fallthru
      _
    // Predicated region
    $region162: #{gru_forward.1} parent=1 // pred_check
      _
    $region163: #{gru_forward.1} parent=1 // pred_check_branch
      %380 = sbr.rel (0) target = $region165
    $region164: #{gru_forward.1} parent=1 // pred_region
      %382 = dma.done [#allocation21], 512
    $region165: #{gru_forward.1} parent=1 // pred_fallthru
      _
    // Predicated region
    $region166: #{gru_forward.1} parent=1 // pred_check
      _
    $region167: #{gru_forward.1} parent=1 // pred_check_branch
      %384 = sbr.rel (0) target = $region169
    $region168: #{gru_forward.1} parent=1 // pred_region
      %386 = dma.done [#allocation21], 512
    $region169: #{gru_forward.1} parent=1 // pred_fallthru
      _
    // Predicated region
    $region170: #{gru_forward.1} parent=1 // pred_check
      _
    $region171: #{gru_forward.1} parent=1 // pred_check_branch
      %388 = sbr.rel (0) target = $region173
    $region172: #{gru_forward.1} parent=1 // pred_region
      %390 = dma.done [#allocation24], 512
    $region173: #{gru_forward.1} parent=1 // pred_fallthru
      _
    // Predicated region
    $region174: #{gru_forward.1} parent=1 // pred_check
      _
    $region175: #{gru_forward.1} parent=1 // pred_check_branch
      %392 = sbr.rel (0) target = $region177
    $region176: #{gru_forward.1} parent=1 // pred_region
      %394 = dma.done [#allocation24], 512
    $region177: #{gru_forward.1} parent=1 // pred_fallthru
      _
    // Predicated region
    $region178: #{gru_forward.1} parent=1 // pred_check
      _
    $region179: #{gru_forward.1} parent=1 // pred_check_branch
      %396 = sbr.rel (0) target = $region181
    $region180: #{gru_forward.1} parent=1 // pred_region
      %398 = dma.done [#allocation27], 16
    $region181: #{gru_forward.1} parent=1 // pred_fallthru
      _
    // Predicated region
    $region182: #{gru_forward.1} parent=1 // pred_check
      _
    $region183: #{gru_forward.1} parent=1 // pred_check_branch
      %400 = sbr.rel (0) target = $region185
    $region184: #{gru_forward.1} parent=1 // pred_region
      %402 = dma.done [#allocation27], 16
    $region185: #{gru_forward.1} parent=1 // pred_fallthru
      _
    // Predicated region
    $region186: #{gru_forward.1} parent=1 // pred_check
      _
    $region187: #{gru_forward.1} parent=1 // pred_check_branch
      %404 = sbr.rel (0) target = $region189
    $region188: #{gru_forward.1} parent=1 // pred_region
      %406 = dma.done [#allocation30], 16
    $region189: #{gru_forward.1} parent=1 // pred_fallthru
      _
    // Predicated region
    $region190: #{gru_forward.1} parent=1 // pred_check
      _
    $region191: #{gru_forward.1} parent=1 // pred_check_branch
      %408 = sbr.rel (0) target = $region193
    $region192: #{gru_forward.1} parent=1 // pred_region
      %410 = dma.done [#allocation30], 16
    $region193: #{gru_forward.1} parent=1 // pred_fallthru
      _
    // Predicated region
    $region194: #{gru_forward.1} parent=1 // pred_check
      _
    $region195: #{gru_forward.1} parent=1 // pred_check_branch
      %412 = sbr.rel (0) target = $region197
    $region196: #{gru_forward.1} parent=1 // pred_region
      %414 = dma.done [#allocation33], 1024
    $region197: #{gru_forward.1} parent=1 // pred_fallthru
      _
    %v415 = vld [vmem:[%s1] sm:$0xff]
    %v416 = vld [vmem:[%s1 + $0x8] sm:$0xff]
    %v417 = vld [vmem:[%s1 + $0x10] sm:$0xff]
    %v418 = vld [vmem:[%s1 + $0x18] sm:$0xff]
    %v419 = vld [vmem:[#allocation3] sm:$0x1]
    %421 = vset.pattern.permute.xlu0 2
    %422 = vperm.xlu0 %421, %v415
    %v423 = vpop.permute.xlu0 %422
    %426 = vset.pattern.permute.xlu0 2
    %427 = vperm.xlu0 %426, %v416
    %v428 = vpop.permute.xlu0 %427
    %431 = vset.pattern.permute.xlu0 2
    %432 = vperm.xlu0 %431, %v417
    %v433 = vpop.permute.xlu0 %432
    %436 = vset.pattern.permute.xlu0 2
    %437 = vperm.xlu0 %436, %v418
    %v438 = vpop.permute.xlu0 %437
    %v441 = vperm.slane %v419, 0
    %v443 = vmul.f32 %v423, %v441
    %v444 = vmul.f32 %v428, %v441
    %v445 = vmul.f32 %v433, %v441
    %v446 = vmul.f32 %v438, %v441
    %v447 = vld [vmem:[#allocation13] sm:$0x1]
    %v449 = vperm.slane %v447, 0
    %v451 = vadd.f32 %v443, %v449
    %v452 = vadd.f32 %v444, %v449
    %v453 = vadd.f32 %v445, %v449
    %v454 = vadd.f32 %v446, %v449
    %v455 = vld [vmem:[#allocation5] sm:$0x1]
    %v457 = vperm.slane %v455, 0
    %v459 = vmul.f32 %v423, %v457
    %v460 = vmul.f32 %v428, %v457
    %v461 = vmul.f32 %v433, %v457
    %v462 = vmul.f32 %v438, %v457
    %v463 = vld [vmem:[#allocation14] sm:$0x1]
    %v465 = vperm.slane %v463, 0
    %v467 = vadd.f32 %v459, %v465
    %v468 = vadd.f32 %v460, %v465
    %v469 = vadd.f32 %v461, %v465
    %v470 = vadd.f32 %v462, %v465
    %v471 = vld [vmem:[#allocation7] sm:$0x1]
    %v473 = vperm.slane %v471, 0
    %v475 = vmul.f32 %v423, %v473
    %v476 = vmul.f32 %v428, %v473
    %v477 = vmul.f32 %v433, %v473
    %v478 = vmul.f32 %v438, %v473
    %v479 = vld [vmem:[#allocation16] sm:$0x1]
    %v481 = vperm.slane %v479, 0
    %v483 = vadd.f32 %v475, %v481
    %v484 = vadd.f32 %v476, %v481
    %v485 = vadd.f32 %v477, %v481
    %v486 = vadd.f32 %v478, %v481
    %v487 = vld [vmem:[#allocation8] sm:$0xff]
    %v488 = vld [vmem:[#allocation8 + $0x8] sm:$0xff]
    %v489 = vld [vmem:[#allocation8 + $0x10] sm:$0xff]
    %v490 = vld [vmem:[#allocation8 + $0x18] sm:$0xff]
    %vm491 = vcmask 261120
    %v493 = vsel %vm491, 0.0, 0
    %495 = vmatpush.msra.mxu0 0.0
    %496 = vmatpush.msra.mxu0 0.0
    %497 = vmatpush.msra.mxu0 0.0
    %498 = vmatpush.msra.mxu0 0.0
    %499 = vmatpush.msra.mxu0 0.0
    %500 = vmatpush.msra.mxu0 0.0
    %501 = vmatpush.msra.mxu0 0.0
    %502 = vmatpush.msra.mxu0 0.0
    %503 = vmatpush.msra.mxu0 0.0
    %504 = vmatpush.msra.mxu0 0.0
    %505 = vmatpush.msra.mxu0 0.0
    %506 = vmatpush.msra.mxu0 0.0
    %507 = vmatpush.msra.mxu0 %v490
    %508 = vmatpush.msra.mxu0 %v489
    %509 = vmatpush.msra.mxu0 %v488
    %510 = vmatpush.msra.mxu0 %v487
    %511 = vmatmul.f32.gmra.mxu0 %v493
    %v512 = vpop.f32.mrf.mxu0
    %v513 = vadd.f32 0.0, %v512
    %514 = vdwg.mxu0
    %v516 = vrot.slane %v513, 1
    %v517 = vrot.slane %v513, 2
    %v518 = vrot.slane %v513, 3
    %v523 = vadd.f32 %v451, %v513
    %v524 = vadd.f32 %v452, %v516
    %v525 = vadd.f32 %v453, %v517
    %v526 = vadd.f32 %v454, %v518
    %v527 = vxor.u32 %v523, 2147483648
    %v528 = vxor.u32 %v524, 2147483648
    %v529 = vxor.u32 %v525, 2147483648
    %v530 = vxor.u32 %v526, 2147483648
    %v531 = vmul.f32 %v527, 1.442695
    %v532 = vpow.pop %v531
    %v533 = vmul.f32 %v528, 1.442695
    %v534 = vpow.pop %v533
    %v535 = vmul.f32 %v529, 1.442695
    %v536 = vpow.pop %v535
    %v537 = vmul.f32 %v530, 1.442695
    %v538 = vpow.pop %v537
    %v539 = vadd.f32 %v532, 1.0
    %v540 = vadd.f32 %v534, 1.0
    %v541 = vadd.f32 %v536, 1.0
    %v542 = vadd.f32 %v538, 1.0
    %v543 = vrcp.pop %v539
    %v544 = vmul.f32 %v539, %v543
    %v545 = vsub.f32 1.0, %v544
    %v546 = vmul.f32 %v543, %v545
    %v547 = vadd.f32 %v543, %v546
    %vm548 = vweird.f32 %v539
    %vm549 = vweird.f32 %v543
    %vm550 = vmor %vm548, %vm549
    %v551 = vsel %vm550, %v543, %v547
    %v552 = vand.u32 2147483647, %v539
    %vm553 = vcmp.eq.f32.partialorder %v552, 8.507059e+37
    %v554 = vand.u32 %v539, 2147483648
    %v555 = vor.u32 1.1754944e-38, %v554
    %v556 = vsel %vm553, %v555, %v551
    %v557 = vmul.f32 1.0, %v556
    %v558 = vrcp.pop %v540
    %v559 = vmul.f32 %v540, %v558
    %v560 = vsub.f32 1.0, %v559
    %v561 = vmul.f32 %v558, %v560
    %v562 = vadd.f32 %v558, %v561
    %vm563 = vweird.f32 %v540
    %vm564 = vweird.f32 %v558
    %vm565 = vmor %vm563, %vm564
    %v566 = vsel %vm565, %v558, %v562
    %v567 = vand.u32 2147483647, %v540
    %vm568 = vcmp.eq.f32.partialorder %v567, 8.507059e+37
    %v569 = vand.u32 %v540, 2147483648
    %v570 = vor.u32 1.1754944e-38, %v569
    %v571 = vsel %vm568, %v570, %v566
    %v572 = vmul.f32 1.0, %v571
    %v573 = vrcp.pop %v541
    %v574 = vmul.f32 %v541, %v573
    %v575 = vsub.f32 1.0, %v574
    %v576 = vmul.f32 %v573, %v575
    %v577 = vadd.f32 %v573, %v576
    %vm578 = vweird.f32 %v541
    %vm579 = vweird.f32 %v573
    %vm580 = vmor %vm578, %vm579
    %v581 = vsel %vm580, %v573, %v577
    %v582 = vand.u32 2147483647, %v541
    %vm583 = vcmp.eq.f32.partialorder %v582, 8.507059e+37
    %v584 = vand.u32 %v541, 2147483648
    %v585 = vor.u32 1.1754944e-38, %v584
    %v586 = vsel %vm583, %v585, %v581
    %v587 = vmul.f32 1.0, %v586
    %v588 = vrcp.pop %v542
    %v589 = vmul.f32 %v542, %v588
    %v590 = vsub.f32 1.0, %v589
    %v591 = vmul.f32 %v588, %v590
    %v592 = vadd.f32 %v588, %v591
    %vm593 = vweird.f32 %v542
    %vm594 = vweird.f32 %v588
    %vm595 = vmor %vm593, %vm594
    %v596 = vsel %vm595, %v588, %v592
    %v597 = vand.u32 2147483647, %v542
    %vm598 = vcmp.eq.f32.partialorder %v597, 8.507059e+37
    %v599 = vand.u32 %v542, 2147483648
    %v600 = vor.u32 1.1754944e-38, %v599
    %v601 = vsel %vm598, %v600, %v596
    %v602 = vmul.f32 1.0, %v601
    %v603 = vld [vmem:[#allocation10] sm:$0xff]
    %v604 = vld [vmem:[#allocation10 + $0x8] sm:$0xff]
    %v605 = vld [vmem:[#allocation10 + $0x10] sm:$0xff]
    %v606 = vld [vmem:[#allocation10 + $0x18] sm:$0xff]
    %607 = vmatpush.msra.mxu0 0.0
    %608 = vmatpush.msra.mxu0 0.0
    %609 = vmatpush.msra.mxu0 0.0
    %610 = vmatpush.msra.mxu0 0.0
    %611 = vmatpush.msra.mxu0 0.0
    %612 = vmatpush.msra.mxu0 0.0
    %613 = vmatpush.msra.mxu0 0.0
    %614 = vmatpush.msra.mxu0 0.0
    %615 = vmatpush.msra.mxu0 0.0
    %616 = vmatpush.msra.mxu0 0.0
    %617 = vmatpush.msra.mxu0 0.0
    %618 = vmatpush.msra.mxu0 0.0
    %619 = vmatpush.msra.mxu0 %v606
    %620 = vmatpush.msra.mxu0 %v605
    %621 = vmatpush.msra.mxu0 %v604
    %622 = vmatpush.msra.mxu0 %v603
    %623 = vmatmul.f32.gmra.mxu0 %v493
    %v624 = vpop.f32.mrf.mxu0
    %v625 = vadd.f32 0.0, %v624
    %626 = vdwg.mxu0
    %v628 = vrot.slane %v625, 1
    %v629 = vrot.slane %v625, 2
    %v630 = vrot.slane %v625, 3
    %v635 = vadd.f32 %v467, %v625
    %v636 = vadd.f32 %v468, %v628
    %v637 = vadd.f32 %v469, %v629
    %v638 = vadd.f32 %v470, %v630
    %v639 = vxor.u32 %v635, 2147483648
    %v640 = vxor.u32 %v636, 2147483648
    %v641 = vxor.u32 %v637, 2147483648
    %v642 = vxor.u32 %v638, 2147483648
    %v643 = vmul.f32 %v639, 1.442695
    %v644 = vpow.pop %v643
    %v645 = vmul.f32 %v640, 1.442695
    %v646 = vpow.pop %v645
    %v647 = vmul.f32 %v641, 1.442695
    %v648 = vpow.pop %v647
    %v649 = vmul.f32 %v642, 1.442695
    %v650 = vpow.pop %v649
    %v651 = vadd.f32 %v644, 1.0
    %v652 = vadd.f32 %v646, 1.0
    %v653 = vadd.f32 %v648, 1.0
    %v654 = vadd.f32 %v650, 1.0
    %v655 = vrcp.pop %v651
    %v656 = vmul.f32 %v651, %v655
    %v657 = vsub.f32 1.0, %v656
    %v658 = vmul.f32 %v655, %v657
    %v659 = vadd.f32 %v655, %v658
    %vm660 = vweird.f32 %v651
    %vm661 = vweird.f32 %v655
    %vm662 = vmor %vm660, %vm661
    %v663 = vsel %vm662, %v655, %v659
    %v664 = vand.u32 2147483647, %v651
    %vm665 = vcmp.eq.f32.partialorder %v664, 8.507059e+37
    %v666 = vand.u32 %v651, 2147483648
    %v667 = vor.u32 1.1754944e-38, %v666
    %v668 = vsel %vm665, %v667, %v663
    %v669 = vmul.f32 1.0, %v668
    %v670 = vrcp.pop %v652
    %v671 = vmul.f32 %v652, %v670
    %v672 = vsub.f32 1.0, %v671
    %v673 = vmul.f32 %v670, %v672
    %v674 = vadd.f32 %v670, %v673
    %vm675 = vweird.f32 %v652
    %vm676 = vweird.f32 %v670
    %vm677 = vmor %vm675, %vm676
    %v678 = vsel %vm677, %v670, %v674
    %v679 = vand.u32 2147483647, %v652
    %vm680 = vcmp.eq.f32.partialorder %v679, 8.507059e+37
    %v681 = vand.u32 %v652, 2147483648
    %v682 = vor.u32 1.1754944e-38, %v681
    %v683 = vsel %vm680, %v682, %v678
    %v684 = vmul.f32 1.0, %v683
    %v685 = vrcp.pop %v653
    %v686 = vmul.f32 %v653, %v685
    %v687 = vsub.f32 1.0, %v686
    %v688 = vmul.f32 %v685, %v687
    %v689 = vadd.f32 %v685, %v688
    %vm690 = vweird.f32 %v653
    %vm691 = vweird.f32 %v685
    %vm692 = vmor %vm690, %vm691
    %v693 = vsel %vm692, %v685, %v689
    %v694 = vand.u32 2147483647, %v653
    %vm695 = vcmp.eq.f32.partialorder %v694, 8.507059e+37
    %v696 = vand.u32 %v653, 2147483648
    %v697 = vor.u32 1.1754944e-38, %v696
    %v698 = vsel %vm695, %v697, %v693
    %v699 = vmul.f32 1.0, %v698
    %v700 = vrcp.pop %v654
    %v701 = vmul.f32 %v654, %v700
    %v702 = vsub.f32 1.0, %v701
    %v703 = vmul.f32 %v700, %v702
    %v704 = vadd.f32 %v700, %v703
    %vm705 = vweird.f32 %v654
    %vm706 = vweird.f32 %v700
    %vm707 = vmor %vm705, %vm706
    %v708 = vsel %vm707, %v700, %v704
    %v709 = vand.u32 2147483647, %v654
    %vm710 = vcmp.eq.f32.partialorder %v709, 8.507059e+37
    %v711 = vand.u32 %v654, 2147483648
    %v712 = vor.u32 1.1754944e-38, %v711
    %v713 = vsel %vm710, %v712, %v708
    %v714 = vmul.f32 1.0, %v713
    %v715 = vmul.f32 %v557, 0.0
    %v716 = vmul.f32 %v572, 0.0
    %v717 = vmul.f32 %v587, 0.0
    %v718 = vmul.f32 %v602, 0.0
    %v719 = vld [vmem:[#allocation11] sm:$0xff]
    %v720 = vld [vmem:[#allocation11 + $0x8] sm:$0xff]
    %v721 = vld [vmem:[#allocation11 + $0x10] sm:$0xff]
    %v722 = vld [vmem:[#allocation11 + $0x18] sm:$0xff]
    %v727 = vrot.slane %v716, 7
    %vm728 = vcmask 1041409
    %v729 = vsel %vm728, %v727, %v715
    %v730 = vrot.slane %v717, 6
    %vm731 = vcmask 1042434
    %v732 = vsel %vm731, %v730, %v729
    %v733 = vrot.slane %v718, 5
    %vm734 = vcmask 1043459
    %v735 = vsel %vm734, %v733, %v732
    %v736 = vsel %vm491, %v735, 0
    %738 = vmatpush.msra.mxu0 0.0
    %739 = vmatpush.msra.mxu0 0.0
    %740 = vmatpush.msra.mxu0 0.0
    %741 = vmatpush.msra.mxu0 0.0
    %742 = vmatpush.msra.mxu0 0.0
    %743 = vmatpush.msra.mxu0 0.0
    %744 = vmatpush.msra.mxu0 0.0
    %745 = vmatpush.msra.mxu0 0.0
    %746 = vmatpush.msra.mxu0 0.0
    %747 = vmatpush.msra.mxu0 0.0
    %748 = vmatpush.msra.mxu0 0.0
    %749 = vmatpush.msra.mxu0 0.0
    %750 = vmatpush.msra.mxu0 %v722
    %751 = vmatpush.msra.mxu0 %v721
    %752 = vmatpush.msra.mxu0 %v720
    %753 = vmatpush.msra.mxu0 %v719
    %754 = vmatmul.f32.gmra.mxu0 %v736
    %v755 = vpop.f32.mrf.mxu0
    %v756 = vadd.f32 0.0, %v755
    %757 = vdwg.mxu0
    %v759 = vrot.slane %v756, 1
    %v760 = vrot.slane %v756, 2
    %v761 = vrot.slane %v756, 3
    %v766 = vadd.f32 %v483, %v756
    %v767 = vadd.f32 %v484, %v759
    %v768 = vadd.f32 %v485, %v760
    %v769 = vadd.f32 %v486, %v761
    %v770 = vtanh.pop %v766
    %v771 = vtanh.pop %v767
    %v772 = vtanh.pop %v768
    %v773 = vtanh.pop %v769
    %v774 = vmul.f32 %v669, 0.0
    %v775 = vmul.f32 %v684, 0.0
    %v776 = vmul.f32 %v699, 0.0
    %v777 = vmul.f32 %v714, 0.0
    %v778 = vsub.f32 1.0, %v669
    %v779 = vsub.f32 1.0, %v684
    %v780 = vsub.f32 1.0, %v699
    %v781 = vsub.f32 1.0, %v714
    %v782 = vmul.f32 %v778, %v770
    %v783 = vmul.f32 %v779, %v771
    %v784 = vmul.f32 %v780, %v772
    %v785 = vmul.f32 %v781, %v773
    %v786 = vadd.f32 %v774, %v782
    %v787 = vadd.f32 %v775, %v783
    %v788 = vadd.f32 %v776, %v784
    %v789 = vadd.f32 %v777, %v785
    %v794 = vrot.slane %v787, 7
    %v795 = vsel %vm728, %v794, %v786
    %v796 = vrot.slane %v788, 6
    %v797 = vsel %vm731, %v796, %v795
    %v798 = vrot.slane %v789, 5
    %v799 = vsel %vm734, %v798, %v797
    %v800 = vsel %vm491, %v799, 0
    %802 = vmatpush.msra.mxu0 0.0
    %803 = vmatpush.msra.mxu0 0.0
    %804 = vmatpush.msra.mxu0 0.0
    %805 = vmatpush.msra.mxu0 0.0
    %806 = vmatpush.msra.mxu0 0.0
    %807 = vmatpush.msra.mxu0 0.0
    %808 = vmatpush.msra.mxu0 0.0
    %809 = vmatpush.msra.mxu0 0.0
    %810 = vmatpush.msra.mxu0 0.0
    %811 = vmatpush.msra.mxu0 0.0
    %812 = vmatpush.msra.mxu0 0.0
    %813 = vmatpush.msra.mxu0 0.0
    %814 = vmatpush.msra.mxu0 %v490
    %815 = vmatpush.msra.mxu0 %v489
    %816 = vmatpush.msra.mxu0 %v488
    %817 = vmatpush.msra.mxu0 %v487
    %818 = vmatmul.f32.gmra.mxu0 %v800
    %v819 = vpop.f32.mrf.mxu0
    %v820 = vadd.f32 0.0, %v819
    %821 = vdwg.mxu0
    %v823 = vrot.slane %v820, 7
    %v824 = vrot.slane %v820, 1
    %v825 = vrot.slane %v820, 2
    %v830 = vadd.f32 %v451, %v823
    %v831 = vadd.f32 %v452, %v820
    %v832 = vadd.f32 %v453, %v824
    %v833 = vadd.f32 %v454, %v825
    %v834 = vxor.u32 %v830, 2147483648
    %v835 = vxor.u32 %v831, 2147483648
    %v836 = vxor.u32 %v832, 2147483648
    %v837 = vxor.u32 %v833, 2147483648
    %v838 = vmul.f32 %v834, 1.442695
    %v839 = vpow.pop %v838
    %v840 = vmul.f32 %v835, 1.442695
    %v841 = vpow.pop %v840
    %v842 = vmul.f32 %v836, 1.442695
    %v843 = vpow.pop %v842
    %v844 = vmul.f32 %v837, 1.442695
    %v845 = vpow.pop %v844
    %v846 = vadd.f32 %v839, 1.0
    %v847 = vadd.f32 %v841, 1.0
    %v848 = vadd.f32 %v843, 1.0
    %v849 = vadd.f32 %v845, 1.0
    %v850 = vrcp.pop %v846
    %v851 = vmul.f32 %v846, %v850
    %v852 = vsub.f32 1.0, %v851
    %v853 = vmul.f32 %v850, %v852
    %v854 = vadd.f32 %v850, %v853
    %vm855 = vweird.f32 %v846
    %vm856 = vweird.f32 %v850
    %vm857 = vmor %vm855, %vm856
    %v858 = vsel %vm857, %v850, %v854
    %v859 = vand.u32 2147483647, %v846
    %vm860 = vcmp.eq.f32.partialorder %v859, 8.507059e+37
    %v861 = vand.u32 %v846, 2147483648
    %v862 = vor.u32 1.1754944e-38, %v861
    %v863 = vsel %vm860, %v862, %v858
    %v864 = vmul.f32 1.0, %v863
    %v865 = vrcp.pop %v847
    %v866 = vmul.f32 %v847, %v865
    %v867 = vsub.f32 1.0, %v866
    %v868 = vmul.f32 %v865, %v867
    %v869 = vadd.f32 %v865, %v868
    %vm870 = vweird.f32 %v847
    %vm871 = vweird.f32 %v865
    %vm872 = vmor %vm870, %vm871
    %v873 = vsel %vm872, %v865, %v869
    %v874 = vand.u32 2147483647, %v847
    %vm875 = vcmp.eq.f32.partialorder %v874, 8.507059e+37
    %v876 = vand.u32 %v847, 2147483648
    %v877 = vor.u32 1.1754944e-38, %v876
    %v878 = vsel %vm875, %v877, %v873
    %v879 = vmul.f32 1.0, %v878
    %v880 = vrcp.pop %v848
    %v881 = vmul.f32 %v848, %v880
    %v882 = vsub.f32 1.0, %v881
    %v883 = vmul.f32 %v880, %v882
    %v884 = vadd.f32 %v880, %v883
    %vm885 = vweird.f32 %v848
    %vm886 = vweird.f32 %v880
    %vm887 = vmor %vm885, %vm886
    %v888 = vsel %vm887, %v880, %v884
    %v889 = vand.u32 2147483647, %v848
    %vm890 = vcmp.eq.f32.partialorder %v889, 8.507059e+37
    %v891 = vand.u32 %v848, 2147483648
    %v892 = vor.u32 1.1754944e-38, %v891
    %v893 = vsel %vm890, %v892, %v888
    %v894 = vmul.f32 1.0, %v893
    %v895 = vrcp.pop %v849
    %v896 = vmul.f32 %v849, %v895
    %v897 = vsub.f32 1.0, %v896
    %v898 = vmul.f32 %v895, %v897
    %v899 = vadd.f32 %v895, %v898
    %vm900 = vweird.f32 %v849
    %vm901 = vweird.f32 %v895
    %vm902 = vmor %vm900, %vm901
    %v903 = vsel %vm902, %v895, %v899
    %v904 = vand.u32 2147483647, %v849
    %vm905 = vcmp.eq.f32.partialorder %v904, 8.507059e+37
    %v906 = vand.u32 %v849, 2147483648
    %v907 = vor.u32 1.1754944e-38, %v906
    %v908 = vsel %vm905, %v907, %v903
    %v909 = vmul.f32 1.0, %v908
    %910 = vmatpush.msra.mxu0 0.0
    %911 = vmatpush.msra.mxu0 0.0
    %912 = vmatpush.msra.mxu0 0.0
    %913 = vmatpush.msra.mxu0 0.0
    %914 = vmatpush.msra.mxu0 0.0
    %915 = vmatpush.msra.mxu0 0.0
    %916 = vmatpush.msra.mxu0 0.0
    %917 = vmatpush.msra.mxu0 0.0
    %918 = vmatpush.msra.mxu0 0.0
    %919 = vmatpush.msra.mxu0 0.0
    %920 = vmatpush.msra.mxu0 0.0
    %921 = vmatpush.msra.mxu0 0.0
    %922 = vmatpush.msra.mxu0 %v606
    %923 = vmatpush.msra.mxu0 %v605
    %924 = vmatpush.msra.mxu0 %v604
    %925 = vmatpush.msra.mxu0 %v603
    %926 = vmatmul.f32.gmra.mxu0 %v800
    %v927 = vpop.f32.mrf.mxu0
    %v928 = vadd.f32 0.0, %v927
    %929 = vdwg.mxu0
    %v931 = vrot.slane %v928, 7
    %v932 = vrot.slane %v928, 1
    %v933 = vrot.slane %v928, 2
    %v938 = vadd.f32 %v467, %v931
    %v939 = vadd.f32 %v468, %v928
    %v940 = vadd.f32 %v469, %v932
    %v941 = vadd.f32 %v470, %v933
    %v942 = vxor.u32 %v938, 2147483648
    %v943 = vxor.u32 %v939, 2147483648
    %v944 = vxor.u32 %v940, 2147483648
    %v945 = vxor.u32 %v941, 2147483648
    %v946 = vmul.f32 %v942, 1.442695
    %v947 = vpow.pop %v946
    %v948 = vmul.f32 %v943, 1.442695
    %v949 = vpow.pop %v948
    %v950 = vmul.f32 %v944, 1.442695
    %v951 = vpow.pop %v950
    %v952 = vmul.f32 %v945, 1.442695
    %v953 = vpow.pop %v952
    %v954 = vadd.f32 %v947, 1.0
    %v955 = vadd.f32 %v949, 1.0
    %v956 = vadd.f32 %v951, 1.0
    %v957 = vadd.f32 %v953, 1.0
    %v958 = vrcp.pop %v954
    %v959 = vmul.f32 %v954, %v958
    %v960 = vsub.f32 1.0, %v959
    %v961 = vmul.f32 %v958, %v960
    %v962 = vadd.f32 %v958, %v961
    %vm963 = vweird.f32 %v954
    %vm964 = vweird.f32 %v958
    %vm965 = vmor %vm963, %vm964
    %v966 = vsel %vm965, %v958, %v962
    %v967 = vand.u32 2147483647, %v954
    %vm968 = vcmp.eq.f32.partialorder %v967, 8.507059e+37
    %v969 = vand.u32 %v954, 2147483648
    %v970 = vor.u32 1.1754944e-38, %v969
    %v971 = vsel %vm968, %v970, %v966
    %v972 = vmul.f32 1.0, %v971
    %v973 = vrcp.pop %v955
    %v974 = vmul.f32 %v955, %v973
    %v975 = vsub.f32 1.0, %v974
    %v976 = vmul.f32 %v973, %v975
    %v977 = vadd.f32 %v973, %v976
    %vm978 = vweird.f32 %v955
    %vm979 = vweird.f32 %v973
    %vm980 = vmor %vm978, %vm979
    %v981 = vsel %vm980, %v973, %v977
    %v982 = vand.u32 2147483647, %v955
    %vm983 = vcmp.eq.f32.partialorder %v982, 8.507059e+37
    %v984 = vand.u32 %v955, 2147483648
    %v985 = vor.u32 1.1754944e-38, %v984
    %v986 = vsel %vm983, %v985, %v981
    %v987 = vmul.f32 1.0, %v986
    %v988 = vrcp.pop %v956
    %v989 = vmul.f32 %v956, %v988
    %v990 = vsub.f32 1.0, %v989
    %v991 = vmul.f32 %v988, %v990
    %v992 = vadd.f32 %v988, %v991
    %vm993 = vweird.f32 %v956
    %vm994 = vweird.f32 %v988
    %vm995 = vmor %vm993, %vm994
    %v996 = vsel %vm995, %v988, %v992
    %v997 = vand.u32 2147483647, %v956
    %vm998 = vcmp.eq.f32.partialorder %v997, 8.507059e+37
    %v999 = vand.u32 %v956, 2147483648
    %v1000 = vor.u32 1.1754944e-38, %v999
    %v1001 = vsel %vm998, %v1000, %v996
    %v1002 = vmul.f32 1.0, %v1001
    %v1003 = vrcp.pop %v957
    %v1004 = vmul.f32 %v957, %v1003
    %v1005 = vsub.f32 1.0, %v1004
    %v1006 = vmul.f32 %v1003, %v1005
    %v1007 = vadd.f32 %v1003, %v1006
    %vm1008 = vweird.f32 %v957
    %vm1009 = vweird.f32 %v1003
    %vm1010 = vmor %vm1008, %vm1009
    %v1011 = vsel %vm1010, %v1003, %v1007
    %v1012 = vand.u32 2147483647, %v957
    %vm1013 = vcmp.eq.f32.partialorder %v1012, 8.507059e+37
    %v1014 = vand.u32 %v957, 2147483648
    %v1015 = vor.u32 1.1754944e-38, %v1014
    %v1016 = vsel %vm1013, %v1015, %v1011
    %v1017 = vmul.f32 1.0, %v1016
    %v1018 = vrot.slane %v786, 7
    %v1019 = vrot.slane %v788, 7
    %v1020 = vrot.slane %v789, 7
    %v1025 = vmul.f32 %v864, %v1018
    %v1026 = vmul.f32 %v879, %v794
    %v1027 = vmul.f32 %v894, %v1019
    %v1028 = vmul.f32 %v909, %v1020
    %v1033 = vrot.slane %v1025, 1
    %v1034 = vsel %vm728, %v1026, %v1033
    %v1035 = vrot.slane %v1027, 7
    %v1036 = vsel %vm731, %v1035, %v1034
    %v1037 = vrot.slane %v1028, 6
    %v1038 = vsel %vm734, %v1037, %v1036
    %v1039 = vsel %vm491, %v1038, 0
    %1041 = vmatpush.msra.mxu0 0.0
    %1042 = vmatpush.msra.mxu0 0.0
    %1043 = vmatpush.msra.mxu0 0.0
    %1044 = vmatpush.msra.mxu0 0.0
    %1045 = vmatpush.msra.mxu0 0.0
    %1046 = vmatpush.msra.mxu0 0.0
    %1047 = vmatpush.msra.mxu0 0.0
    %1048 = vmatpush.msra.mxu0 0.0
    %1049 = vmatpush.msra.mxu0 0.0
    %1050 = vmatpush.msra.mxu0 0.0
    %1051 = vmatpush.msra.mxu0 0.0
    %1052 = vmatpush.msra.mxu0 0.0
    %1053 = vmatpush.msra.mxu0 %v722
    %1054 = vmatpush.msra.mxu0 %v721
    %1055 = vmatpush.msra.mxu0 %v720
    %1056 = vmatpush.msra.mxu0 %v719
    %1057 = vmatmul.f32.gmra.mxu0 %v1039
    %v1058 = vpop.f32.mrf.mxu0
    %v1059 = vadd.f32 0.0, %v1058
    %1060 = vdwg.mxu0
    %v1062 = vrot.slane %v1059, 7
    %v1063 = vrot.slane %v1059, 1
    %v1064 = vrot.slane %v1059, 2
    %v1069 = vadd.f32 %v483, %v1062
    %v1070 = vadd.f32 %v484, %v1059
    %v1071 = vadd.f32 %v485, %v1063
    %v1072 = vadd.f32 %v486, %v1064
    %v1073 = vtanh.pop %v1069
    %v1074 = vtanh.pop %v1070
    %v1075 = vtanh.pop %v1071
    %v1076 = vtanh.pop %v1072
    %v1077 = vmul.f32 %v972, %v1018
    %v1078 = vmul.f32 %v987, %v794
    %v1079 = vmul.f32 %v1002, %v1019
    %v1080 = vmul.f32 %v1017, %v1020
    %v1081 = vsub.f32 1.0, %v972
    %v1082 = vsub.f32 1.0, %v987
    %v1083 = vsub.f32 1.0, %v1002
    %v1084 = vsub.f32 1.0, %v1017
    %v1085 = vmul.f32 %v1081, %v1073
    %v1086 = vmul.f32 %v1082, %v1074
    %v1087 = vmul.f32 %v1083, %v1075
    %v1088 = vmul.f32 %v1084, %v1076
    %v1089 = vadd.f32 %v1077, %v1085
    %v1090 = vadd.f32 %v1078, %v1086
    %v1091 = vadd.f32 %v1079, %v1087
    %v1092 = vadd.f32 %v1080, %v1088
    %v1097 = vrot.slane %v1089, 1
    %v1098 = vsel %vm728, %v1090, %v1097
    %v1099 = vrot.slane %v1091, 7
    %v1100 = vsel %vm731, %v1099, %v1098
    %v1101 = vrot.slane %v1092, 6
    %v1102 = vsel %vm734, %v1101, %v1100
    %v1103 = vsel %vm491, %v1102, 0
    %1105 = vmatpush.msra.mxu0 0.0
    %1106 = vmatpush.msra.mxu0 0.0
    %1107 = vmatpush.msra.mxu0 0.0
    %1108 = vmatpush.msra.mxu0 0.0
    %1109 = vmatpush.msra.mxu0 0.0
    %1110 = vmatpush.msra.mxu0 0.0
    %1111 = vmatpush.msra.mxu0 0.0
    %1112 = vmatpush.msra.mxu0 0.0
    %1113 = vmatpush.msra.mxu0 0.0
    %1114 = vmatpush.msra.mxu0 0.0
    %1115 = vmatpush.msra.mxu0 0.0
    %1116 = vmatpush.msra.mxu0 0.0
    %1117 = vmatpush.msra.mxu0 %v490
    %1118 = vmatpush.msra.mxu0 %v489
    %1119 = vmatpush.msra.mxu0 %v488
    %1120 = vmatpush.msra.mxu0 %v487
    %1121 = vmatmul.f32.gmra.mxu0 %v1103
    %v1122 = vpop.f32.mrf.mxu0
    %v1123 = vadd.f32 0.0, %v1122
    %1124 = vdwg.mxu0
    %v1126 = vrot.slane %v1123, 6
    %v1127 = vrot.slane %v1123, 7
    %v1128 = vrot.slane %v1123, 1
    %v1133 = vadd.f32 %v451, %v1126
    %v1134 = vadd.f32 %v452, %v1127
    %v1135 = vadd.f32 %v453, %v1123
    %v1136 = vadd.f32 %v454, %v1128
    %v1137 = vxor.u32 %v1133, 2147483648
    %v1138 = vxor.u32 %v1134, 2147483648
    %v1139 = vxor.u32 %v1135, 2147483648
    %v1140 = vxor.u32 %v1136, 2147483648
    %v1141 = vmul.f32 %v1137, 1.442695
    %v1142 = vpow.pop %v1141
    %v1143 = vmul.f32 %v1138, 1.442695
    %v1144 = vpow.pop %v1143
    %v1145 = vmul.f32 %v1139, 1.442695
    %v1146 = vpow.pop %v1145
    %v1147 = vmul.f32 %v1140, 1.442695
    %v1148 = vpow.pop %v1147
    %v1149 = vadd.f32 %v1142, 1.0
    %v1150 = vadd.f32 %v1144, 1.0
    %v1151 = vadd.f32 %v1146, 1.0
    %v1152 = vadd.f32 %v1148, 1.0
    %v1153 = vrcp.pop %v1149
    %v1154 = vmul.f32 %v1149, %v1153
    %v1155 = vsub.f32 1.0, %v1154
    %v1156 = vmul.f32 %v1153, %v1155
    %v1157 = vadd.f32 %v1153, %v1156
    %vm1158 = vweird.f32 %v1149
    %vm1159 = vweird.f32 %v1153
    %vm1160 = vmor %vm1158, %vm1159
    %v1161 = vsel %vm1160, %v1153, %v1157
    %v1162 = vand.u32 2147483647, %v1149
    %vm1163 = vcmp.eq.f32.partialorder %v1162, 8.507059e+37
    %v1164 = vand.u32 %v1149, 2147483648
    %v1165 = vor.u32 1.1754944e-38, %v1164
    %v1166 = vsel %vm1163, %v1165, %v1161
    %v1167 = vmul.f32 1.0, %v1166
    %v1168 = vrcp.pop %v1150
    %v1169 = vmul.f32 %v1150, %v1168
    %v1170 = vsub.f32 1.0, %v1169
    %v1171 = vmul.f32 %v1168, %v1170
    %v1172 = vadd.f32 %v1168, %v1171
    %vm1173 = vweird.f32 %v1150
    %vm1174 = vweird.f32 %v1168
    %vm1175 = vmor %vm1173, %vm1174
    %v1176 = vsel %vm1175, %v1168, %v1172
    %v1177 = vand.u32 2147483647, %v1150
    %vm1178 = vcmp.eq.f32.partialorder %v1177, 8.507059e+37
    %v1179 = vand.u32 %v1150, 2147483648
    %v1180 = vor.u32 1.1754944e-38, %v1179
    %v1181 = vsel %vm1178, %v1180, %v1176
    %v1182 = vmul.f32 1.0, %v1181
    %v1183 = vrcp.pop %v1151
    %v1184 = vmul.f32 %v1151, %v1183
    %v1185 = vsub.f32 1.0, %v1184
    %v1186 = vmul.f32 %v1183, %v1185
    %v1187 = vadd.f32 %v1183, %v1186
    %vm1188 = vweird.f32 %v1151
    %vm1189 = vweird.f32 %v1183
    %vm1190 = vmor %vm1188, %vm1189
    %v1191 = vsel %vm1190, %v1183, %v1187
    %v1192 = vand.u32 2147483647, %v1151
    %vm1193 = vcmp.eq.f32.partialorder %v1192, 8.507059e+37
    %v1194 = vand.u32 %v1151, 2147483648
    %v1195 = vor.u32 1.1754944e-38, %v1194
    %v1196 = vsel %vm1193, %v1195, %v1191
    %v1197 = vmul.f32 1.0, %v1196
    %v1198 = vrcp.pop %v1152
    %v1199 = vmul.f32 %v1152, %v1198
    %v1200 = vsub.f32 1.0, %v1199
    %v1201 = vmul.f32 %v1198, %v1200
    %v1202 = vadd.f32 %v1198, %v1201
    %vm1203 = vweird.f32 %v1152
    %vm1204 = vweird.f32 %v1198
    %vm1205 = vmor %vm1203, %vm1204
    %v1206 = vsel %vm1205, %v1198, %v1202
    %v1207 = vand.u32 2147483647, %v1152
    %vm1208 = vcmp.eq.f32.partialorder %v1207, 8.507059e+37
    %v1209 = vand.u32 %v1152, 2147483648
    %v1210 = vor.u32 1.1754944e-38, %v1209
    %v1211 = vsel %vm1208, %v1210, %v1206
    %v1212 = vmul.f32 1.0, %v1211
    %1213 = vmatpush.msra.mxu0 0.0
    %1214 = vmatpush.msra.mxu0 0.0
    %1215 = vmatpush.msra.mxu0 0.0
    %1216 = vmatpush.msra.mxu0 0.0
    %1217 = vmatpush.msra.mxu0 0.0
    %1218 = vmatpush.msra.mxu0 0.0
    %1219 = vmatpush.msra.mxu0 0.0
    %1220 = vmatpush.msra.mxu0 0.0
    %1221 = vmatpush.msra.mxu0 0.0
    %1222 = vmatpush.msra.mxu0 0.0
    %1223 = vmatpush.msra.mxu0 0.0
    %1224 = vmatpush.msra.mxu0 0.0
    %1225 = vmatpush.msra.mxu0 %v606
    %1226 = vmatpush.msra.mxu0 %v605
    %1227 = vmatpush.msra.mxu0 %v604
    %1228 = vmatpush.msra.mxu0 %v603
    %1229 = vmatmul.f32.gmra.mxu0 %v1103
    %v1230 = vpop.f32.mrf.mxu0
    %v1231 = vadd.f32 0.0, %v1230
    %1232 = vdwg.mxu0
    %v1234 = vrot.slane %v1231, 6
    %v1235 = vrot.slane %v1231, 7
    %v1236 = vrot.slane %v1231, 1
    %v1241 = vadd.f32 %v467, %v1234
    %v1242 = vadd.f32 %v468, %v1235
    %v1243 = vadd.f32 %v469, %v1231
    %v1244 = vadd.f32 %v470, %v1236
    %v1245 = vxor.u32 %v1241, 2147483648
    %v1246 = vxor.u32 %v1242, 2147483648
    %v1247 = vxor.u32 %v1243, 2147483648
    %v1248 = vxor.u32 %v1244, 2147483648
    %v1249 = vmul.f32 %v1245, 1.442695
    %v1250 = vpow.pop %v1249
    %v1251 = vmul.f32 %v1246, 1.442695
    %v1252 = vpow.pop %v1251
    %v1253 = vmul.f32 %v1247, 1.442695
    %v1254 = vpow.pop %v1253
    %v1255 = vmul.f32 %v1248, 1.442695
    %v1256 = vpow.pop %v1255
    %v1257 = vadd.f32 %v1250, 1.0
    %v1258 = vadd.f32 %v1252, 1.0
    %v1259 = vadd.f32 %v1254, 1.0
    %v1260 = vadd.f32 %v1256, 1.0
    %v1261 = vrcp.pop %v1257
    %v1262 = vmul.f32 %v1257, %v1261
    %v1263 = vsub.f32 1.0, %v1262
    %v1264 = vmul.f32 %v1261, %v1263
    %v1265 = vadd.f32 %v1261, %v1264
    %vm1266 = vweird.f32 %v1257
    %vm1267 = vweird.f32 %v1261
    %vm1268 = vmor %vm1266, %vm1267
    %v1269 = vsel %vm1268, %v1261, %v1265
    %v1270 = vand.u32 2147483647, %v1257
    %vm1271 = vcmp.eq.f32.partialorder %v1270, 8.507059e+37
    %v1272 = vand.u32 %v1257, 2147483648
    %v1273 = vor.u32 1.1754944e-38, %v1272
    %v1274 = vsel %vm1271, %v1273, %v1269
    %v1275 = vmul.f32 1.0, %v1274
    %v1276 = vrcp.pop %v1258
    %v1277 = vmul.f32 %v1258, %v1276
    %v1278 = vsub.f32 1.0, %v1277
    %v1279 = vmul.f32 %v1276, %v1278
    %v1280 = vadd.f32 %v1276, %v1279
    %vm1281 = vweird.f32 %v1258
    %vm1282 = vweird.f32 %v1276
    %vm1283 = vmor %vm1281, %vm1282
    %v1284 = vsel %vm1283, %v1276, %v1280
    %v1285 = vand.u32 2147483647, %v1258
    %vm1286 = vcmp.eq.f32.partialorder %v1285, 8.507059e+37
    %v1287 = vand.u32 %v1258, 2147483648
    %v1288 = vor.u32 1.1754944e-38, %v1287
    %v1289 = vsel %vm1286, %v1288, %v1284
    %v1290 = vmul.f32 1.0, %v1289
    %v1291 = vrcp.pop %v1259
    %v1292 = vmul.f32 %v1259, %v1291
    %v1293 = vsub.f32 1.0, %v1292
    %v1294 = vmul.f32 %v1291, %v1293
    %v1295 = vadd.f32 %v1291, %v1294
    %vm1296 = vweird.f32 %v1259
    %vm1297 = vweird.f32 %v1291
    %vm1298 = vmor %vm1296, %vm1297
    %v1299 = vsel %vm1298, %v1291, %v1295
    %v1300 = vand.u32 2147483647, %v1259
    %vm1301 = vcmp.eq.f32.partialorder %v1300, 8.507059e+37
    %v1302 = vand.u32 %v1259, 2147483648
    %v1303 = vor.u32 1.1754944e-38, %v1302
    %v1304 = vsel %vm1301, %v1303, %v1299
    %v1305 = vmul.f32 1.0, %v1304
    %v1306 = vrcp.pop %v1260
    %v1307 = vmul.f32 %v1260, %v1306
    %v1308 = vsub.f32 1.0, %v1307
    %v1309 = vmul.f32 %v1306, %v1308
    %v1310 = vadd.f32 %v1306, %v1309
    %vm1311 = vweird.f32 %v1260
    %vm1312 = vweird.f32 %v1306
    %vm1313 = vmor %vm1311, %vm1312
    %v1314 = vsel %vm1313, %v1306, %v1310
    %v1315 = vand.u32 2147483647, %v1260
    %vm1316 = vcmp.eq.f32.partialorder %v1315, 8.507059e+37
    %v1317 = vand.u32 %v1260, 2147483648
    %v1318 = vor.u32 1.1754944e-38, %v1317
    %v1319 = vsel %vm1316, %v1318, %v1314
    %v1320 = vmul.f32 1.0, %v1319
    %v1321 = vrot.slane %v1089, 7
    %v1322 = vrot.slane %v1090, 7
    %v1323 = vrot.slane %v1092, 7
    %v1328 = vmul.f32 %v1167, %v1321
    %v1329 = vmul.f32 %v1182, %v1322
    %v1330 = vmul.f32 %v1197, %v1099
    %v1331 = vmul.f32 %v1212, %v1323
    %v1336 = vrot.slane %v1328, 2
    %v1337 = vrot.slane %v1329, 1
    %v1338 = vsel %vm728, %v1337, %v1336
    %v1339 = vsel %vm731, %v1330, %v1338
    %v1340 = vrot.slane %v1331, 7
    %v1341 = vsel %vm734, %v1340, %v1339
    %v1342 = vsel %vm491, %v1341, 0
    %1344 = vmatpush.msra.mxu0 0.0
    %1345 = vmatpush.msra.mxu0 0.0
    %1346 = vmatpush.msra.mxu0 0.0
    %1347 = vmatpush.msra.mxu0 0.0
    %1348 = vmatpush.msra.mxu0 0.0
    %1349 = vmatpush.msra.mxu0 0.0
    %1350 = vmatpush.msra.mxu0 0.0
    %1351 = vmatpush.msra.mxu0 0.0
    %1352 = vmatpush.msra.mxu0 0.0
    %1353 = vmatpush.msra.mxu0 0.0
    %1354 = vmatpush.msra.mxu0 0.0
    %1355 = vmatpush.msra.mxu0 0.0
    %1356 = vmatpush.msra.mxu0 %v722
    %1357 = vmatpush.msra.mxu0 %v721
    %1358 = vmatpush.msra.mxu0 %v720
    %1359 = vmatpush.msra.mxu0 %v719
    %1360 = vmatmul.f32.gmra.mxu0 %v1342
    %v1361 = vpop.f32.mrf.mxu0
    %v1362 = vadd.f32 0.0, %v1361
    %1363 = vdwg.mxu0
    %v1365 = vrot.slane %v1362, 6
    %v1366 = vrot.slane %v1362, 7
    %v1367 = vrot.slane %v1362, 1
    %v1372 = vadd.f32 %v483, %v1365
    %v1373 = vadd.f32 %v484, %v1366
    %v1374 = vadd.f32 %v485, %v1362
    %v1375 = vadd.f32 %v486, %v1367
    %v1376 = vtanh.pop %v1372
    %v1377 = vtanh.pop %v1373
    %v1378 = vtanh.pop %v1374
    %v1379 = vtanh.pop %v1375
    %v1380 = vmul.f32 %v1275, %v1321
    %v1381 = vmul.f32 %v1290, %v1322
    %v1382 = vmul.f32 %v1305, %v1099
    %v1383 = vmul.f32 %v1320, %v1323
    %v1384 = vsub.f32 1.0, %v1275
    %v1385 = vsub.f32 1.0, %v1290
    %v1386 = vsub.f32 1.0, %v1305
    %v1387 = vsub.f32 1.0, %v1320
    %v1388 = vmul.f32 %v1384, %v1376
    %v1389 = vmul.f32 %v1385, %v1377
    %v1390 = vmul.f32 %v1386, %v1378
    %v1391 = vmul.f32 %v1387, %v1379
    %v1392 = vadd.f32 %v1380, %v1388
    %v1393 = vadd.f32 %v1381, %v1389
    %v1394 = vadd.f32 %v1382, %v1390
    %v1395 = vadd.f32 %v1383, %v1391
    %v1400 = vrot.slane %v1392, 2
    %v1401 = vrot.slane %v1393, 1
    %v1402 = vsel %vm728, %v1401, %v1400
    %v1403 = vsel %vm731, %v1394, %v1402
    %v1404 = vrot.slane %v1395, 7
    %v1405 = vsel %vm734, %v1404, %v1403
    %v1406 = vsel %vm491, %v1405, 0
    %1408 = vmatpush.msra.mxu0 0.0
    %1409 = vmatpush.msra.mxu0 0.0
    %1410 = vmatpush.msra.mxu0 0.0
    %1411 = vmatpush.msra.mxu0 0.0
    %1412 = vmatpush.msra.mxu0 0.0
    %1413 = vmatpush.msra.mxu0 0.0
    %1414 = vmatpush.msra.mxu0 0.0
    %1415 = vmatpush.msra.mxu0 0.0
    %1416 = vmatpush.msra.mxu0 0.0
    %1417 = vmatpush.msra.mxu0 0.0
    %1418 = vmatpush.msra.mxu0 0.0
    %1419 = vmatpush.msra.mxu0 0.0
    %1420 = vmatpush.msra.mxu0 %v490
    %1421 = vmatpush.msra.mxu0 %v489
    %1422 = vmatpush.msra.mxu0 %v488
    %1423 = vmatpush.msra.mxu0 %v487
    %1424 = vmatmul.f32.gmra.mxu0 %v1406
    %v1425 = vpop.f32.mrf.mxu0
    %v1426 = vadd.f32 0.0, %v1425
    %1427 = vdwg.mxu0
    %v1429 = vrot.slane %v1426, 5
    %v1430 = vrot.slane %v1426, 6
    %v1431 = vrot.slane %v1426, 7
    %v1436 = vadd.f32 %v451, %v1429
    %v1437 = vadd.f32 %v452, %v1430
    %v1438 = vadd.f32 %v453, %v1431
    %v1439 = vadd.f32 %v454, %v1426
    %v1440 = vxor.u32 %v1436, 2147483648
    %v1441 = vxor.u32 %v1437, 2147483648
    %v1442 = vxor.u32 %v1438, 2147483648
    %v1443 = vxor.u32 %v1439, 2147483648
    %v1444 = vmul.f32 %v1440, 1.442695
    %v1445 = vpow.pop %v1444
    %v1446 = vmul.f32 %v1441, 1.442695
    %v1447 = vpow.pop %v1446
    %v1448 = vmul.f32 %v1442, 1.442695
    %v1449 = vpow.pop %v1448
    %v1450 = vmul.f32 %v1443, 1.442695
    %v1451 = vpow.pop %v1450
    %v1452 = vadd.f32 %v1445, 1.0
    %v1453 = vadd.f32 %v1447, 1.0
    %v1454 = vadd.f32 %v1449, 1.0
    %v1455 = vadd.f32 %v1451, 1.0
    %v1456 = vrcp.pop %v1452
    %v1457 = vmul.f32 %v1452, %v1456
    %v1458 = vsub.f32 1.0, %v1457
    %v1459 = vmul.f32 %v1456, %v1458
    %v1460 = vadd.f32 %v1456, %v1459
    %vm1461 = vweird.f32 %v1452
    %vm1462 = vweird.f32 %v1456
    %vm1463 = vmor %vm1461, %vm1462
    %v1464 = vsel %vm1463, %v1456, %v1460
    %v1465 = vand.u32 2147483647, %v1452
    %vm1466 = vcmp.eq.f32.partialorder %v1465, 8.507059e+37
    %v1467 = vand.u32 %v1452, 2147483648
    %v1468 = vor.u32 1.1754944e-38, %v1467
    %v1469 = vsel %vm1466, %v1468, %v1464
    %v1470 = vmul.f32 1.0, %v1469
    %v1471 = vrcp.pop %v1453
    %v1472 = vmul.f32 %v1453, %v1471
    %v1473 = vsub.f32 1.0, %v1472
    %v1474 = vmul.f32 %v1471, %v1473
    %v1475 = vadd.f32 %v1471, %v1474
    %vm1476 = vweird.f32 %v1453
    %vm1477 = vweird.f32 %v1471
    %vm1478 = vmor %vm1476, %vm1477
    %v1479 = vsel %vm1478, %v1471, %v1475
    %v1480 = vand.u32 2147483647, %v1453
    %vm1481 = vcmp.eq.f32.partialorder %v1480, 8.507059e+37
    %v1482 = vand.u32 %v1453, 2147483648
    %v1483 = vor.u32 1.1754944e-38, %v1482
    %v1484 = vsel %vm1481, %v1483, %v1479
    %v1485 = vmul.f32 1.0, %v1484
    %v1486 = vrcp.pop %v1454
    %v1487 = vmul.f32 %v1454, %v1486
    %v1488 = vsub.f32 1.0, %v1487
    %v1489 = vmul.f32 %v1486, %v1488
    %v1490 = vadd.f32 %v1486, %v1489
    %vm1491 = vweird.f32 %v1454
    %vm1492 = vweird.f32 %v1486
    %vm1493 = vmor %vm1491, %vm1492
    %v1494 = vsel %vm1493, %v1486, %v1490
    %v1495 = vand.u32 2147483647, %v1454
    %vm1496 = vcmp.eq.f32.partialorder %v1495, 8.507059e+37
    %v1497 = vand.u32 %v1454, 2147483648
    %v1498 = vor.u32 1.1754944e-38, %v1497
    %v1499 = vsel %vm1496, %v1498, %v1494
    %v1500 = vmul.f32 1.0, %v1499
    %v1501 = vrcp.pop %v1455
    %v1502 = vmul.f32 %v1455, %v1501
    %v1503 = vsub.f32 1.0, %v1502
    %v1504 = vmul.f32 %v1501, %v1503
    %v1505 = vadd.f32 %v1501, %v1504
    %vm1506 = vweird.f32 %v1455
    %vm1507 = vweird.f32 %v1501
    %vm1508 = vmor %vm1506, %vm1507
    %v1509 = vsel %vm1508, %v1501, %v1505
    %v1510 = vand.u32 2147483647, %v1455
    %vm1511 = vcmp.eq.f32.partialorder %v1510, 8.507059e+37
    %v1512 = vand.u32 %v1455, 2147483648
    %v1513 = vor.u32 1.1754944e-38, %v1512
    %v1514 = vsel %vm1511, %v1513, %v1509
    %v1515 = vmul.f32 1.0, %v1514
    %1516 = vmatpush.msra.mxu0 0.0
    %1517 = vmatpush.msra.mxu0 0.0
    %1518 = vmatpush.msra.mxu0 0.0
    %1519 = vmatpush.msra.mxu0 0.0
    %1520 = vmatpush.msra.mxu0 0.0
    %1521 = vmatpush.msra.mxu0 0.0
    %1522 = vmatpush.msra.mxu0 0.0
    %1523 = vmatpush.msra.mxu0 0.0
    %1524 = vmatpush.msra.mxu0 0.0
    %1525 = vmatpush.msra.mxu0 0.0
    %1526 = vmatpush.msra.mxu0 0.0
    %1527 = vmatpush.msra.mxu0 0.0
    %1528 = vmatpush.msra.mxu0 %v606
    %1529 = vmatpush.msra.mxu0 %v605
    %1530 = vmatpush.msra.mxu0 %v604
    %1531 = vmatpush.msra.mxu0 %v603
    %1532 = vmatmul.f32.gmra.mxu0 %v1406
    %v1533 = vpop.f32.mrf.mxu0
    %v1534 = vadd.f32 0.0, %v1533
    %1535 = vdwg.mxu0
    %v1537 = vrot.slane %v1534, 5
    %v1538 = vrot.slane %v1534, 6
    %v1539 = vrot.slane %v1534, 7
    %v1544 = vadd.f32 %v467, %v1537
    %v1545 = vadd.f32 %v468, %v1538
    %v1546 = vadd.f32 %v469, %v1539
    %v1547 = vadd.f32 %v470, %v1534
    %v1548 = vxor.u32 %v1544, 2147483648
    %v1549 = vxor.u32 %v1545, 2147483648
    %v1550 = vxor.u32 %v1546, 2147483648
    %v1551 = vxor.u32 %v1547, 2147483648
    %v1552 = vmul.f32 %v1548, 1.442695
    %v1553 = vpow.pop %v1552
    %v1554 = vmul.f32 %v1549, 1.442695
    %v1555 = vpow.pop %v1554
    %v1556 = vmul.f32 %v1550, 1.442695
    %v1557 = vpow.pop %v1556
    %v1558 = vmul.f32 %v1551, 1.442695
    %v1559 = vpow.pop %v1558
    %v1560 = vadd.f32 %v1553, 1.0
    %v1561 = vadd.f32 %v1555, 1.0
    %v1562 = vadd.f32 %v1557, 1.0
    %v1563 = vadd.f32 %v1559, 1.0
    %v1564 = vrcp.pop %v1560
    %v1565 = vmul.f32 %v1560, %v1564
    %v1566 = vsub.f32 1.0, %v1565
    %v1567 = vmul.f32 %v1564, %v1566
    %v1568 = vadd.f32 %v1564, %v1567
    %vm1569 = vweird.f32 %v1560
    %vm1570 = vweird.f32 %v1564
    %vm1571 = vmor %vm1569, %vm1570
    %v1572 = vsel %vm1571, %v1564, %v1568
    %v1573 = vand.u32 2147483647, %v1560
    %vm1574 = vcmp.eq.f32.partialorder %v1573, 8.507059e+37
    %v1575 = vand.u32 %v1560, 2147483648
    %v1576 = vor.u32 1.1754944e-38, %v1575
    %v1577 = vsel %vm1574, %v1576, %v1572
    %v1578 = vmul.f32 1.0, %v1577
    %v1579 = vrcp.pop %v1561
    %v1580 = vmul.f32 %v1561, %v1579
    %v1581 = vsub.f32 1.0, %v1580
    %v1582 = vmul.f32 %v1579, %v1581
    %v1583 = vadd.f32 %v1579, %v1582
    %vm1584 = vweird.f32 %v1561
    %vm1585 = vweird.f32 %v1579
    %vm1586 = vmor %vm1584, %vm1585
    %v1587 = vsel %vm1586, %v1579, %v1583
    %v1588 = vand.u32 2147483647, %v1561
    %vm1589 = vcmp.eq.f32.partialorder %v1588, 8.507059e+37
    %v1590 = vand.u32 %v1561, 2147483648
    %v1591 = vor.u32 1.1754944e-38, %v1590
    %v1592 = vsel %vm1589, %v1591, %v1587
    %v1593 = vmul.f32 1.0, %v1592
    %v1594 = vrcp.pop %v1562
    %v1595 = vmul.f32 %v1562, %v1594
    %v1596 = vsub.f32 1.0, %v1595
    %v1597 = vmul.f32 %v1594, %v1596
    %v1598 = vadd.f32 %v1594, %v1597
    %vm1599 = vweird.f32 %v1562
    %vm1600 = vweird.f32 %v1594
    %vm1601 = vmor %vm1599, %vm1600
    %v1602 = vsel %vm1601, %v1594, %v1598
    %v1603 = vand.u32 2147483647, %v1562
    %vm1604 = vcmp.eq.f32.partialorder %v1603, 8.507059e+37
    %v1605 = vand.u32 %v1562, 2147483648
    %v1606 = vor.u32 1.1754944e-38, %v1605
    %v1607 = vsel %vm1604, %v1606, %v1602
    %v1608 = vmul.f32 1.0, %v1607
    %v1609 = vrcp.pop %v1563
    %v1610 = vmul.f32 %v1563, %v1609
    %v1611 = vsub.f32 1.0, %v1610
    %v1612 = vmul.f32 %v1609, %v1611
    %v1613 = vadd.f32 %v1609, %v1612
    %vm1614 = vweird.f32 %v1563
    %vm1615 = vweird.f32 %v1609
    %vm1616 = vmor %vm1614, %vm1615
    %v1617 = vsel %vm1616, %v1609, %v1613
    %v1618 = vand.u32 2147483647, %v1563
    %vm1619 = vcmp.eq.f32.partialorder %v1618, 8.507059e+37
    %v1620 = vand.u32 %v1563, 2147483648
    %v1621 = vor.u32 1.1754944e-38, %v1620
    %v1622 = vsel %vm1619, %v1621, %v1617
    %v1623 = vmul.f32 1.0, %v1622
    %v1624 = vrot.slane %v1392, 7
    %v1625 = vrot.slane %v1393, 7
    %v1626 = vrot.slane %v1394, 7
    %v1631 = vmul.f32 %v1470, %v1624
    %v1632 = vmul.f32 %v1485, %v1625
    %v1633 = vmul.f32 %v1500, %v1626
    %v1634 = vmul.f32 %v1515, %v1404
    %v1639 = vrot.slane %v1631, 3
    %v1640 = vrot.slane %v1632, 2
    %v1641 = vsel %vm728, %v1640, %v1639
    %v1642 = vrot.slane %v1633, 1
    %v1643 = vsel %vm731, %v1642, %v1641
    %v1644 = vsel %vm734, %v1634, %v1643
    %v1645 = vsel %vm491, %v1644, 0
    %1647 = vmatpush.msra.mxu0 0.0
    %1648 = vmatpush.msra.mxu0 0.0
    %1649 = vmatpush.msra.mxu0 0.0
    %1650 = vmatpush.msra.mxu0 0.0
    %1651 = vmatpush.msra.mxu0 0.0
    %1652 = vmatpush.msra.mxu0 0.0
    %1653 = vmatpush.msra.mxu0 0.0
    %1654 = vmatpush.msra.mxu0 0.0
    %1655 = vmatpush.msra.mxu0 0.0
    %1656 = vmatpush.msra.mxu0 0.0
    %1657 = vmatpush.msra.mxu0 0.0
    %1658 = vmatpush.msra.mxu0 0.0
    %1659 = vmatpush.msra.mxu0 %v722
    %1660 = vmatpush.msra.mxu0 %v721
    %1661 = vmatpush.msra.mxu0 %v720
    %1662 = vmatpush.msra.mxu0 %v719
    %1663 = vmatmul.f32.gmra.mxu0 %v1645
    %v1664 = vpop.f32.mrf.mxu0
    %v1665 = vadd.f32 0.0, %v1664
    %1666 = vdwg.mxu0
    %v1668 = vrot.slane %v1665, 5
    %v1669 = vrot.slane %v1665, 6
    %v1670 = vrot.slane %v1665, 7
    %v1675 = vadd.f32 %v483, %v1668
    %v1676 = vadd.f32 %v484, %v1669
    %v1677 = vadd.f32 %v485, %v1670
    %v1678 = vadd.f32 %v486, %v1665
    %v1679 = vtanh.pop %v1675
    %v1680 = vtanh.pop %v1676
    %v1681 = vtanh.pop %v1677
    %v1682 = vtanh.pop %v1678
    %v1683 = vmul.f32 %v1578, %v1624
    %v1684 = vmul.f32 %v1593, %v1625
    %v1685 = vmul.f32 %v1608, %v1626
    %v1686 = vmul.f32 %v1623, %v1404
    %v1687 = vsub.f32 1.0, %v1578
    %v1688 = vsub.f32 1.0, %v1593
    %v1689 = vsub.f32 1.0, %v1608
    %v1690 = vsub.f32 1.0, %v1623
    %v1691 = vmul.f32 %v1687, %v1679
    %v1692 = vmul.f32 %v1688, %v1680
    %v1693 = vmul.f32 %v1689, %v1681
    %v1694 = vmul.f32 %v1690, %v1682
    %v1695 = vadd.f32 %v1683, %v1691
    %v1696 = vadd.f32 %v1684, %v1692
    %v1697 = vadd.f32 %v1685, %v1693
    %v1698 = vadd.f32 %v1686, %v1694
    %v1703 = vrot.slane %v1695, 3
    %v1704 = vrot.slane %v1696, 2
    %v1705 = vsel %vm728, %v1704, %v1703
    %v1706 = vrot.slane %v1697, 1
    %v1707 = vsel %vm731, %v1706, %v1705
    %v1708 = vsel %vm734, %v1698, %v1707
    %v1709 = vsel %vm491, %v1708, 0
    %1711 = vmatpush.msra.mxu0 0.0
    %1712 = vmatpush.msra.mxu0 0.0
    %1713 = vmatpush.msra.mxu0 0.0
    %1714 = vmatpush.msra.mxu0 0.0
    %1715 = vmatpush.msra.mxu0 0.0
    %1716 = vmatpush.msra.mxu0 0.0
    %1717 = vmatpush.msra.mxu0 0.0
    %1718 = vmatpush.msra.mxu0 0.0
    %1719 = vmatpush.msra.mxu0 0.0
    %1720 = vmatpush.msra.mxu0 0.0
    %1721 = vmatpush.msra.mxu0 0.0
    %1722 = vmatpush.msra.mxu0 0.0
    %1723 = vmatpush.msra.mxu0 %v490
    %1724 = vmatpush.msra.mxu0 %v489
    %1725 = vmatpush.msra.mxu0 %v488
    %1726 = vmatpush.msra.mxu0 %v487
    %1727 = vmatmul.f32.gmra.mxu0 %v1709
    %v1728 = vpop.f32.mrf.mxu0
    %v1729 = vadd.f32 0.0, %v1728
    %1730 = vdwg.mxu0
    %v1732 = vrot.slane %v1729, 4
    %v1733 = vrot.slane %v1729, 5
    %v1734 = vrot.slane %v1729, 6
    %v1735 = vrot.slane %v1729, 7
    %v1740 = vadd.f32 %v451, %v1732
    %v1741 = vadd.f32 %v452, %v1733
    %v1742 = vadd.f32 %v453, %v1734
    %v1743 = vadd.f32 %v454, %v1735
    %v1744 = vxor.u32 %v1740, 2147483648
    %v1745 = vxor.u32 %v1741, 2147483648
    %v1746 = vxor.u32 %v1742, 2147483648
    %v1747 = vxor.u32 %v1743, 2147483648
    %v1748 = vmul.f32 %v1744, 1.442695
    %v1749 = vpow.pop %v1748
    %v1750 = vmul.f32 %v1745, 1.442695
    %v1751 = vpow.pop %v1750
    %v1752 = vmul.f32 %v1746, 1.442695
    %v1753 = vpow.pop %v1752
    %v1754 = vmul.f32 %v1747, 1.442695
    %v1755 = vpow.pop %v1754
    %v1756 = vadd.f32 %v1749, 1.0
    %v1757 = vadd.f32 %v1751, 1.0
    %v1758 = vadd.f32 %v1753, 1.0
    %v1759 = vadd.f32 %v1755, 1.0
    %v1760 = vrcp.pop %v1756
    %v1761 = vmul.f32 %v1756, %v1760
    %v1762 = vsub.f32 1.0, %v1761
    %v1763 = vmul.f32 %v1760, %v1762
    %v1764 = vadd.f32 %v1760, %v1763
    %vm1765 = vweird.f32 %v1756
    %vm1766 = vweird.f32 %v1760
    %vm1767 = vmor %vm1765, %vm1766
    %v1768 = vsel %vm1767, %v1760, %v1764
    %v1769 = vand.u32 2147483647, %v1756
    %vm1770 = vcmp.eq.f32.partialorder %v1769, 8.507059e+37
    %v1771 = vand.u32 %v1756, 2147483648
    %v1772 = vor.u32 1.1754944e-38, %v1771
    %v1773 = vsel %vm1770, %v1772, %v1768
    %v1774 = vmul.f32 1.0, %v1773
    %v1775 = vrcp.pop %v1757
    %v1776 = vmul.f32 %v1757, %v1775
    %v1777 = vsub.f32 1.0, %v1776
    %v1778 = vmul.f32 %v1775, %v1777
    %v1779 = vadd.f32 %v1775, %v1778
    %vm1780 = vweird.f32 %v1757
    %vm1781 = vweird.f32 %v1775
    %vm1782 = vmor %vm1780, %vm1781
    %v1783 = vsel %vm1782, %v1775, %v1779
    %v1784 = vand.u32 2147483647, %v1757
    %vm1785 = vcmp.eq.f32.partialorder %v1784, 8.507059e+37
    %v1786 = vand.u32 %v1757, 2147483648
    %v1787 = vor.u32 1.1754944e-38, %v1786
    %v1788 = vsel %vm1785, %v1787, %v1783
    %v1789 = vmul.f32 1.0, %v1788
    %v1790 = vrcp.pop %v1758
    %v1791 = vmul.f32 %v1758, %v1790
    %v1792 = vsub.f32 1.0, %v1791
    %v1793 = vmul.f32 %v1790, %v1792
    %v1794 = vadd.f32 %v1790, %v1793
    %vm1795 = vweird.f32 %v1758
    %vm1796 = vweird.f32 %v1790
    %vm1797 = vmor %vm1795, %vm1796
    %v1798 = vsel %vm1797, %v1790, %v1794
    %v1799 = vand.u32 2147483647, %v1758
    %vm1800 = vcmp.eq.f32.partialorder %v1799, 8.507059e+37
    %v1801 = vand.u32 %v1758, 2147483648
    %v1802 = vor.u32 1.1754944e-38, %v1801
    %v1803 = vsel %vm1800, %v1802, %v1798
    %v1804 = vmul.f32 1.0, %v1803
    %v1805 = vrcp.pop %v1759
    %v1806 = vmul.f32 %v1759, %v1805
    %v1807 = vsub.f32 1.0, %v1806
    %v1808 = vmul.f32 %v1805, %v1807
    %v1809 = vadd.f32 %v1805, %v1808
    %vm1810 = vweird.f32 %v1759
    %vm1811 = vweird.f32 %v1805
    %vm1812 = vmor %vm1810, %vm1811
    %v1813 = vsel %vm1812, %v1805, %v1809
    %v1814 = vand.u32 2147483647, %v1759
    %vm1815 = vcmp.eq.f32.partialorder %v1814, 8.507059e+37
    %v1816 = vand.u32 %v1759, 2147483648
    %v1817 = vor.u32 1.1754944e-38, %v1816
    %v1818 = vsel %vm1815, %v1817, %v1813
    %v1819 = vmul.f32 1.0, %v1818
    %1820 = vmatpush.msra.mxu0 0.0
    %1821 = vmatpush.msra.mxu0 0.0
    %1822 = vmatpush.msra.mxu0 0.0
    %1823 = vmatpush.msra.mxu0 0.0
    %1824 = vmatpush.msra.mxu0 0.0
    %1825 = vmatpush.msra.mxu0 0.0
    %1826 = vmatpush.msra.mxu0 0.0
    %1827 = vmatpush.msra.mxu0 0.0
    %1828 = vmatpush.msra.mxu0 0.0
    %1829 = vmatpush.msra.mxu0 0.0
    %1830 = vmatpush.msra.mxu0 0.0
    %1831 = vmatpush.msra.mxu0 0.0
    %1832 = vmatpush.msra.mxu0 %v606
    %1833 = vmatpush.msra.mxu0 %v605
    %1834 = vmatpush.msra.mxu0 %v604
    %1835 = vmatpush.msra.mxu0 %v603
    %1836 = vmatmul.f32.gmra.mxu0 %v1709
    %v1837 = vpop.f32.mrf.mxu0
    %v1838 = vadd.f32 0.0, %v1837
    %1839 = vdwg.mxu0
    %v1841 = vrot.slane %v1838, 4
    %v1842 = vrot.slane %v1838, 5
    %v1843 = vrot.slane %v1838, 6
    %v1844 = vrot.slane %v1838, 7
    %v1849 = vadd.f32 %v467, %v1841
    %v1850 = vadd.f32 %v468, %v1842
    %v1851 = vadd.f32 %v469, %v1843
    %v1852 = vadd.f32 %v470, %v1844
    %v1853 = vxor.u32 %v1849, 2147483648
    %v1854 = vxor.u32 %v1850, 2147483648
    %v1855 = vxor.u32 %v1851, 2147483648
    %v1856 = vxor.u32 %v1852, 2147483648
    %v1857 = vmul.f32 %v1853, 1.442695
    %v1858 = vpow.pop %v1857
    %v1859 = vmul.f32 %v1854, 1.442695
    %v1860 = vpow.pop %v1859
    %v1861 = vmul.f32 %v1855, 1.442695
    %v1862 = vpow.pop %v1861
    %v1863 = vmul.f32 %v1856, 1.442695
    %v1864 = vpow.pop %v1863
    %v1865 = vadd.f32 %v1858, 1.0
    %v1866 = vadd.f32 %v1860, 1.0
    %v1867 = vadd.f32 %v1862, 1.0
    %v1868 = vadd.f32 %v1864, 1.0
    %v1869 = vrcp.pop %v1865
    %v1870 = vmul.f32 %v1865, %v1869
    %v1871 = vsub.f32 1.0, %v1870
    %v1872 = vmul.f32 %v1869, %v1871
    %v1873 = vadd.f32 %v1869, %v1872
    %vm1874 = vweird.f32 %v1865
    %vm1875 = vweird.f32 %v1869
    %vm1876 = vmor %vm1874, %vm1875
    %v1877 = vsel %vm1876, %v1869, %v1873
    %v1878 = vand.u32 2147483647, %v1865
    %vm1879 = vcmp.eq.f32.partialorder %v1878, 8.507059e+37
    %v1880 = vand.u32 %v1865, 2147483648
    %v1881 = vor.u32 1.1754944e-38, %v1880
    %v1882 = vsel %vm1879, %v1881, %v1877
    %v1883 = vmul.f32 1.0, %v1882
    %v1884 = vrcp.pop %v1866
    %v1885 = vmul.f32 %v1866, %v1884
    %v1886 = vsub.f32 1.0, %v1885
    %v1887 = vmul.f32 %v1884, %v1886
    %v1888 = vadd.f32 %v1884, %v1887
    %vm1889 = vweird.f32 %v1866
    %vm1890 = vweird.f32 %v1884
    %vm1891 = vmor %vm1889, %vm1890
    %v1892 = vsel %vm1891, %v1884, %v1888
    %v1893 = vand.u32 2147483647, %v1866
    %vm1894 = vcmp.eq.f32.partialorder %v1893, 8.507059e+37
    %v1895 = vand.u32 %v1866, 2147483648
    %v1896 = vor.u32 1.1754944e-38, %v1895
    %v1897 = vsel %vm1894, %v1896, %v1892
    %v1898 = vmul.f32 1.0, %v1897
    %v1899 = vrcp.pop %v1867
    %v1900 = vmul.f32 %v1867, %v1899
    %v1901 = vsub.f32 1.0, %v1900
    %v1902 = vmul.f32 %v1899, %v1901
    %v1903 = vadd.f32 %v1899, %v1902
    %vm1904 = vweird.f32 %v1867
    %vm1905 = vweird.f32 %v1899
    %vm1906 = vmor %vm1904, %vm1905
    %v1907 = vsel %vm1906, %v1899, %v1903
    %v1908 = vand.u32 2147483647, %v1867
    %vm1909 = vcmp.eq.f32.partialorder %v1908, 8.507059e+37
    %v1910 = vand.u32 %v1867, 2147483648
    %v1911 = vor.u32 1.1754944e-38, %v1910
    %v1912 = vsel %vm1909, %v1911, %v1907
    %v1913 = vmul.f32 1.0, %v1912
    %v1914 = vrcp.pop %v1868
    %v1915 = vmul.f32 %v1868, %v1914
    %v1916 = vsub.f32 1.0, %v1915
    %v1917 = vmul.f32 %v1914, %v1916
    %v1918 = vadd.f32 %v1914, %v1917
    %vm1919 = vweird.f32 %v1868
    %vm1920 = vweird.f32 %v1914
    %vm1921 = vmor %vm1919, %vm1920
    %v1922 = vsel %vm1921, %v1914, %v1918
    %v1923 = vand.u32 2147483647, %v1868
    %vm1924 = vcmp.eq.f32.partialorder %v1923, 8.507059e+37
    %v1925 = vand.u32 %v1868, 2147483648
    %v1926 = vor.u32 1.1754944e-38, %v1925
    %v1927 = vsel %vm1924, %v1926, %v1922
    %v1928 = vmul.f32 1.0, %v1927
    %v1929 = vrot.slane %v1695, 7
    %v1930 = vrot.slane %v1696, 7
    %v1931 = vrot.slane %v1697, 7
    %v1932 = vrot.slane %v1698, 7
    %v1937 = vmul.f32 %v1774, %v1929
    %v1938 = vmul.f32 %v1789, %v1930
    %v1939 = vmul.f32 %v1804, %v1931
    %v1940 = vmul.f32 %v1819, %v1932
    %v1945 = vrot.slane %v1937, 4
    %v1946 = vrot.slane %v1938, 3
    %v1947 = vsel %vm728, %v1946, %v1945
    %v1948 = vrot.slane %v1939, 2
    %v1949 = vsel %vm731, %v1948, %v1947
    %v1950 = vrot.slane %v1940, 1
    %v1951 = vsel %vm734, %v1950, %v1949
    %v1952 = vsel %vm491, %v1951, 0
    %1954 = vmatpush.msra.mxu0 0.0
    %1955 = vmatpush.msra.mxu0 0.0
    %1956 = vmatpush.msra.mxu0 0.0
    %1957 = vmatpush.msra.mxu0 0.0
    %1958 = vmatpush.msra.mxu0 0.0
    %1959 = vmatpush.msra.mxu0 0.0
    %1960 = vmatpush.msra.mxu0 0.0
    %1961 = vmatpush.msra.mxu0 0.0
    %1962 = vmatpush.msra.mxu0 0.0
    %1963 = vmatpush.msra.mxu0 0.0
    %1964 = vmatpush.msra.mxu0 0.0
    %1965 = vmatpush.msra.mxu0 0.0
    %1966 = vmatpush.msra.mxu0 %v722
    %1967 = vmatpush.msra.mxu0 %v721
    %1968 = vmatpush.msra.mxu0 %v720
    %1969 = vmatpush.msra.mxu0 %v719
    %1970 = vmatmul.f32.gmra.mxu0 %v1952
    %v1971 = vpop.f32.mrf.mxu0
    %v1972 = vadd.f32 0.0, %v1971
    %1973 = vdwg.mxu0
    %v1975 = vrot.slane %v1972, 4
    %v1976 = vrot.slane %v1972, 5
    %v1977 = vrot.slane %v1972, 6
    %v1978 = vrot.slane %v1972, 7
    %v1983 = vadd.f32 %v483, %v1975
    %v1984 = vadd.f32 %v484, %v1976
    %v1985 = vadd.f32 %v485, %v1977
    %v1986 = vadd.f32 %v486, %v1978
    %v1987 = vtanh.pop %v1983
    %v1988 = vtanh.pop %v1984
    %v1989 = vtanh.pop %v1985
    %v1990 = vtanh.pop %v1986
    %v1991 = vmul.f32 %v1883, %v1929
    %v1992 = vmul.f32 %v1898, %v1930
    %v1993 = vmul.f32 %v1913, %v1931
    %v1994 = vmul.f32 %v1928, %v1932
    %v1995 = vsub.f32 1.0, %v1883
    %v1996 = vsub.f32 1.0, %v1898
    %v1997 = vsub.f32 1.0, %v1913
    %v1998 = vsub.f32 1.0, %v1928
    %v1999 = vmul.f32 %v1995, %v1987
    %v2000 = vmul.f32 %v1996, %v1988
    %v2001 = vmul.f32 %v1997, %v1989
    %v2002 = vmul.f32 %v1998, %v1990
    %v2003 = vadd.f32 %v1991, %v1999
    %v2004 = vadd.f32 %v1992, %v2000
    %v2005 = vadd.f32 %v1993, %v2001
    %v2006 = vadd.f32 %v1994, %v2002
    %v2011 = vrot.slane %v2003, 4
    %v2012 = vrot.slane %v2004, 3
    %v2013 = vsel %vm728, %v2012, %v2011
    %v2014 = vrot.slane %v2005, 2
    %v2015 = vsel %vm731, %v2014, %v2013
    %v2016 = vrot.slane %v2006, 1
    %v2017 = vsel %vm734, %v2016, %v2015
    %v2018 = vsel %vm491, %v2017, 0
    %2020 = vmatpush.msra.mxu0 0.0
    %2021 = vmatpush.msra.mxu0 0.0
    %2022 = vmatpush.msra.mxu0 0.0
    %2023 = vmatpush.msra.mxu0 0.0
    %2024 = vmatpush.msra.mxu0 0.0
    %2025 = vmatpush.msra.mxu0 0.0
    %2026 = vmatpush.msra.mxu0 0.0
    %2027 = vmatpush.msra.mxu0 0.0
    %2028 = vmatpush.msra.mxu0 0.0
    %2029 = vmatpush.msra.mxu0 0.0
    %2030 = vmatpush.msra.mxu0 0.0
    %2031 = vmatpush.msra.mxu0 0.0
    %2032 = vmatpush.msra.mxu0 %v490
    %2033 = vmatpush.msra.mxu0 %v489
    %2034 = vmatpush.msra.mxu0 %v488
    %2035 = vmatpush.msra.mxu0 %v487
    %2036 = vmatmul.f32.gmra.mxu0 %v2018
    %v2037 = vpop.f32.mrf.mxu0
    %v2038 = vadd.f32 0.0, %v2037
    %2039 = vdwg.mxu0
    %v2041 = vrot.slane %v2038, 3
    %v2042 = vrot.slane %v2038, 4
    %v2043 = vrot.slane %v2038, 5
    %v2044 = vrot.slane %v2038, 6
    %v2049 = vadd.f32 %v451, %v2041
    %v2050 = vadd.f32 %v452, %v2042
    %v2051 = vadd.f32 %v453, %v2043
    %v2052 = vadd.f32 %v454, %v2044
    %v2053 = vxor.u32 %v2049, 2147483648
    %v2054 = vxor.u32 %v2050, 2147483648
    %v2055 = vxor.u32 %v2051, 2147483648
    %v2056 = vxor.u32 %v2052, 2147483648
    %v2057 = vmul.f32 %v2053, 1.442695
    %v2058 = vpow.pop %v2057
    %v2059 = vmul.f32 %v2054, 1.442695
    %v2060 = vpow.pop %v2059
    %v2061 = vmul.f32 %v2055, 1.442695
    %v2062 = vpow.pop %v2061
    %v2063 = vmul.f32 %v2056, 1.442695
    %v2064 = vpow.pop %v2063
    %v2065 = vadd.f32 %v2058, 1.0
    %v2066 = vadd.f32 %v2060, 1.0
    %v2067 = vadd.f32 %v2062, 1.0
    %v2068 = vadd.f32 %v2064, 1.0
    %v2069 = vrcp.pop %v2065
    %v2070 = vmul.f32 %v2065, %v2069
    %v2071 = vsub.f32 1.0, %v2070
    %v2072 = vmul.f32 %v2069, %v2071
    %v2073 = vadd.f32 %v2069, %v2072
    %vm2074 = vweird.f32 %v2065
    %vm2075 = vweird.f32 %v2069
    %vm2076 = vmor %vm2074, %vm2075
    %v2077 = vsel %vm2076, %v2069, %v2073
    %v2078 = vand.u32 2147483647, %v2065
    %vm2079 = vcmp.eq.f32.partialorder %v2078, 8.507059e+37
    %v2080 = vand.u32 %v2065, 2147483648
    %v2081 = vor.u32 1.1754944e-38, %v2080
    %v2082 = vsel %vm2079, %v2081, %v2077
    %v2083 = vmul.f32 1.0, %v2082
    %v2084 = vrcp.pop %v2066
    %v2085 = vmul.f32 %v2066, %v2084
    %v2086 = vsub.f32 1.0, %v2085
    %v2087 = vmul.f32 %v2084, %v2086
    %v2088 = vadd.f32 %v2084, %v2087
    %vm2089 = vweird.f32 %v2066
    %vm2090 = vweird.f32 %v2084
    %vm2091 = vmor %vm2089, %vm2090
    %v2092 = vsel %vm2091, %v2084, %v2088
    %v2093 = vand.u32 2147483647, %v2066
    %vm2094 = vcmp.eq.f32.partialorder %v2093, 8.507059e+37
    %v2095 = vand.u32 %v2066, 2147483648
    %v2096 = vor.u32 1.1754944e-38, %v2095
    %v2097 = vsel %vm2094, %v2096, %v2092
    %v2098 = vmul.f32 1.0, %v2097
    %v2099 = vrcp.pop %v2067
    %v2100 = vmul.f32 %v2067, %v2099
    %v2101 = vsub.f32 1.0, %v2100
    %v2102 = vmul.f32 %v2099, %v2101
    %v2103 = vadd.f32 %v2099, %v2102
    %vm2104 = vweird.f32 %v2067
    %vm2105 = vweird.f32 %v2099
    %vm2106 = vmor %vm2104, %vm2105
    %v2107 = vsel %vm2106, %v2099, %v2103
    %v2108 = vand.u32 2147483647, %v2067
    %vm2109 = vcmp.eq.f32.partialorder %v2108, 8.507059e+37
    %v2110 = vand.u32 %v2067, 2147483648
    %v2111 = vor.u32 1.1754944e-38, %v2110
    %v2112 = vsel %vm2109, %v2111, %v2107
    %v2113 = vmul.f32 1.0, %v2112
    %v2114 = vrcp.pop %v2068
    %v2115 = vmul.f32 %v2068, %v2114
    %v2116 = vsub.f32 1.0, %v2115
    %v2117 = vmul.f32 %v2114, %v2116
    %v2118 = vadd.f32 %v2114, %v2117
    %vm2119 = vweird.f32 %v2068
    %vm2120 = vweird.f32 %v2114
    %vm2121 = vmor %vm2119, %vm2120
    %v2122 = vsel %vm2121, %v2114, %v2118
    %v2123 = vand.u32 2147483647, %v2068
    %vm2124 = vcmp.eq.f32.partialorder %v2123, 8.507059e+37
    %v2125 = vand.u32 %v2068, 2147483648
    %v2126 = vor.u32 1.1754944e-38, %v2125
    %v2127 = vsel %vm2124, %v2126, %v2122
    %v2128 = vmul.f32 1.0, %v2127
    %2129 = vmatpush.msra.mxu0 0.0
    %2130 = vmatpush.msra.mxu0 0.0
    %2131 = vmatpush.msra.mxu0 0.0
    %2132 = vmatpush.msra.mxu0 0.0
    %2133 = vmatpush.msra.mxu0 0.0
    %2134 = vmatpush.msra.mxu0 0.0
    %2135 = vmatpush.msra.mxu0 0.0
    %2136 = vmatpush.msra.mxu0 0.0
    %2137 = vmatpush.msra.mxu0 0.0
    %2138 = vmatpush.msra.mxu0 0.0
    %2139 = vmatpush.msra.mxu0 0.0
    %2140 = vmatpush.msra.mxu0 0.0
    %2141 = vmatpush.msra.mxu0 %v606
    %2142 = vmatpush.msra.mxu0 %v605
    %2143 = vmatpush.msra.mxu0 %v604
    %2144 = vmatpush.msra.mxu0 %v603
    %2145 = vmatmul.f32.gmra.mxu0 %v2018
    %v2146 = vpop.f32.mrf.mxu0
    %v2147 = vadd.f32 0.0, %v2146
    %2148 = vdwg.mxu0
    %v2150 = vrot.slane %v2147, 3
    %v2151 = vrot.slane %v2147, 4
    %v2152 = vrot.slane %v2147, 5
    %v2153 = vrot.slane %v2147, 6
    %v2158 = vadd.f32 %v467, %v2150
    %v2159 = vadd.f32 %v468, %v2151
    %v2160 = vadd.f32 %v469, %v2152
    %v2161 = vadd.f32 %v470, %v2153
    %v2162 = vxor.u32 %v2158, 2147483648
    %v2163 = vxor.u32 %v2159, 2147483648
    %v2164 = vxor.u32 %v2160, 2147483648
    %v2165 = vxor.u32 %v2161, 2147483648
    %v2166 = vmul.f32 %v2162, 1.442695
    %v2167 = vpow.pop %v2166
    %v2168 = vmul.f32 %v2163, 1.442695
    %v2169 = vpow.pop %v2168
    %v2170 = vmul.f32 %v2164, 1.442695
    %v2171 = vpow.pop %v2170
    %v2172 = vmul.f32 %v2165, 1.442695
    %v2173 = vpow.pop %v2172
    %v2174 = vadd.f32 %v2167, 1.0
    %v2175 = vadd.f32 %v2169, 1.0
    %v2176 = vadd.f32 %v2171, 1.0
    %v2177 = vadd.f32 %v2173, 1.0
    %v2178 = vrcp.pop %v2174
    %v2179 = vmul.f32 %v2174, %v2178
    %v2180 = vsub.f32 1.0, %v2179
    %v2181 = vmul.f32 %v2178, %v2180
    %v2182 = vadd.f32 %v2178, %v2181
    %vm2183 = vweird.f32 %v2174
    %vm2184 = vweird.f32 %v2178
    %vm2185 = vmor %vm2183, %vm2184
    %v2186 = vsel %vm2185, %v2178, %v2182
    %v2187 = vand.u32 2147483647, %v2174
    %vm2188 = vcmp.eq.f32.partialorder %v2187, 8.507059e+37
    %v2189 = vand.u32 %v2174, 2147483648
    %v2190 = vor.u32 1.1754944e-38, %v2189
    %v2191 = vsel %vm2188, %v2190, %v2186
    %v2192 = vmul.f32 1.0, %v2191
    %v2193 = vrcp.pop %v2175
    %v2194 = vmul.f32 %v2175, %v2193
    %v2195 = vsub.f32 1.0, %v2194
    %v2196 = vmul.f32 %v2193, %v2195
    %v2197 = vadd.f32 %v2193, %v2196
    %vm2198 = vweird.f32 %v2175
    %vm2199 = vweird.f32 %v2193
    %vm2200 = vmor %vm2198, %vm2199
    %v2201 = vsel %vm2200, %v2193, %v2197
    %v2202 = vand.u32 2147483647, %v2175
    %vm2203 = vcmp.eq.f32.partialorder %v2202, 8.507059e+37
    %v2204 = vand.u32 %v2175, 2147483648
    %v2205 = vor.u32 1.1754944e-38, %v2204
    %v2206 = vsel %vm2203, %v2205, %v2201
    %v2207 = vmul.f32 1.0, %v2206
    %v2208 = vrcp.pop %v2176
    %v2209 = vmul.f32 %v2176, %v2208
    %v2210 = vsub.f32 1.0, %v2209
    %v2211 = vmul.f32 %v2208, %v2210
    %v2212 = vadd.f32 %v2208, %v2211
    %vm2213 = vweird.f32 %v2176
    %vm2214 = vweird.f32 %v2208
    %vm2215 = vmor %vm2213, %vm2214
    %v2216 = vsel %vm2215, %v2208, %v2212
    %v2217 = vand.u32 2147483647, %v2176
    %vm2218 = vcmp.eq.f32.partialorder %v2217, 8.507059e+37
    %v2219 = vand.u32 %v2176, 2147483648
    %v2220 = vor.u32 1.1754944e-38, %v2219
    %v2221 = vsel %vm2218, %v2220, %v2216
    %v2222 = vmul.f32 1.0, %v2221
    %v2223 = vrcp.pop %v2177
    %v2224 = vmul.f32 %v2177, %v2223
    %v2225 = vsub.f32 1.0, %v2224
    %v2226 = vmul.f32 %v2223, %v2225
    %v2227 = vadd.f32 %v2223, %v2226
    %vm2228 = vweird.f32 %v2177
    %vm2229 = vweird.f32 %v2223
    %vm2230 = vmor %vm2228, %vm2229
    %v2231 = vsel %vm2230, %v2223, %v2227
    %v2232 = vand.u32 2147483647, %v2177
    %vm2233 = vcmp.eq.f32.partialorder %v2232, 8.507059e+37
    %v2234 = vand.u32 %v2177, 2147483648
    %v2235 = vor.u32 1.1754944e-38, %v2234
    %v2236 = vsel %vm2233, %v2235, %v2231
    %v2237 = vmul.f32 1.0, %v2236
    %v2238 = vrot.slane %v2003, 7
    %v2239 = vrot.slane %v2004, 7
    %v2240 = vrot.slane %v2005, 7
    %v2241 = vrot.slane %v2006, 7
    %v2246 = vmul.f32 %v2083, %v2238
    %v2247 = vmul.f32 %v2098, %v2239
    %v2248 = vmul.f32 %v2113, %v2240
    %v2249 = vmul.f32 %v2128, %v2241
    %v2254 = vrot.slane %v2246, 5
    %v2255 = vrot.slane %v2247, 4
    %v2256 = vsel %vm728, %v2255, %v2254
    %v2257 = vrot.slane %v2248, 3
    %v2258 = vsel %vm731, %v2257, %v2256
    %v2259 = vrot.slane %v2249, 2
    %v2260 = vsel %vm734, %v2259, %v2258
    %v2261 = vsel %vm491, %v2260, 0
    %2263 = vmatpush.msra.mxu0 0.0
    %2264 = vmatpush.msra.mxu0 0.0
    %2265 = vmatpush.msra.mxu0 0.0
    %2266 = vmatpush.msra.mxu0 0.0
    %2267 = vmatpush.msra.mxu0 0.0
    %2268 = vmatpush.msra.mxu0 0.0
    %2269 = vmatpush.msra.mxu0 0.0
    %2270 = vmatpush.msra.mxu0 0.0
    %2271 = vmatpush.msra.mxu0 0.0
    %2272 = vmatpush.msra.mxu0 0.0
    %2273 = vmatpush.msra.mxu0 0.0
    %2274 = vmatpush.msra.mxu0 0.0
    %2275 = vmatpush.msra.mxu0 %v722
    %2276 = vmatpush.msra.mxu0 %v721
    %2277 = vmatpush.msra.mxu0 %v720
    %2278 = vmatpush.msra.mxu0 %v719
    %2279 = vmatmul.f32.gmra.mxu0 %v2261
    %v2280 = vpop.f32.mrf.mxu0
    %v2281 = vadd.f32 0.0, %v2280
    %2282 = vdwg.mxu0
    %v2284 = vrot.slane %v2281, 3
    %v2285 = vrot.slane %v2281, 4
    %v2286 = vrot.slane %v2281, 5
    %v2287 = vrot.slane %v2281, 6
    %v2292 = vadd.f32 %v483, %v2284
    %v2293 = vadd.f32 %v484, %v2285
    %v2294 = vadd.f32 %v485, %v2286
    %v2295 = vadd.f32 %v486, %v2287
    %v2296 = vtanh.pop %v2292
    %v2297 = vtanh.pop %v2293
    %v2298 = vtanh.pop %v2294
    %v2299 = vtanh.pop %v2295
    %v2300 = vmul.f32 %v2192, %v2238
    %v2301 = vmul.f32 %v2207, %v2239
    %v2302 = vmul.f32 %v2222, %v2240
    %v2303 = vmul.f32 %v2237, %v2241
    %v2304 = vsub.f32 1.0, %v2192
    %v2305 = vsub.f32 1.0, %v2207
    %v2306 = vsub.f32 1.0, %v2222
    %v2307 = vsub.f32 1.0, %v2237
    %v2308 = vmul.f32 %v2304, %v2296
    %v2309 = vmul.f32 %v2305, %v2297
    %v2310 = vmul.f32 %v2306, %v2298
    %v2311 = vmul.f32 %v2307, %v2299
    %v2312 = vadd.f32 %v2300, %v2308
    %v2313 = vadd.f32 %v2301, %v2309
    %v2314 = vadd.f32 %v2302, %v2310
    %v2315 = vadd.f32 %v2303, %v2311
    %v2320 = vrot.slane %v2312, 5
    %v2321 = vrot.slane %v2313, 4
    %v2322 = vsel %vm728, %v2321, %v2320
    %v2323 = vrot.slane %v2314, 3
    %v2324 = vsel %vm731, %v2323, %v2322
    %v2325 = vrot.slane %v2315, 2
    %v2326 = vsel %vm734, %v2325, %v2324
    %v2327 = vsel %vm491, %v2326, 0
    %2329 = vmatpush.msra.mxu0 0.0
    %2330 = vmatpush.msra.mxu0 0.0
    %2331 = vmatpush.msra.mxu0 0.0
    %2332 = vmatpush.msra.mxu0 0.0
    %2333 = vmatpush.msra.mxu0 0.0
    %2334 = vmatpush.msra.mxu0 0.0
    %2335 = vmatpush.msra.mxu0 0.0
    %2336 = vmatpush.msra.mxu0 0.0
    %2337 = vmatpush.msra.mxu0 0.0
    %2338 = vmatpush.msra.mxu0 0.0
    %2339 = vmatpush.msra.mxu0 0.0
    %2340 = vmatpush.msra.mxu0 0.0
    %2341 = vmatpush.msra.mxu0 %v490
    %2342 = vmatpush.msra.mxu0 %v489
    %2343 = vmatpush.msra.mxu0 %v488
    %2344 = vmatpush.msra.mxu0 %v487
    %2345 = vmatmul.f32.gmra.mxu0 %v2327
    %v2346 = vpop.f32.mrf.mxu0
    %v2347 = vadd.f32 0.0, %v2346
    %2348 = vdwg.mxu0
    %v2350 = vrot.slane %v2347, 2
    %v2351 = vrot.slane %v2347, 3
    %v2352 = vrot.slane %v2347, 4
    %v2353 = vrot.slane %v2347, 5
    %v2358 = vadd.f32 %v451, %v2350
    %v2359 = vadd.f32 %v452, %v2351
    %v2360 = vadd.f32 %v453, %v2352
    %v2361 = vadd.f32 %v454, %v2353
    %v2362 = vxor.u32 %v2358, 2147483648
    %v2363 = vxor.u32 %v2359, 2147483648
    %v2364 = vxor.u32 %v2360, 2147483648
    %v2365 = vxor.u32 %v2361, 2147483648
    %v2366 = vmul.f32 %v2362, 1.442695
    %v2367 = vpow.pop %v2366
    %v2368 = vmul.f32 %v2363, 1.442695
    %v2369 = vpow.pop %v2368
    %v2370 = vmul.f32 %v2364, 1.442695
    %v2371 = vpow.pop %v2370
    %v2372 = vmul.f32 %v2365, 1.442695
    %v2373 = vpow.pop %v2372
    %v2374 = vadd.f32 %v2367, 1.0
    %v2375 = vadd.f32 %v2369, 1.0
    %v2376 = vadd.f32 %v2371, 1.0
    %v2377 = vadd.f32 %v2373, 1.0
    %v2378 = vrcp.pop %v2374
    %v2379 = vmul.f32 %v2374, %v2378
    %v2380 = vsub.f32 1.0, %v2379
    %v2381 = vmul.f32 %v2378, %v2380
    %v2382 = vadd.f32 %v2378, %v2381
    %vm2383 = vweird.f32 %v2374
    %vm2384 = vweird.f32 %v2378
    %vm2385 = vmor %vm2383, %vm2384
    %v2386 = vsel %vm2385, %v2378, %v2382
    %v2387 = vand.u32 2147483647, %v2374
    %vm2388 = vcmp.eq.f32.partialorder %v2387, 8.507059e+37
    %v2389 = vand.u32 %v2374, 2147483648
    %v2390 = vor.u32 1.1754944e-38, %v2389
    %v2391 = vsel %vm2388, %v2390, %v2386
    %v2392 = vmul.f32 1.0, %v2391
    %v2393 = vrcp.pop %v2375
    %v2394 = vmul.f32 %v2375, %v2393
    %v2395 = vsub.f32 1.0, %v2394
    %v2396 = vmul.f32 %v2393, %v2395
    %v2397 = vadd.f32 %v2393, %v2396
    %vm2398 = vweird.f32 %v2375
    %vm2399 = vweird.f32 %v2393
    %vm2400 = vmor %vm2398, %vm2399
    %v2401 = vsel %vm2400, %v2393, %v2397
    %v2402 = vand.u32 2147483647, %v2375
    %vm2403 = vcmp.eq.f32.partialorder %v2402, 8.507059e+37
    %v2404 = vand.u32 %v2375, 2147483648
    %v2405 = vor.u32 1.1754944e-38, %v2404
    %v2406 = vsel %vm2403, %v2405, %v2401
    %v2407 = vmul.f32 1.0, %v2406
    %v2408 = vrcp.pop %v2376
    %v2409 = vmul.f32 %v2376, %v2408
    %v2410 = vsub.f32 1.0, %v2409
    %v2411 = vmul.f32 %v2408, %v2410
    %v2412 = vadd.f32 %v2408, %v2411
    %vm2413 = vweird.f32 %v2376
    %vm2414 = vweird.f32 %v2408
    %vm2415 = vmor %vm2413, %vm2414
    %v2416 = vsel %vm2415, %v2408, %v2412
    %v2417 = vand.u32 2147483647, %v2376
    %vm2418 = vcmp.eq.f32.partialorder %v2417, 8.507059e+37
    %v2419 = vand.u32 %v2376, 2147483648
    %v2420 = vor.u32 1.1754944e-38, %v2419
    %v2421 = vsel %vm2418, %v2420, %v2416
    %v2422 = vmul.f32 1.0, %v2421
    %v2423 = vrcp.pop %v2377
    %v2424 = vmul.f32 %v2377, %v2423
    %v2425 = vsub.f32 1.0, %v2424
    %v2426 = vmul.f32 %v2423, %v2425
    %v2427 = vadd.f32 %v2423, %v2426
    %vm2428 = vweird.f32 %v2377
    %vm2429 = vweird.f32 %v2423
    %vm2430 = vmor %vm2428, %vm2429
    %v2431 = vsel %vm2430, %v2423, %v2427
    %v2432 = vand.u32 2147483647, %v2377
    %vm2433 = vcmp.eq.f32.partialorder %v2432, 8.507059e+37
    %v2434 = vand.u32 %v2377, 2147483648
    %v2435 = vor.u32 1.1754944e-38, %v2434
    %v2436 = vsel %vm2433, %v2435, %v2431
    %v2437 = vmul.f32 1.0, %v2436
    %2438 = vmatpush.msra.mxu0 0.0
    %2439 = vmatpush.msra.mxu0 0.0
    %2440 = vmatpush.msra.mxu0 0.0
    %2441 = vmatpush.msra.mxu0 0.0
    %2442 = vmatpush.msra.mxu0 0.0
    %2443 = vmatpush.msra.mxu0 0.0
    %2444 = vmatpush.msra.mxu0 0.0
    %2445 = vmatpush.msra.mxu0 0.0
    %2446 = vmatpush.msra.mxu0 0.0
    %2447 = vmatpush.msra.mxu0 0.0
    %2448 = vmatpush.msra.mxu0 0.0
    %2449 = vmatpush.msra.mxu0 0.0
    %2450 = vmatpush.msra.mxu0 %v606
    %2451 = vmatpush.msra.mxu0 %v605
    %2452 = vmatpush.msra.mxu0 %v604
    %2453 = vmatpush.msra.mxu0 %v603
    %2454 = vmatmul.f32.gmra.mxu0 %v2327
    %v2455 = vpop.f32.mrf.mxu0
    %v2456 = vadd.f32 0.0, %v2455
    %2457 = vdwg.mxu0
    %v2459 = vrot.slane %v2456, 2
    %v2460 = vrot.slane %v2456, 3
    %v2461 = vrot.slane %v2456, 4
    %v2462 = vrot.slane %v2456, 5
    %v2467 = vadd.f32 %v467, %v2459
    %v2468 = vadd.f32 %v468, %v2460
    %v2469 = vadd.f32 %v469, %v2461
    %v2470 = vadd.f32 %v470, %v2462
    %v2471 = vxor.u32 %v2467, 2147483648
    %v2472 = vxor.u32 %v2468, 2147483648
    %v2473 = vxor.u32 %v2469, 2147483648
    %v2474 = vxor.u32 %v2470, 2147483648
    %v2475 = vmul.f32 %v2471, 1.442695
    %v2476 = vpow.pop %v2475
    %v2477 = vmul.f32 %v2472, 1.442695
    %v2478 = vpow.pop %v2477
    %v2479 = vmul.f32 %v2473, 1.442695
    %v2480 = vpow.pop %v2479
    %v2481 = vmul.f32 %v2474, 1.442695
    %v2482 = vpow.pop %v2481
    %v2483 = vadd.f32 %v2476, 1.0
    %v2484 = vadd.f32 %v2478, 1.0
    %v2485 = vadd.f32 %v2480, 1.0
    %v2486 = vadd.f32 %v2482, 1.0
    %v2487 = vrcp.pop %v2483
    %v2488 = vmul.f32 %v2483, %v2487
    %v2489 = vsub.f32 1.0, %v2488
    %v2490 = vmul.f32 %v2487, %v2489
    %v2491 = vadd.f32 %v2487, %v2490
    %vm2492 = vweird.f32 %v2483
    %vm2493 = vweird.f32 %v2487
    %vm2494 = vmor %vm2492, %vm2493
    %v2495 = vsel %vm2494, %v2487, %v2491
    %v2496 = vand.u32 2147483647, %v2483
    %vm2497 = vcmp.eq.f32.partialorder %v2496, 8.507059e+37
    %v2498 = vand.u32 %v2483, 2147483648
    %v2499 = vor.u32 1.1754944e-38, %v2498
    %v2500 = vsel %vm2497, %v2499, %v2495
    %v2501 = vmul.f32 1.0, %v2500
    %v2502 = vrcp.pop %v2484
    %v2503 = vmul.f32 %v2484, %v2502
    %v2504 = vsub.f32 1.0, %v2503
    %v2505 = vmul.f32 %v2502, %v2504
    %v2506 = vadd.f32 %v2502, %v2505
    %vm2507 = vweird.f32 %v2484
    %vm2508 = vweird.f32 %v2502
    %vm2509 = vmor %vm2507, %vm2508
    %v2510 = vsel %vm2509, %v2502, %v2506
    %v2511 = vand.u32 2147483647, %v2484
    %vm2512 = vcmp.eq.f32.partialorder %v2511, 8.507059e+37
    %v2513 = vand.u32 %v2484, 2147483648
    %v2514 = vor.u32 1.1754944e-38, %v2513
    %v2515 = vsel %vm2512, %v2514, %v2510
    %v2516 = vmul.f32 1.0, %v2515
    %v2517 = vrcp.pop %v2485
    %v2518 = vmul.f32 %v2485, %v2517
    %v2519 = vsub.f32 1.0, %v2518
    %v2520 = vmul.f32 %v2517, %v2519
    %v2521 = vadd.f32 %v2517, %v2520
    %vm2522 = vweird.f32 %v2485
    %vm2523 = vweird.f32 %v2517
    %vm2524 = vmor %vm2522, %vm2523
    %v2525 = vsel %vm2524, %v2517, %v2521
    %v2526 = vand.u32 2147483647, %v2485
    %vm2527 = vcmp.eq.f32.partialorder %v2526, 8.507059e+37
    %v2528 = vand.u32 %v2485, 2147483648
    %v2529 = vor.u32 1.1754944e-38, %v2528
    %v2530 = vsel %vm2527, %v2529, %v2525
    %v2531 = vmul.f32 1.0, %v2530
    %v2532 = vrcp.pop %v2486
    %v2533 = vmul.f32 %v2486, %v2532
    %v2534 = vsub.f32 1.0, %v2533
    %v2535 = vmul.f32 %v2532, %v2534
    %v2536 = vadd.f32 %v2532, %v2535
    %vm2537 = vweird.f32 %v2486
    %vm2538 = vweird.f32 %v2532
    %vm2539 = vmor %vm2537, %vm2538
    %v2540 = vsel %vm2539, %v2532, %v2536
    %v2541 = vand.u32 2147483647, %v2486
    %vm2542 = vcmp.eq.f32.partialorder %v2541, 8.507059e+37
    %v2543 = vand.u32 %v2486, 2147483648
    %v2544 = vor.u32 1.1754944e-38, %v2543
    %v2545 = vsel %vm2542, %v2544, %v2540
    %v2546 = vmul.f32 1.0, %v2545
    %v2547 = vrot.slane %v2312, 7
    %v2548 = vrot.slane %v2313, 7
    %v2549 = vrot.slane %v2314, 7
    %v2550 = vrot.slane %v2315, 7
    %v2555 = vmul.f32 %v2392, %v2547
    %v2556 = vmul.f32 %v2407, %v2548
    %v2557 = vmul.f32 %v2422, %v2549
    %v2558 = vmul.f32 %v2437, %v2550
    %v2563 = vrot.slane %v2555, 6
    %v2564 = vrot.slane %v2556, 5
    %v2565 = vsel %vm728, %v2564, %v2563
    %v2566 = vrot.slane %v2557, 4
    %v2567 = vsel %vm731, %v2566, %v2565
    %v2568 = vrot.slane %v2558, 3
    %v2569 = vsel %vm734, %v2568, %v2567
    %v2570 = vsel %vm491, %v2569, 0
    %2572 = vmatpush.msra.mxu0 0.0
    %2573 = vmatpush.msra.mxu0 0.0
    %2574 = vmatpush.msra.mxu0 0.0
    %2575 = vmatpush.msra.mxu0 0.0
    %2576 = vmatpush.msra.mxu0 0.0
    %2577 = vmatpush.msra.mxu0 0.0
    %2578 = vmatpush.msra.mxu0 0.0
    %2579 = vmatpush.msra.mxu0 0.0
    %2580 = vmatpush.msra.mxu0 0.0
    %2581 = vmatpush.msra.mxu0 0.0
    %2582 = vmatpush.msra.mxu0 0.0
    %2583 = vmatpush.msra.mxu0 0.0
    %2584 = vmatpush.msra.mxu0 %v722
    %2585 = vmatpush.msra.mxu0 %v721
    %2586 = vmatpush.msra.mxu0 %v720
    %2587 = vmatpush.msra.mxu0 %v719
    %2588 = vmatmul.f32.gmra.mxu0 %v2570
    %v2589 = vpop.f32.mrf.mxu0
    %v2590 = vadd.f32 0.0, %v2589
    %2591 = vdwg.mxu0
    %v2593 = vrot.slane %v2590, 2
    %v2594 = vrot.slane %v2590, 3
    %v2595 = vrot.slane %v2590, 4
    %v2596 = vrot.slane %v2590, 5
    %v2601 = vadd.f32 %v483, %v2593
    %v2602 = vadd.f32 %v484, %v2594
    %v2603 = vadd.f32 %v485, %v2595
    %v2604 = vadd.f32 %v486, %v2596
    %v2605 = vtanh.pop %v2601
    %v2606 = vtanh.pop %v2602
    %v2607 = vtanh.pop %v2603
    %v2608 = vtanh.pop %v2604
    %v2609 = vmul.f32 %v2501, %v2547
    %v2610 = vmul.f32 %v2516, %v2548
    %v2611 = vmul.f32 %v2531, %v2549
    %v2612 = vmul.f32 %v2546, %v2550
    %v2613 = vsub.f32 1.0, %v2501
    %v2614 = vsub.f32 1.0, %v2516
    %v2615 = vsub.f32 1.0, %v2531
    %v2616 = vsub.f32 1.0, %v2546
    %v2617 = vmul.f32 %v2613, %v2605
    %v2618 = vmul.f32 %v2614, %v2606
    %v2619 = vmul.f32 %v2615, %v2607
    %v2620 = vmul.f32 %v2616, %v2608
    %v2621 = vadd.f32 %v2609, %v2617
    %v2622 = vadd.f32 %v2610, %v2618
    %v2623 = vadd.f32 %v2611, %v2619
    %v2624 = vadd.f32 %v2612, %v2620
    %v2629 = vrot.slane %v2621, 6
    %v2630 = vrot.slane %v2622, 5
    %v2631 = vsel %vm728, %v2630, %v2629
    %v2632 = vrot.slane %v2623, 4
    %v2633 = vsel %vm731, %v2632, %v2631
    %v2634 = vrot.slane %v2624, 3
    %v2635 = vsel %vm734, %v2634, %v2633
    %v2636 = vsel %vm491, %v2635, 0
    %2638 = vmatpush.msra.mxu0 0.0
    %2639 = vmatpush.msra.mxu0 0.0
    %2640 = vmatpush.msra.mxu0 0.0
    %2641 = vmatpush.msra.mxu0 0.0
    %2642 = vmatpush.msra.mxu0 0.0
    %2643 = vmatpush.msra.mxu0 0.0
    %2644 = vmatpush.msra.mxu0 0.0
    %2645 = vmatpush.msra.mxu0 0.0
    %2646 = vmatpush.msra.mxu0 0.0
    %2647 = vmatpush.msra.mxu0 0.0
    %2648 = vmatpush.msra.mxu0 0.0
    %2649 = vmatpush.msra.mxu0 0.0
    %2650 = vmatpush.msra.mxu0 %v490
    %2651 = vmatpush.msra.mxu0 %v489
    %2652 = vmatpush.msra.mxu0 %v488
    %2653 = vmatpush.msra.mxu0 %v487
    %2654 = vmatmul.f32.gmra.mxu0 %v2636
    %v2655 = vpop.f32.mrf.mxu0
    %v2656 = vadd.f32 0.0, %v2655
    %2657 = vdwg.mxu0
    %v2659 = vrot.slane %v2656, 1
    %v2660 = vrot.slane %v2656, 2
    %v2661 = vrot.slane %v2656, 3
    %v2662 = vrot.slane %v2656, 4
    %v2667 = vadd.f32 %v451, %v2659
    %v2668 = vadd.f32 %v452, %v2660
    %v2669 = vadd.f32 %v453, %v2661
    %v2670 = vadd.f32 %v454, %v2662
    %v2671 = vxor.u32 %v2667, 2147483648
    %v2672 = vxor.u32 %v2668, 2147483648
    %v2673 = vxor.u32 %v2669, 2147483648
    %v2674 = vxor.u32 %v2670, 2147483648
    %v2675 = vmul.f32 %v2671, 1.442695
    %v2676 = vpow.pop %v2675
    %v2677 = vmul.f32 %v2672, 1.442695
    %v2678 = vpow.pop %v2677
    %v2679 = vmul.f32 %v2673, 1.442695
    %v2680 = vpow.pop %v2679
    %v2681 = vmul.f32 %v2674, 1.442695
    %v2682 = vpow.pop %v2681
    %v2683 = vadd.f32 %v2676, 1.0
    %v2684 = vadd.f32 %v2678, 1.0
    %v2685 = vadd.f32 %v2680, 1.0
    %v2686 = vadd.f32 %v2682, 1.0
    %v2687 = vrcp.pop %v2683
    %v2688 = vmul.f32 %v2683, %v2687
    %v2689 = vsub.f32 1.0, %v2688
    %v2690 = vmul.f32 %v2687, %v2689
    %v2691 = vadd.f32 %v2687, %v2690
    %vm2692 = vweird.f32 %v2683
    %vm2693 = vweird.f32 %v2687
    %vm2694 = vmor %vm2692, %vm2693
    %v2695 = vsel %vm2694, %v2687, %v2691
    %v2696 = vand.u32 2147483647, %v2683
    %vm2697 = vcmp.eq.f32.partialorder %v2696, 8.507059e+37
    %v2698 = vand.u32 %v2683, 2147483648
    %v2699 = vor.u32 1.1754944e-38, %v2698
    %v2700 = vsel %vm2697, %v2699, %v2695
    %v2701 = vmul.f32 1.0, %v2700
    %v2702 = vrcp.pop %v2684
    %v2703 = vmul.f32 %v2684, %v2702
    %v2704 = vsub.f32 1.0, %v2703
    %v2705 = vmul.f32 %v2702, %v2704
    %v2706 = vadd.f32 %v2702, %v2705
    %vm2707 = vweird.f32 %v2684
    %vm2708 = vweird.f32 %v2702
    %vm2709 = vmor %vm2707, %vm2708
    %v2710 = vsel %vm2709, %v2702, %v2706
    %v2711 = vand.u32 2147483647, %v2684
    %vm2712 = vcmp.eq.f32.partialorder %v2711, 8.507059e+37
    %v2713 = vand.u32 %v2684, 2147483648
    %v2714 = vor.u32 1.1754944e-38, %v2713
    %v2715 = vsel %vm2712, %v2714, %v2710
    %v2716 = vmul.f32 1.0, %v2715
    %v2717 = vrcp.pop %v2685
    %v2718 = vmul.f32 %v2685, %v2717
    %v2719 = vsub.f32 1.0, %v2718
    %v2720 = vmul.f32 %v2717, %v2719
    %v2721 = vadd.f32 %v2717, %v2720
    %vm2722 = vweird.f32 %v2685
    %vm2723 = vweird.f32 %v2717
    %vm2724 = vmor %vm2722, %vm2723
    %v2725 = vsel %vm2724, %v2717, %v2721
    %v2726 = vand.u32 2147483647, %v2685
    %vm2727 = vcmp.eq.f32.partialorder %v2726, 8.507059e+37
    %v2728 = vand.u32 %v2685, 2147483648
    %v2729 = vor.u32 1.1754944e-38, %v2728
    %v2730 = vsel %vm2727, %v2729, %v2725
    %v2731 = vmul.f32 1.0, %v2730
    %v2732 = vrcp.pop %v2686
    %v2733 = vmul.f32 %v2686, %v2732
    %v2734 = vsub.f32 1.0, %v2733
    %v2735 = vmul.f32 %v2732, %v2734
    %v2736 = vadd.f32 %v2732, %v2735
    %vm2737 = vweird.f32 %v2686
    %vm2738 = vweird.f32 %v2732
    %vm2739 = vmor %vm2737, %vm2738
    %v2740 = vsel %vm2739, %v2732, %v2736
    %v2741 = vand.u32 2147483647, %v2686
    %vm2742 = vcmp.eq.f32.partialorder %v2741, 8.507059e+37
    %v2743 = vand.u32 %v2686, 2147483648
    %v2744 = vor.u32 1.1754944e-38, %v2743
    %v2745 = vsel %vm2742, %v2744, %v2740
    %v2746 = vmul.f32 1.0, %v2745
    %2747 = vmatpush.msra.mxu0 0.0
    %2748 = vmatpush.msra.mxu0 0.0
    %2749 = vmatpush.msra.mxu0 0.0
    %2750 = vmatpush.msra.mxu0 0.0
    %2751 = vmatpush.msra.mxu0 0.0
    %2752 = vmatpush.msra.mxu0 0.0
    %2753 = vmatpush.msra.mxu0 0.0
    %2754 = vmatpush.msra.mxu0 0.0
    %2755 = vmatpush.msra.mxu0 0.0
    %2756 = vmatpush.msra.mxu0 0.0
    %2757 = vmatpush.msra.mxu0 0.0
    %2758 = vmatpush.msra.mxu0 0.0
    %2759 = vmatpush.msra.mxu0 %v606
    %2760 = vmatpush.msra.mxu0 %v605
    %2761 = vmatpush.msra.mxu0 %v604
    %2762 = vmatpush.msra.mxu0 %v603
    %2763 = vmatmul.f32.gmra.mxu0 %v2636
    %v2764 = vpop.f32.mrf.mxu0
    %v2765 = vadd.f32 0.0, %v2764
    %2766 = vdwg.mxu0
    %v2768 = vrot.slane %v2765, 1
    %v2769 = vrot.slane %v2765, 2
    %v2770 = vrot.slane %v2765, 3
    %v2771 = vrot.slane %v2765, 4
    %v2776 = vadd.f32 %v467, %v2768
    %v2777 = vadd.f32 %v468, %v2769
    %v2778 = vadd.f32 %v469, %v2770
    %v2779 = vadd.f32 %v470, %v2771
    %v2780 = vxor.u32 %v2776, 2147483648
    %v2781 = vxor.u32 %v2777, 2147483648
    %v2782 = vxor.u32 %v2778, 2147483648
    %v2783 = vxor.u32 %v2779, 2147483648
    %v2784 = vmul.f32 %v2780, 1.442695
    %v2785 = vpow.pop %v2784
    %v2786 = vmul.f32 %v2781, 1.442695
    %v2787 = vpow.pop %v2786
    %v2788 = vmul.f32 %v2782, 1.442695
    %v2789 = vpow.pop %v2788
    %v2790 = vmul.f32 %v2783, 1.442695
    %v2791 = vpow.pop %v2790
    %v2792 = vadd.f32 %v2785, 1.0
    %v2793 = vadd.f32 %v2787, 1.0
    %v2794 = vadd.f32 %v2789, 1.0
    %v2795 = vadd.f32 %v2791, 1.0
    %v2796 = vrcp.pop %v2792
    %v2797 = vmul.f32 %v2792, %v2796
    %v2798 = vsub.f32 1.0, %v2797
    %v2799 = vmul.f32 %v2796, %v2798
    %v2800 = vadd.f32 %v2796, %v2799
    %vm2801 = vweird.f32 %v2792
    %vm2802 = vweird.f32 %v2796
    %vm2803 = vmor %vm2801, %vm2802
    %v2804 = vsel %vm2803, %v2796, %v2800
    %v2805 = vand.u32 2147483647, %v2792
    %vm2806 = vcmp.eq.f32.partialorder %v2805, 8.507059e+37
    %v2807 = vand.u32 %v2792, 2147483648
    %v2808 = vor.u32 1.1754944e-38, %v2807
    %v2809 = vsel %vm2806, %v2808, %v2804
    %v2810 = vmul.f32 1.0, %v2809
    %v2811 = vrcp.pop %v2793
    %v2812 = vmul.f32 %v2793, %v2811
    %v2813 = vsub.f32 1.0, %v2812
    %v2814 = vmul.f32 %v2811, %v2813
    %v2815 = vadd.f32 %v2811, %v2814
    %vm2816 = vweird.f32 %v2793
    %vm2817 = vweird.f32 %v2811
    %vm2818 = vmor %vm2816, %vm2817
    %v2819 = vsel %vm2818, %v2811, %v2815
    %v2820 = vand.u32 2147483647, %v2793
    %vm2821 = vcmp.eq.f32.partialorder %v2820, 8.507059e+37
    %v2822 = vand.u32 %v2793, 2147483648
    %v2823 = vor.u32 1.1754944e-38, %v2822
    %v2824 = vsel %vm2821, %v2823, %v2819
    %v2825 = vmul.f32 1.0, %v2824
    %v2826 = vrcp.pop %v2794
    %v2827 = vmul.f32 %v2794, %v2826
    %v2828 = vsub.f32 1.0, %v2827
    %v2829 = vmul.f32 %v2826, %v2828
    %v2830 = vadd.f32 %v2826, %v2829
    %vm2831 = vweird.f32 %v2794
    %vm2832 = vweird.f32 %v2826
    %vm2833 = vmor %vm2831, %vm2832
    %v2834 = vsel %vm2833, %v2826, %v2830
    %v2835 = vand.u32 2147483647, %v2794
    %vm2836 = vcmp.eq.f32.partialorder %v2835, 8.507059e+37
    %v2837 = vand.u32 %v2794, 2147483648
    %v2838 = vor.u32 1.1754944e-38, %v2837
    %v2839 = vsel %vm2836, %v2838, %v2834
    %v2840 = vmul.f32 1.0, %v2839
    %v2841 = vrcp.pop %v2795
    %v2842 = vmul.f32 %v2795, %v2841
    %v2843 = vsub.f32 1.0, %v2842
    %v2844 = vmul.f32 %v2841, %v2843
    %v2845 = vadd.f32 %v2841, %v2844
    %vm2846 = vweird.f32 %v2795
    %vm2847 = vweird.f32 %v2841
    %vm2848 = vmor %vm2846, %vm2847
    %v2849 = vsel %vm2848, %v2841, %v2845
    %v2850 = vand.u32 2147483647, %v2795
    %vm2851 = vcmp.eq.f32.partialorder %v2850, 8.507059e+37
    %v2852 = vand.u32 %v2795, 2147483648
    %v2853 = vor.u32 1.1754944e-38, %v2852
    %v2854 = vsel %vm2851, %v2853, %v2849
    %v2855 = vmul.f32 1.0, %v2854
    %v2856 = vrot.slane %v2621, 7
    %v2857 = vrot.slane %v2622, 7
    %v2858 = vrot.slane %v2623, 7
    %v2859 = vrot.slane %v2624, 7
    %v2864 = vmul.f32 %v2701, %v2856
    %v2865 = vmul.f32 %v2716, %v2857
    %v2866 = vmul.f32 %v2731, %v2858
    %v2867 = vmul.f32 %v2746, %v2859
    %v2872 = vrot.slane %v2864, 7
    %v2873 = vrot.slane %v2865, 6
    %v2874 = vsel %vm728, %v2873, %v2872
    %v2875 = vrot.slane %v2866, 5
    %v2876 = vsel %vm731, %v2875, %v2874
    %v2877 = vrot.slane %v2867, 4
    %v2878 = vsel %vm734, %v2877, %v2876
    %v2879 = vsel %vm491, %v2878, 0
    %2881 = vmatpush.msra.mxu0 0.0
    %2882 = vmatpush.msra.mxu0 0.0
    %2883 = vmatpush.msra.mxu0 0.0
    %2884 = vmatpush.msra.mxu0 0.0
    %2885 = vmatpush.msra.mxu0 0.0
    %2886 = vmatpush.msra.mxu0 0.0
    %2887 = vmatpush.msra.mxu0 0.0
    %2888 = vmatpush.msra.mxu0 0.0
    %2889 = vmatpush.msra.mxu0 0.0
    %2890 = vmatpush.msra.mxu0 0.0
    %2891 = vmatpush.msra.mxu0 0.0
    %2892 = vmatpush.msra.mxu0 0.0
    %2893 = vmatpush.msra.mxu0 %v722
    %2894 = vmatpush.msra.mxu0 %v721
    %2895 = vmatpush.msra.mxu0 %v720
    %2896 = vmatpush.msra.mxu0 %v719
    %2897 = vmatmul.f32.gmra.mxu0 %v2879
    %v2898 = vpop.f32.mrf.mxu0
    %v2899 = vadd.f32 0.0, %v2898
    %2900 = vdwg.mxu0
    %v2902 = vrot.slane %v2899, 1
    %v2903 = vrot.slane %v2899, 2
    %v2904 = vrot.slane %v2899, 3
    %v2905 = vrot.slane %v2899, 4
    %v2910 = vadd.f32 %v483, %v2902
    %v2911 = vadd.f32 %v484, %v2903
    %v2912 = vadd.f32 %v485, %v2904
    %v2913 = vadd.f32 %v486, %v2905
    %v2914 = vtanh.pop %v2910
    %v2915 = vtanh.pop %v2911
    %v2916 = vtanh.pop %v2912
    %v2917 = vtanh.pop %v2913
    %v2918 = vmul.f32 %v2810, %v2856
    %v2919 = vmul.f32 %v2825, %v2857
    %v2920 = vmul.f32 %v2840, %v2858
    %v2921 = vmul.f32 %v2855, %v2859
    %v2922 = vsub.f32 1.0, %v2810
    %v2923 = vsub.f32 1.0, %v2825
    %v2924 = vsub.f32 1.0, %v2840
    %v2925 = vsub.f32 1.0, %v2855
    %v2926 = vmul.f32 %v2922, %v2914
    %v2927 = vmul.f32 %v2923, %v2915
    %v2928 = vmul.f32 %v2924, %v2916
    %v2929 = vmul.f32 %v2925, %v2917
    %v2930 = vadd.f32 %v2918, %v2926
    %v2931 = vadd.f32 %v2919, %v2927
    %v2932 = vadd.f32 %v2920, %v2928
    %v2933 = vadd.f32 %v2921, %v2929
    %v2934 = vld [vmem:[#allocation17] sm:$0xff]
    %v2935 = vld [vmem:[#allocation17 + $0x8] sm:$0xff]
    %v2936 = vld [vmem:[#allocation17 + $0x10] sm:$0xff]
    %v2937 = vld [vmem:[#allocation17 + $0x18] sm:$0xff]
    %v2938 = vld [vmem:[#allocation22] sm:$0xff]
    %v2939 = vld [vmem:[#allocation22 + $0x8] sm:$0xff]
    %v2940 = vld [vmem:[#allocation22 + $0x10] sm:$0xff]
    %v2941 = vld [vmem:[#allocation22 + $0x18] sm:$0xff]
    %2942 = vmatpush.msra.mxu0 0.0
    %2943 = vmatpush.msra.mxu0 0.0
    %2944 = vmatpush.msra.mxu0 0.0
    %2945 = vmatpush.msra.mxu0 0.0
    %2946 = vmatpush.msra.mxu0 0.0
    %2947 = vmatpush.msra.mxu0 0.0
    %2948 = vmatpush.msra.mxu0 0.0
    %2949 = vmatpush.msra.mxu0 0.0
    %2950 = vmatpush.msra.mxu0 0.0
    %2951 = vmatpush.msra.mxu0 0.0
    %2952 = vmatpush.msra.mxu0 0.0
    %2953 = vmatpush.msra.mxu0 0.0
    %2954 = vmatpush.msra.mxu0 %v2941
    %2955 = vmatpush.msra.mxu0 %v2940
    %2956 = vmatpush.msra.mxu0 %v2939
    %2957 = vmatpush.msra.mxu0 %v2938
    %2958 = vmatmul.f32.gmra.mxu0 %v493
    %v2959 = vpop.f32.mrf.mxu0
    %v2960 = vadd.f32 0.0, %v2959
    %2961 = vdwg.mxu0
    %2962 = vmatpush.msra.mxu0 0.0
    %2963 = vmatpush.msra.mxu0 0.0
    %2964 = vmatpush.msra.mxu0 0.0
    %2965 = vmatpush.msra.mxu0 0.0
    %2966 = vmatpush.msra.mxu0 0.0
    %2967 = vmatpush.msra.mxu0 0.0
    %2968 = vmatpush.msra.mxu0 0.0
    %2969 = vmatpush.msra.mxu0 0.0
    %2970 = vmatpush.msra.mxu0 0.0
    %2971 = vmatpush.msra.mxu0 0.0
    %2972 = vmatpush.msra.mxu0 0.0
    %2973 = vmatpush.msra.mxu0 0.0
    %2974 = vmatpush.msra.mxu0 %v2937
    %2975 = vmatpush.msra.mxu0 %v2936
    %2976 = vmatpush.msra.mxu0 %v2935
    %2977 = vmatpush.msra.mxu0 %v2934
    %2978 = vmatmul.f32.gmra.mxu0 %v800
    %v2979 = vpop.f32.mrf.mxu0
    %v2980 = vadd.f32 %v2960, %v2979
    %2981 = vdwg.mxu0
    %v2982 = vld [vmem:[#allocation26] sm:$0x1]
    %v2984 = vperm.slane %v2982, 0
    %v2986 = vadd.f32 %v2980, %v2984
    %v2987 = vxor.u32 %v2986, 2147483648
    %v2988 = vmul.f32 %v2987, 1.442695
    %v2989 = vpow.pop %v2988
    %v2990 = vadd.f32 %v2989, 1.0
    %v2991 = vrcp.pop %v2990
    %v2992 = vmul.f32 %v2990, %v2991
    %v2993 = vsub.f32 1.0, %v2992
    %v2994 = vmul.f32 %v2991, %v2993
    %v2995 = vadd.f32 %v2991, %v2994
    %vm2996 = vweird.f32 %v2990
    %vm2997 = vweird.f32 %v2991
    %vm2998 = vmor %vm2996, %vm2997
    %v2999 = vsel %vm2998, %v2991, %v2995
    %v3000 = vand.u32 2147483647, %v2990
    %vm3001 = vcmp.eq.f32.partialorder %v3000, 8.507059e+37
    %v3002 = vand.u32 %v2990, 2147483648
    %v3003 = vor.u32 1.1754944e-38, %v3002
    %v3004 = vsel %vm3001, %v3003, %v2999
    %v3005 = vmul.f32 1.0, %v3004
    %v3006 = vld [vmem:[#allocation19] sm:$0xff]
    %v3007 = vld [vmem:[#allocation19 + $0x8] sm:$0xff]
    %v3008 = vld [vmem:[#allocation19 + $0x10] sm:$0xff]
    %v3009 = vld [vmem:[#allocation19 + $0x18] sm:$0xff]
    %v3010 = vld [vmem:[#allocation23] sm:$0xff]
    %v3011 = vld [vmem:[#allocation23 + $0x8] sm:$0xff]
    %v3012 = vld [vmem:[#allocation23 + $0x10] sm:$0xff]
    %v3013 = vld [vmem:[#allocation23 + $0x18] sm:$0xff]
    %3014 = vmatpush.msra.mxu0 0.0
    %3015 = vmatpush.msra.mxu0 0.0
    %3016 = vmatpush.msra.mxu0 0.0
    %3017 = vmatpush.msra.mxu0 0.0
    %3018 = vmatpush.msra.mxu0 0.0
    %3019 = vmatpush.msra.mxu0 0.0
    %3020 = vmatpush.msra.mxu0 0.0
    %3021 = vmatpush.msra.mxu0 0.0
    %3022 = vmatpush.msra.mxu0 0.0
    %3023 = vmatpush.msra.mxu0 0.0
    %3024 = vmatpush.msra.mxu0 0.0
    %3025 = vmatpush.msra.mxu0 0.0
    %3026 = vmatpush.msra.mxu0 %v3013
    %3027 = vmatpush.msra.mxu0 %v3012
    %3028 = vmatpush.msra.mxu0 %v3011
    %3029 = vmatpush.msra.mxu0 %v3010
    %3030 = vmatmul.f32.gmra.mxu0 %v493
    %v3031 = vpop.f32.mrf.mxu0
    %v3032 = vadd.f32 0.0, %v3031
    %3033 = vdwg.mxu0
    %3034 = vmatpush.msra.mxu0 0.0
    %3035 = vmatpush.msra.mxu0 0.0
    %3036 = vmatpush.msra.mxu0 0.0
    %3037 = vmatpush.msra.mxu0 0.0
    %3038 = vmatpush.msra.mxu0 0.0
    %3039 = vmatpush.msra.mxu0 0.0
    %3040 = vmatpush.msra.mxu0 0.0
    %3041 = vmatpush.msra.mxu0 0.0
    %3042 = vmatpush.msra.mxu0 0.0
    %3043 = vmatpush.msra.mxu0 0.0
    %3044 = vmatpush.msra.mxu0 0.0
    %3045 = vmatpush.msra.mxu0 0.0
    %3046 = vmatpush.msra.mxu0 %v3009
    %3047 = vmatpush.msra.mxu0 %v3008
    %3048 = vmatpush.msra.mxu0 %v3007
    %3049 = vmatpush.msra.mxu0 %v3006
    %3050 = vmatmul.f32.gmra.mxu0 %v800
    %v3051 = vpop.f32.mrf.mxu0
    %v3052 = vadd.f32 %v3032, %v3051
    %3053 = vdwg.mxu0
    %v3054 = vld [vmem:[#allocation28] sm:$0x1]
    %v3056 = vperm.slane %v3054, 0
    %v3058 = vadd.f32 %v3052, %v3056
    %v3059 = vxor.u32 %v3058, 2147483648
    %v3060 = vmul.f32 %v3059, 1.442695
    %v3061 = vpow.pop %v3060
    %v3062 = vadd.f32 %v3061, 1.0
    %v3063 = vrcp.pop %v3062
    %v3064 = vmul.f32 %v3062, %v3063
    %v3065 = vsub.f32 1.0, %v3064
    %v3066 = vmul.f32 %v3063, %v3065
    %v3067 = vadd.f32 %v3063, %v3066
    %vm3068 = vweird.f32 %v3062
    %vm3069 = vweird.f32 %v3063
    %vm3070 = vmor %vm3068, %vm3069
    %v3071 = vsel %vm3070, %v3063, %v3067
    %v3072 = vand.u32 2147483647, %v3062
    %vm3073 = vcmp.eq.f32.partialorder %v3072, 8.507059e+37
    %v3074 = vand.u32 %v3062, 2147483648
    %v3075 = vor.u32 1.1754944e-38, %v3074
    %v3076 = vsel %vm3073, %v3075, %v3071
    %v3077 = vmul.f32 1.0, %v3076
    %v3078 = vld [vmem:[#allocation20] sm:$0xff]
    %v3079 = vld [vmem:[#allocation20 + $0x8] sm:$0xff]
    %v3080 = vld [vmem:[#allocation20 + $0x10] sm:$0xff]
    %v3081 = vld [vmem:[#allocation20 + $0x18] sm:$0xff]
    %v3082 = vmul.f32 %v3005, 0.0
    %v3083 = vld [vmem:[#allocation25] sm:$0xff]
    %v3084 = vld [vmem:[#allocation25 + $0x8] sm:$0xff]
    %v3085 = vld [vmem:[#allocation25 + $0x10] sm:$0xff]
    %v3086 = vld [vmem:[#allocation25 + $0x18] sm:$0xff]
    %v3088 = vsel %vm491, %v3082, 0
    %3090 = vmatpush.msra.mxu0 0.0
    %3091 = vmatpush.msra.mxu0 0.0
    %3092 = vmatpush.msra.mxu0 0.0
    %3093 = vmatpush.msra.mxu0 0.0
    %3094 = vmatpush.msra.mxu0 0.0
    %3095 = vmatpush.msra.mxu0 0.0
    %3096 = vmatpush.msra.mxu0 0.0
    %3097 = vmatpush.msra.mxu0 0.0
    %3098 = vmatpush.msra.mxu0 0.0
    %3099 = vmatpush.msra.mxu0 0.0
    %3100 = vmatpush.msra.mxu0 0.0
    %3101 = vmatpush.msra.mxu0 0.0
    %3102 = vmatpush.msra.mxu0 %v3086
    %3103 = vmatpush.msra.mxu0 %v3085
    %3104 = vmatpush.msra.mxu0 %v3084
    %3105 = vmatpush.msra.mxu0 %v3083
    %3106 = vmatmul.f32.gmra.mxu0 %v3088
    %v3107 = vpop.f32.mrf.mxu0
    %v3108 = vadd.f32 0.0, %v3107
    %3109 = vdwg.mxu0
    %3110 = vmatpush.msra.mxu0 0.0
    %3111 = vmatpush.msra.mxu0 0.0
    %3112 = vmatpush.msra.mxu0 0.0
    %3113 = vmatpush.msra.mxu0 0.0
    %3114 = vmatpush.msra.mxu0 0.0
    %3115 = vmatpush.msra.mxu0 0.0
    %3116 = vmatpush.msra.mxu0 0.0
    %3117 = vmatpush.msra.mxu0 0.0
    %3118 = vmatpush.msra.mxu0 0.0
    %3119 = vmatpush.msra.mxu0 0.0
    %3120 = vmatpush.msra.mxu0 0.0
    %3121 = vmatpush.msra.mxu0 0.0
    %3122 = vmatpush.msra.mxu0 %v3081
    %3123 = vmatpush.msra.mxu0 %v3080
    %3124 = vmatpush.msra.mxu0 %v3079
    %3125 = vmatpush.msra.mxu0 %v3078
    %3126 = vmatmul.f32.gmra.mxu0 %v800
    %v3127 = vpop.f32.mrf.mxu0
    %v3128 = vadd.f32 %v3108, %v3127
    %3129 = vdwg.mxu0
    %v3130 = vld [vmem:[#allocation29] sm:$0x1]
    %v3132 = vperm.slane %v3130, 0
    %v3134 = vadd.f32 %v3128, %v3132
    %v3135 = vtanh.pop %v3134
    %v3136 = vmul.f32 %v3077, 0.0
    %v3137 = vsub.f32 1.0, %v3077
    %v3138 = vmul.f32 %v3137, %v3135
    %v3139 = vadd.f32 %v3136, %v3138
    %v3141 = vsel %vm491, %v3139, 0
    %3143 = vmatpush.msra.mxu0 0.0
    %3144 = vmatpush.msra.mxu0 0.0
    %3145 = vmatpush.msra.mxu0 0.0
    %3146 = vmatpush.msra.mxu0 0.0
    %3147 = vmatpush.msra.mxu0 0.0
    %3148 = vmatpush.msra.mxu0 0.0
    %3149 = vmatpush.msra.mxu0 0.0
    %3150 = vmatpush.msra.mxu0 0.0
    %3151 = vmatpush.msra.mxu0 0.0
    %3152 = vmatpush.msra.mxu0 0.0
    %3153 = vmatpush.msra.mxu0 0.0
    %3154 = vmatpush.msra.mxu0 0.0
    %3155 = vmatpush.msra.mxu0 %v2941
    %3156 = vmatpush.msra.mxu0 %v2940
    %3157 = vmatpush.msra.mxu0 %v2939
    %3158 = vmatpush.msra.mxu0 %v2938
    %3159 = vmatmul.f32.gmra.mxu0 %v3141
    %v3160 = vpop.f32.mrf.mxu0
    %v3161 = vadd.f32 0.0, %v3160
    %3162 = vdwg.mxu0
    %3163 = vmatpush.msra.mxu0 0.0
    %3164 = vmatpush.msra.mxu0 0.0
    %3165 = vmatpush.msra.mxu0 0.0
    %3166 = vmatpush.msra.mxu0 0.0
    %3167 = vmatpush.msra.mxu0 0.0
    %3168 = vmatpush.msra.mxu0 0.0
    %3169 = vmatpush.msra.mxu0 0.0
    %3170 = vmatpush.msra.mxu0 0.0
    %3171 = vmatpush.msra.mxu0 0.0
    %3172 = vmatpush.msra.mxu0 0.0
    %3173 = vmatpush.msra.mxu0 0.0
    %3174 = vmatpush.msra.mxu0 0.0
    %3175 = vmatpush.msra.mxu0 %v2937
    %3176 = vmatpush.msra.mxu0 %v2936
    %3177 = vmatpush.msra.mxu0 %v2935
    %3178 = vmatpush.msra.mxu0 %v2934
    %3179 = vmatmul.f32.gmra.mxu0 %v1103
    %v3180 = vpop.f32.mrf.mxu0
    %v3181 = vadd.f32 %v3161, %v3180
    %3182 = vdwg.mxu0
    %v3183 = vadd.f32 %v3181, %v2984
    %v3184 = vxor.u32 %v3183, 2147483648
    %v3185 = vmul.f32 %v3184, 1.442695
    %v3186 = vpow.pop %v3185
    %v3187 = vadd.f32 %v3186, 1.0
    %v3188 = vrcp.pop %v3187
    %v3189 = vmul.f32 %v3187, %v3188
    %v3190 = vsub.f32 1.0, %v3189
    %v3191 = vmul.f32 %v3188, %v3190
    %v3192 = vadd.f32 %v3188, %v3191
    %vm3193 = vweird.f32 %v3187
    %vm3194 = vweird.f32 %v3188
    %vm3195 = vmor %vm3193, %vm3194
    %v3196 = vsel %vm3195, %v3188, %v3192
    %v3197 = vand.u32 2147483647, %v3187
    %vm3198 = vcmp.eq.f32.partialorder %v3197, 8.507059e+37
    %v3199 = vand.u32 %v3187, 2147483648
    %v3200 = vor.u32 1.1754944e-38, %v3199
    %v3201 = vsel %vm3198, %v3200, %v3196
    %v3202 = vmul.f32 1.0, %v3201
    %3203 = vmatpush.msra.mxu0 0.0
    %3204 = vmatpush.msra.mxu0 0.0
    %3205 = vmatpush.msra.mxu0 0.0
    %3206 = vmatpush.msra.mxu0 0.0
    %3207 = vmatpush.msra.mxu0 0.0
    %3208 = vmatpush.msra.mxu0 0.0
    %3209 = vmatpush.msra.mxu0 0.0
    %3210 = vmatpush.msra.mxu0 0.0
    %3211 = vmatpush.msra.mxu0 0.0
    %3212 = vmatpush.msra.mxu0 0.0
    %3213 = vmatpush.msra.mxu0 0.0
    %3214 = vmatpush.msra.mxu0 0.0
    %3215 = vmatpush.msra.mxu0 %v3013
    %3216 = vmatpush.msra.mxu0 %v3012
    %3217 = vmatpush.msra.mxu0 %v3011
    %3218 = vmatpush.msra.mxu0 %v3010
    %3219 = vmatmul.f32.gmra.mxu0 %v3141
    %v3220 = vpop.f32.mrf.mxu0
    %v3221 = vadd.f32 0.0, %v3220
    %3222 = vdwg.mxu0
    %3223 = vmatpush.msra.mxu0 0.0
    %3224 = vmatpush.msra.mxu0 0.0
    %3225 = vmatpush.msra.mxu0 0.0
    %3226 = vmatpush.msra.mxu0 0.0
    %3227 = vmatpush.msra.mxu0 0.0
    %3228 = vmatpush.msra.mxu0 0.0
    %3229 = vmatpush.msra.mxu0 0.0
    %3230 = vmatpush.msra.mxu0 0.0
    %3231 = vmatpush.msra.mxu0 0.0
    %3232 = vmatpush.msra.mxu0 0.0
    %3233 = vmatpush.msra.mxu0 0.0
    %3234 = vmatpush.msra.mxu0 0.0
    %3235 = vmatpush.msra.mxu0 %v3009
    %3236 = vmatpush.msra.mxu0 %v3008
    %3237 = vmatpush.msra.mxu0 %v3007
    %3238 = vmatpush.msra.mxu0 %v3006
    %3239 = vmatmul.f32.gmra.mxu0 %v1103
    %v3240 = vpop.f32.mrf.mxu0
    %v3241 = vadd.f32 %v3221, %v3240
    %3242 = vdwg.mxu0
    %v3243 = vadd.f32 %v3241, %v3056
    %v3244 = vxor.u32 %v3243, 2147483648
    %v3245 = vmul.f32 %v3244, 1.442695
    %v3246 = vpow.pop %v3245
    %v3247 = vadd.f32 %v3246, 1.0
    %v3248 = vrcp.pop %v3247
    %v3249 = vmul.f32 %v3247, %v3248
    %v3250 = vsub.f32 1.0, %v3249
    %v3251 = vmul.f32 %v3248, %v3250
    %v3252 = vadd.f32 %v3248, %v3251
    %vm3253 = vweird.f32 %v3247
    %vm3254 = vweird.f32 %v3248
    %vm3255 = vmor %vm3253, %vm3254
    %v3256 = vsel %vm3255, %v3248, %v3252
    %v3257 = vand.u32 2147483647, %v3247
    %vm3258 = vcmp.eq.f32.partialorder %v3257, 8.507059e+37
    %v3259 = vand.u32 %v3247, 2147483648
    %v3260 = vor.u32 1.1754944e-38, %v3259
    %v3261 = vsel %vm3258, %v3260, %v3256
    %v3262 = vmul.f32 1.0, %v3261
    %v3263 = vmul.f32 %v3202, %v3139
    %v3265 = vsel %vm491, %v3263, 0
    %3267 = vmatpush.msra.mxu0 0.0
    %3268 = vmatpush.msra.mxu0 0.0
    %3269 = vmatpush.msra.mxu0 0.0
    %3270 = vmatpush.msra.mxu0 0.0
    %3271 = vmatpush.msra.mxu0 0.0
    %3272 = vmatpush.msra.mxu0 0.0
    %3273 = vmatpush.msra.mxu0 0.0
    %3274 = vmatpush.msra.mxu0 0.0
    %3275 = vmatpush.msra.mxu0 0.0
    %3276 = vmatpush.msra.mxu0 0.0
    %3277 = vmatpush.msra.mxu0 0.0
    %3278 = vmatpush.msra.mxu0 0.0
    %3279 = vmatpush.msra.mxu0 %v3086
    %3280 = vmatpush.msra.mxu0 %v3085
    %3281 = vmatpush.msra.mxu0 %v3084
    %3282 = vmatpush.msra.mxu0 %v3083
    %3283 = vmatmul.f32.gmra.mxu0 %v3265
    %v3284 = vpop.f32.mrf.mxu0
    %v3285 = vadd.f32 0.0, %v3284
    %3286 = vdwg.mxu0
    %3287 = vmatpush.msra.mxu0 0.0
    %3288 = vmatpush.msra.mxu0 0.0
    %3289 = vmatpush.msra.mxu0 0.0
    %3290 = vmatpush.msra.mxu0 0.0
    %3291 = vmatpush.msra.mxu0 0.0
    %3292 = vmatpush.msra.mxu0 0.0
    %3293 = vmatpush.msra.mxu0 0.0
    %3294 = vmatpush.msra.mxu0 0.0
    %3295 = vmatpush.msra.mxu0 0.0
    %3296 = vmatpush.msra.mxu0 0.0
    %3297 = vmatpush.msra.mxu0 0.0
    %3298 = vmatpush.msra.mxu0 0.0
    %3299 = vmatpush.msra.mxu0 %v3081
    %3300 = vmatpush.msra.mxu0 %v3080
    %3301 = vmatpush.msra.mxu0 %v3079
    %3302 = vmatpush.msra.mxu0 %v3078
    %3303 = vmatmul.f32.gmra.mxu0 %v1103
    %v3304 = vpop.f32.mrf.mxu0
    %v3305 = vadd.f32 %v3285, %v3304
    %3306 = vdwg.mxu0
    %v3307 = vadd.f32 %v3305, %v3132
    %v3308 = vtanh.pop %v3307
    %v3309 = vmul.f32 %v3262, %v3139
    %v3310 = vsub.f32 1.0, %v3262
    %v3311 = vmul.f32 %v3310, %v3308
    %v3312 = vadd.f32 %v3309, %v3311
    %v3314 = vsel %vm491, %v3312, 0
    %3316 = vmatpush.msra.mxu0 0.0
    %3317 = vmatpush.msra.mxu0 0.0
    %3318 = vmatpush.msra.mxu0 0.0
    %3319 = vmatpush.msra.mxu0 0.0
    %3320 = vmatpush.msra.mxu0 0.0
    %3321 = vmatpush.msra.mxu0 0.0
    %3322 = vmatpush.msra.mxu0 0.0
    %3323 = vmatpush.msra.mxu0 0.0
    %3324 = vmatpush.msra.mxu0 0.0
    %3325 = vmatpush.msra.mxu0 0.0
    %3326 = vmatpush.msra.mxu0 0.0
    %3327 = vmatpush.msra.mxu0 0.0
    %3328 = vmatpush.msra.mxu0 %v2941
    %3329 = vmatpush.msra.mxu0 %v2940
    %3330 = vmatpush.msra.mxu0 %v2939
    %3331 = vmatpush.msra.mxu0 %v2938
    %3332 = vmatmul.f32.gmra.mxu0 %v3314
    %v3333 = vpop.f32.mrf.mxu0
    %v3334 = vadd.f32 0.0, %v3333
    %3335 = vdwg.mxu0
    %3336 = vmatpush.msra.mxu0 0.0
    %3337 = vmatpush.msra.mxu0 0.0
    %3338 = vmatpush.msra.mxu0 0.0
    %3339 = vmatpush.msra.mxu0 0.0
    %3340 = vmatpush.msra.mxu0 0.0
    %3341 = vmatpush.msra.mxu0 0.0
    %3342 = vmatpush.msra.mxu0 0.0
    %3343 = vmatpush.msra.mxu0 0.0
    %3344 = vmatpush.msra.mxu0 0.0
    %3345 = vmatpush.msra.mxu0 0.0
    %3346 = vmatpush.msra.mxu0 0.0
    %3347 = vmatpush.msra.mxu0 0.0
    %3348 = vmatpush.msra.mxu0 %v2937
    %3349 = vmatpush.msra.mxu0 %v2936
    %3350 = vmatpush.msra.mxu0 %v2935
    %3351 = vmatpush.msra.mxu0 %v2934
    %3352 = vmatmul.f32.gmra.mxu0 %v1406
    %v3353 = vpop.f32.mrf.mxu0
    %v3354 = vadd.f32 %v3334, %v3353
    %3355 = vdwg.mxu0
    %v3356 = vadd.f32 %v3354, %v2984
    %v3357 = vxor.u32 %v3356, 2147483648
    %v3358 = vmul.f32 %v3357, 1.442695
    %v3359 = vpow.pop %v3358
    %v3360 = vadd.f32 %v3359, 1.0
    %v3361 = vrcp.pop %v3360
    %v3362 = vmul.f32 %v3360, %v3361
    %v3363 = vsub.f32 1.0, %v3362
    %v3364 = vmul.f32 %v3361, %v3363
    %v3365 = vadd.f32 %v3361, %v3364
    %vm3366 = vweird.f32 %v3360
    %vm3367 = vweird.f32 %v3361
    %vm3368 = vmor %vm3366, %vm3367
    %v3369 = vsel %vm3368, %v3361, %v3365
    %v3370 = vand.u32 2147483647, %v3360
    %vm3371 = vcmp.eq.f32.partialorder %v3370, 8.507059e+37
    %v3372 = vand.u32 %v3360, 2147483648
    %v3373 = vor.u32 1.1754944e-38, %v3372
    %v3374 = vsel %vm3371, %v3373, %v3369
    %v3375 = vmul.f32 1.0, %v3374
    %3376 = vmatpush.msra.mxu0 0.0
    %3377 = vmatpush.msra.mxu0 0.0
    %3378 = vmatpush.msra.mxu0 0.0
    %3379 = vmatpush.msra.mxu0 0.0
    %3380 = vmatpush.msra.mxu0 0.0
    %3381 = vmatpush.msra.mxu0 0.0
    %3382 = vmatpush.msra.mxu0 0.0
    %3383 = vmatpush.msra.mxu0 0.0
    %3384 = vmatpush.msra.mxu0 0.0
    %3385 = vmatpush.msra.mxu0 0.0
    %3386 = vmatpush.msra.mxu0 0.0
    %3387 = vmatpush.msra.mxu0 0.0
    %3388 = vmatpush.msra.mxu0 %v3013
    %3389 = vmatpush.msra.mxu0 %v3012
    %3390 = vmatpush.msra.mxu0 %v3011
    %3391 = vmatpush.msra.mxu0 %v3010
    %3392 = vmatmul.f32.gmra.mxu0 %v3314
    %v3393 = vpop.f32.mrf.mxu0
    %v3394 = vadd.f32 0.0, %v3393
    %3395 = vdwg.mxu0
    %3396 = vmatpush.msra.mxu0 0.0
    %3397 = vmatpush.msra.mxu0 0.0
    %3398 = vmatpush.msra.mxu0 0.0
    %3399 = vmatpush.msra.mxu0 0.0
    %3400 = vmatpush.msra.mxu0 0.0
    %3401 = vmatpush.msra.mxu0 0.0
    %3402 = vmatpush.msra.mxu0 0.0
    %3403 = vmatpush.msra.mxu0 0.0
    %3404 = vmatpush.msra.mxu0 0.0
    %3405 = vmatpush.msra.mxu0 0.0
    %3406 = vmatpush.msra.mxu0 0.0
    %3407 = vmatpush.msra.mxu0 0.0
    %3408 = vmatpush.msra.mxu0 %v3009
    %3409 = vmatpush.msra.mxu0 %v3008
    %3410 = vmatpush.msra.mxu0 %v3007
    %3411 = vmatpush.msra.mxu0 %v3006
    %3412 = vmatmul.f32.gmra.mxu0 %v1406
    %v3413 = vpop.f32.mrf.mxu0
    %v3414 = vadd.f32 %v3394, %v3413
    %3415 = vdwg.mxu0
    %v3416 = vadd.f32 %v3414, %v3056
    %v3417 = vxor.u32 %v3416, 2147483648
    %v3418 = vmul.f32 %v3417, 1.442695
    %v3419 = vpow.pop %v3418
    %v3420 = vadd.f32 %v3419, 1.0
    %v3421 = vrcp.pop %v3420
    %v3422 = vmul.f32 %v3420, %v3421
    %v3423 = vsub.f32 1.0, %v3422
    %v3424 = vmul.f32 %v3421, %v3423
    %v3425 = vadd.f32 %v3421, %v3424
    %vm3426 = vweird.f32 %v3420
    %vm3427 = vweird.f32 %v3421
    %vm3428 = vmor %vm3426, %vm3427
    %v3429 = vsel %vm3428, %v3421, %v3425
    %v3430 = vand.u32 2147483647, %v3420
    %vm3431 = vcmp.eq.f32.partialorder %v3430, 8.507059e+37
    %v3432 = vand.u32 %v3420, 2147483648
    %v3433 = vor.u32 1.1754944e-38, %v3432
    %v3434 = vsel %vm3431, %v3433, %v3429
    %v3435 = vmul.f32 1.0, %v3434
    %v3436 = vmul.f32 %v3375, %v3312
    %v3438 = vsel %vm491, %v3436, 0
    %3440 = vmatpush.msra.mxu0 0.0
    %3441 = vmatpush.msra.mxu0 0.0
    %3442 = vmatpush.msra.mxu0 0.0
    %3443 = vmatpush.msra.mxu0 0.0
    %3444 = vmatpush.msra.mxu0 0.0
    %3445 = vmatpush.msra.mxu0 0.0
    %3446 = vmatpush.msra.mxu0 0.0
    %3447 = vmatpush.msra.mxu0 0.0
    %3448 = vmatpush.msra.mxu0 0.0
    %3449 = vmatpush.msra.mxu0 0.0
    %3450 = vmatpush.msra.mxu0 0.0
    %3451 = vmatpush.msra.mxu0 0.0
    %3452 = vmatpush.msra.mxu0 %v3086
    %3453 = vmatpush.msra.mxu0 %v3085
    %3454 = vmatpush.msra.mxu0 %v3084
    %3455 = vmatpush.msra.mxu0 %v3083
    %3456 = vmatmul.f32.gmra.mxu0 %v3438
    %v3457 = vpop.f32.mrf.mxu0
    %v3458 = vadd.f32 0.0, %v3457
    %3459 = vdwg.mxu0
    %3460 = vmatpush.msra.mxu0 0.0
    %3461 = vmatpush.msra.mxu0 0.0
    %3462 = vmatpush.msra.mxu0 0.0
    %3463 = vmatpush.msra.mxu0 0.0
    %3464 = vmatpush.msra.mxu0 0.0
    %3465 = vmatpush.msra.mxu0 0.0
    %3466 = vmatpush.msra.mxu0 0.0
    %3467 = vmatpush.msra.mxu0 0.0
    %3468 = vmatpush.msra.mxu0 0.0
    %3469 = vmatpush.msra.mxu0 0.0
    %3470 = vmatpush.msra.mxu0 0.0
    %3471 = vmatpush.msra.mxu0 0.0
    %3472 = vmatpush.msra.mxu0 %v3081
    %3473 = vmatpush.msra.mxu0 %v3080
    %3474 = vmatpush.msra.mxu0 %v3079
    %3475 = vmatpush.msra.mxu0 %v3078
    %3476 = vmatmul.f32.gmra.mxu0 %v1406
    %v3477 = vpop.f32.mrf.mxu0
    %v3478 = vadd.f32 %v3458, %v3477
    %3479 = vdwg.mxu0
    %v3480 = vadd.f32 %v3478, %v3132
    %v3481 = vtanh.pop %v3480
    %v3482 = vmul.f32 %v3435, %v3312
    %v3483 = vsub.f32 1.0, %v3435
    %v3484 = vmul.f32 %v3483, %v3481
    %v3485 = vadd.f32 %v3482, %v3484
    %v3487 = vsel %vm491, %v3485, 0
    %3489 = vmatpush.msra.mxu0 0.0
    %3490 = vmatpush.msra.mxu0 0.0
    %3491 = vmatpush.msra.mxu0 0.0
    %3492 = vmatpush.msra.mxu0 0.0
    %3493 = vmatpush.msra.mxu0 0.0
    %3494 = vmatpush.msra.mxu0 0.0
    %3495 = vmatpush.msra.mxu0 0.0
    %3496 = vmatpush.msra.mxu0 0.0
    %3497 = vmatpush.msra.mxu0 0.0
    %3498 = vmatpush.msra.mxu0 0.0
    %3499 = vmatpush.msra.mxu0 0.0
    %3500 = vmatpush.msra.mxu0 0.0
    %3501 = vmatpush.msra.mxu0 %v2941
    %3502 = vmatpush.msra.mxu0 %v2940
    %3503 = vmatpush.msra.mxu0 %v2939
    %3504 = vmatpush.msra.mxu0 %v2938
    %3505 = vmatmul.f32.gmra.mxu0 %v3487
    %v3506 = vpop.f32.mrf.mxu0
    %v3507 = vadd.f32 0.0, %v3506
    %3508 = vdwg.mxu0
    %3509 = vmatpush.msra.mxu0 0.0
    %3510 = vmatpush.msra.mxu0 0.0
    %3511 = vmatpush.msra.mxu0 0.0
    %3512 = vmatpush.msra.mxu0 0.0
    %3513 = vmatpush.msra.mxu0 0.0
    %3514 = vmatpush.msra.mxu0 0.0
    %3515 = vmatpush.msra.mxu0 0.0
    %3516 = vmatpush.msra.mxu0 0.0
    %3517 = vmatpush.msra.mxu0 0.0
    %3518 = vmatpush.msra.mxu0 0.0
    %3519 = vmatpush.msra.mxu0 0.0
    %3520 = vmatpush.msra.mxu0 0.0
    %3521 = vmatpush.msra.mxu0 %v2937
    %3522 = vmatpush.msra.mxu0 %v2936
    %3523 = vmatpush.msra.mxu0 %v2935
    %3524 = vmatpush.msra.mxu0 %v2934
    %3525 = vmatmul.f32.gmra.mxu0 %v1709
    %v3526 = vpop.f32.mrf.mxu0
    %v3527 = vadd.f32 %v3507, %v3526
    %3528 = vdwg.mxu0
    %v3529 = vadd.f32 %v3527, %v2984
    %v3530 = vxor.u32 %v3529, 2147483648
    %v3531 = vmul.f32 %v3530, 1.442695
    %v3532 = vpow.pop %v3531
    %v3533 = vadd.f32 %v3532, 1.0
    %v3534 = vrcp.pop %v3533
    %v3535 = vmul.f32 %v3533, %v3534
    %v3536 = vsub.f32 1.0, %v3535
    %v3537 = vmul.f32 %v3534, %v3536
    %v3538 = vadd.f32 %v3534, %v3537
    %vm3539 = vweird.f32 %v3533
    %vm3540 = vweird.f32 %v3534
    %vm3541 = vmor %vm3539, %vm3540
    %v3542 = vsel %vm3541, %v3534, %v3538
    %v3543 = vand.u32 2147483647, %v3533
    %vm3544 = vcmp.eq.f32.partialorder %v3543, 8.507059e+37
    %v3545 = vand.u32 %v3533, 2147483648
    %v3546 = vor.u32 1.1754944e-38, %v3545
    %v3547 = vsel %vm3544, %v3546, %v3542
    %v3548 = vmul.f32 1.0, %v3547
    %3549 = vmatpush.msra.mxu0 0.0
    %3550 = vmatpush.msra.mxu0 0.0
    %3551 = vmatpush.msra.mxu0 0.0
    %3552 = vmatpush.msra.mxu0 0.0
    %3553 = vmatpush.msra.mxu0 0.0
    %3554 = vmatpush.msra.mxu0 0.0
    %3555 = vmatpush.msra.mxu0 0.0
    %3556 = vmatpush.msra.mxu0 0.0
    %3557 = vmatpush.msra.mxu0 0.0
    %3558 = vmatpush.msra.mxu0 0.0
    %3559 = vmatpush.msra.mxu0 0.0
    %3560 = vmatpush.msra.mxu0 0.0
    %3561 = vmatpush.msra.mxu0 %v3013
    %3562 = vmatpush.msra.mxu0 %v3012
    %3563 = vmatpush.msra.mxu0 %v3011
    %3564 = vmatpush.msra.mxu0 %v3010
    %3565 = vmatmul.f32.gmra.mxu0 %v3487
    %v3566 = vpop.f32.mrf.mxu0
    %v3567 = vadd.f32 0.0, %v3566
    %3568 = vdwg.mxu0
    %3569 = vmatpush.msra.mxu0 0.0
    %3570 = vmatpush.msra.mxu0 0.0
    %3571 = vmatpush.msra.mxu0 0.0
    %3572 = vmatpush.msra.mxu0 0.0
    %3573 = vmatpush.msra.mxu0 0.0
    %3574 = vmatpush.msra.mxu0 0.0
    %3575 = vmatpush.msra.mxu0 0.0
    %3576 = vmatpush.msra.mxu0 0.0
    %3577 = vmatpush.msra.mxu0 0.0
    %3578 = vmatpush.msra.mxu0 0.0
    %3579 = vmatpush.msra.mxu0 0.0
    %3580 = vmatpush.msra.mxu0 0.0
    %3581 = vmatpush.msra.mxu0 %v3009
    %3582 = vmatpush.msra.mxu0 %v3008
    %3583 = vmatpush.msra.mxu0 %v3007
    %3584 = vmatpush.msra.mxu0 %v3006
    %3585 = vmatmul.f32.gmra.mxu0 %v1709
    %v3586 = vpop.f32.mrf.mxu0
    %v3587 = vadd.f32 %v3567, %v3586
    %3588 = vdwg.mxu0
    %v3589 = vadd.f32 %v3587, %v3056
    %v3590 = vxor.u32 %v3589, 2147483648
    %v3591 = vmul.f32 %v3590, 1.442695
    %v3592 = vpow.pop %v3591
    %v3593 = vadd.f32 %v3592, 1.0
    %v3594 = vrcp.pop %v3593
    %v3595 = vmul.f32 %v3593, %v3594
    %v3596 = vsub.f32 1.0, %v3595
    %v3597 = vmul.f32 %v3594, %v3596
    %v3598 = vadd.f32 %v3594, %v3597
    %vm3599 = vweird.f32 %v3593
    %vm3600 = vweird.f32 %v3594
    %vm3601 = vmor %vm3599, %vm3600
    %v3602 = vsel %vm3601, %v3594, %v3598
    %v3603 = vand.u32 2147483647, %v3593
    %vm3604 = vcmp.eq.f32.partialorder %v3603, 8.507059e+37
    %v3605 = vand.u32 %v3593, 2147483648
    %v3606 = vor.u32 1.1754944e-38, %v3605
    %v3607 = vsel %vm3604, %v3606, %v3602
    %v3608 = vmul.f32 1.0, %v3607
    %v3609 = vmul.f32 %v3548, %v3485
    %v3611 = vsel %vm491, %v3609, 0
    %3613 = vmatpush.msra.mxu0 0.0
    %3614 = vmatpush.msra.mxu0 0.0
    %3615 = vmatpush.msra.mxu0 0.0
    %3616 = vmatpush.msra.mxu0 0.0
    %3617 = vmatpush.msra.mxu0 0.0
    %3618 = vmatpush.msra.mxu0 0.0
    %3619 = vmatpush.msra.mxu0 0.0
    %3620 = vmatpush.msra.mxu0 0.0
    %3621 = vmatpush.msra.mxu0 0.0
    %3622 = vmatpush.msra.mxu0 0.0
    %3623 = vmatpush.msra.mxu0 0.0
    %3624 = vmatpush.msra.mxu0 0.0
    %3625 = vmatpush.msra.mxu0 %v3086
    %3626 = vmatpush.msra.mxu0 %v3085
    %3627 = vmatpush.msra.mxu0 %v3084
    %3628 = vmatpush.msra.mxu0 %v3083
    %3629 = vmatmul.f32.gmra.mxu0 %v3611
    %v3630 = vpop.f32.mrf.mxu0
    %v3631 = vadd.f32 0.0, %v3630
    %3632 = vdwg.mxu0
    %3633 = vmatpush.msra.mxu0 0.0
    %3634 = vmatpush.msra.mxu0 0.0
    %3635 = vmatpush.msra.mxu0 0.0
    %3636 = vmatpush.msra.mxu0 0.0
    %3637 = vmatpush.msra.mxu0 0.0
    %3638 = vmatpush.msra.mxu0 0.0
    %3639 = vmatpush.msra.mxu0 0.0
    %3640 = vmatpush.msra.mxu0 0.0
    %3641 = vmatpush.msra.mxu0 0.0
    %3642 = vmatpush.msra.mxu0 0.0
    %3643 = vmatpush.msra.mxu0 0.0
    %3644 = vmatpush.msra.mxu0 0.0
    %3645 = vmatpush.msra.mxu0 %v3081
    %3646 = vmatpush.msra.mxu0 %v3080
    %3647 = vmatpush.msra.mxu0 %v3079
    %3648 = vmatpush.msra.mxu0 %v3078
    %3649 = vmatmul.f32.gmra.mxu0 %v1709
    %v3650 = vpop.f32.mrf.mxu0
    %v3651 = vadd.f32 %v3631, %v3650
    %3652 = vdwg.mxu0
    %v3653 = vadd.f32 %v3651, %v3132
    %v3654 = vtanh.pop %v3653
    %v3655 = vmul.f32 %v3608, %v3485
    %v3656 = vsub.f32 1.0, %v3608
    %v3657 = vmul.f32 %v3656, %v3654
    %v3658 = vadd.f32 %v3655, %v3657
    %v3660 = vsel %vm491, %v3658, 0
    %3662 = vmatpush.msra.mxu0 0.0
    %3663 = vmatpush.msra.mxu0 0.0
    %3664 = vmatpush.msra.mxu0 0.0
    %3665 = vmatpush.msra.mxu0 0.0
    %3666 = vmatpush.msra.mxu0 0.0
    %3667 = vmatpush.msra.mxu0 0.0
    %3668 = vmatpush.msra.mxu0 0.0
    %3669 = vmatpush.msra.mxu0 0.0
    %3670 = vmatpush.msra.mxu0 0.0
    %3671 = vmatpush.msra.mxu0 0.0
    %3672 = vmatpush.msra.mxu0 0.0
    %3673 = vmatpush.msra.mxu0 0.0
    %3674 = vmatpush.msra.mxu0 %v2941
    %3675 = vmatpush.msra.mxu0 %v2940
    %3676 = vmatpush.msra.mxu0 %v2939
    %3677 = vmatpush.msra.mxu0 %v2938
    %3678 = vmatmul.f32.gmra.mxu0 %v3660
    %v3679 = vpop.f32.mrf.mxu0
    %v3680 = vadd.f32 0.0, %v3679
    %3681 = vdwg.mxu0
    %3682 = vmatpush.msra.mxu0 0.0
    %3683 = vmatpush.msra.mxu0 0.0
    %3684 = vmatpush.msra.mxu0 0.0
    %3685 = vmatpush.msra.mxu0 0.0
    %3686 = vmatpush.msra.mxu0 0.0
    %3687 = vmatpush.msra.mxu0 0.0
    %3688 = vmatpush.msra.mxu0 0.0
    %3689 = vmatpush.msra.mxu0 0.0
    %3690 = vmatpush.msra.mxu0 0.0
    %3691 = vmatpush.msra.mxu0 0.0
    %3692 = vmatpush.msra.mxu0 0.0
    %3693 = vmatpush.msra.mxu0 0.0
    %3694 = vmatpush.msra.mxu0 %v2937
    %3695 = vmatpush.msra.mxu0 %v2936
    %3696 = vmatpush.msra.mxu0 %v2935
    %3697 = vmatpush.msra.mxu0 %v2934
    %3698 = vmatmul.f32.gmra.mxu0 %v2018
    %v3699 = vpop.f32.mrf.mxu0
    %v3700 = vadd.f32 %v3680, %v3699
    %3701 = vdwg.mxu0
    %v3702 = vadd.f32 %v3700, %v2984
    %v3703 = vxor.u32 %v3702, 2147483648
    %v3704 = vmul.f32 %v3703, 1.442695
    %v3705 = vpow.pop %v3704
    %v3706 = vadd.f32 %v3705, 1.0
    %v3707 = vrcp.pop %v3706
    %v3708 = vmul.f32 %v3706, %v3707
    %v3709 = vsub.f32 1.0, %v3708
    %v3710 = vmul.f32 %v3707, %v3709
    %v3711 = vadd.f32 %v3707, %v3710
    %vm3712 = vweird.f32 %v3706
    %vm3713 = vweird.f32 %v3707
    %vm3714 = vmor %vm3712, %vm3713
    %v3715 = vsel %vm3714, %v3707, %v3711
    %v3716 = vand.u32 2147483647, %v3706
    %vm3717 = vcmp.eq.f32.partialorder %v3716, 8.507059e+37
    %v3718 = vand.u32 %v3706, 2147483648
    %v3719 = vor.u32 1.1754944e-38, %v3718
    %v3720 = vsel %vm3717, %v3719, %v3715
    %v3721 = vmul.f32 1.0, %v3720
    %3722 = vmatpush.msra.mxu0 0.0
    %3723 = vmatpush.msra.mxu0 0.0
    %3724 = vmatpush.msra.mxu0 0.0
    %3725 = vmatpush.msra.mxu0 0.0
    %3726 = vmatpush.msra.mxu0 0.0
    %3727 = vmatpush.msra.mxu0 0.0
    %3728 = vmatpush.msra.mxu0 0.0
    %3729 = vmatpush.msra.mxu0 0.0
    %3730 = vmatpush.msra.mxu0 0.0
    %3731 = vmatpush.msra.mxu0 0.0
    %3732 = vmatpush.msra.mxu0 0.0
    %3733 = vmatpush.msra.mxu0 0.0
    %3734 = vmatpush.msra.mxu0 %v3013
    %3735 = vmatpush.msra.mxu0 %v3012
    %3736 = vmatpush.msra.mxu0 %v3011
    %3737 = vmatpush.msra.mxu0 %v3010
    %3738 = vmatmul.f32.gmra.mxu0 %v3660
    %v3739 = vpop.f32.mrf.mxu0
    %v3740 = vadd.f32 0.0, %v3739
    %3741 = vdwg.mxu0
    %3742 = vmatpush.msra.mxu0 0.0
    %3743 = vmatpush.msra.mxu0 0.0
    %3744 = vmatpush.msra.mxu0 0.0
    %3745 = vmatpush.msra.mxu0 0.0
    %3746 = vmatpush.msra.mxu0 0.0
    %3747 = vmatpush.msra.mxu0 0.0
    %3748 = vmatpush.msra.mxu0 0.0
    %3749 = vmatpush.msra.mxu0 0.0
    %3750 = vmatpush.msra.mxu0 0.0
    %3751 = vmatpush.msra.mxu0 0.0
    %3752 = vmatpush.msra.mxu0 0.0
    %3753 = vmatpush.msra.mxu0 0.0
    %3754 = vmatpush.msra.mxu0 %v3009
    %3755 = vmatpush.msra.mxu0 %v3008
    %3756 = vmatpush.msra.mxu0 %v3007
    %3757 = vmatpush.msra.mxu0 %v3006
    %3758 = vmatmul.f32.gmra.mxu0 %v2018
    %v3759 = vpop.f32.mrf.mxu0
    %v3760 = vadd.f32 %v3740, %v3759
    %3761 = vdwg.mxu0
    %v3762 = vadd.f32 %v3760, %v3056
    %v3763 = vxor.u32 %v3762, 2147483648
    %v3764 = vmul.f32 %v3763, 1.442695
    %v3765 = vpow.pop %v3764
    %v3766 = vadd.f32 %v3765, 1.0
    %v3767 = vrcp.pop %v3766
    %v3768 = vmul.f32 %v3766, %v3767
    %v3769 = vsub.f32 1.0, %v3768
    %v3770 = vmul.f32 %v3767, %v3769
    %v3771 = vadd.f32 %v3767, %v3770
    %vm3772 = vweird.f32 %v3766
    %vm3773 = vweird.f32 %v3767
    %vm3774 = vmor %vm3772, %vm3773
    %v3775 = vsel %vm3774, %v3767, %v3771
    %v3776 = vand.u32 2147483647, %v3766
    %vm3777 = vcmp.eq.f32.partialorder %v3776, 8.507059e+37
    %v3778 = vand.u32 %v3766, 2147483648
    %v3779 = vor.u32 1.1754944e-38, %v3778
    %v3780 = vsel %vm3777, %v3779, %v3775
    %v3781 = vmul.f32 1.0, %v3780
    %v3782 = vmul.f32 %v3721, %v3658
    %v3784 = vsel %vm491, %v3782, 0
    %3786 = vmatpush.msra.mxu0 0.0
    %3787 = vmatpush.msra.mxu0 0.0
    %3788 = vmatpush.msra.mxu0 0.0
    %3789 = vmatpush.msra.mxu0 0.0
    %3790 = vmatpush.msra.mxu0 0.0
    %3791 = vmatpush.msra.mxu0 0.0
    %3792 = vmatpush.msra.mxu0 0.0
    %3793 = vmatpush.msra.mxu0 0.0
    %3794 = vmatpush.msra.mxu0 0.0
    %3795 = vmatpush.msra.mxu0 0.0
    %3796 = vmatpush.msra.mxu0 0.0
    %3797 = vmatpush.msra.mxu0 0.0
    %3798 = vmatpush.msra.mxu0 %v3086
    %3799 = vmatpush.msra.mxu0 %v3085
    %3800 = vmatpush.msra.mxu0 %v3084
    %3801 = vmatpush.msra.mxu0 %v3083
    %3802 = vmatmul.f32.gmra.mxu0 %v3784
    %v3803 = vpop.f32.mrf.mxu0
    %v3804 = vadd.f32 0.0, %v3803
    %3805 = vdwg.mxu0
    %3806 = vmatpush.msra.mxu0 0.0
    %3807 = vmatpush.msra.mxu0 0.0
    %3808 = vmatpush.msra.mxu0 0.0
    %3809 = vmatpush.msra.mxu0 0.0
    %3810 = vmatpush.msra.mxu0 0.0
    %3811 = vmatpush.msra.mxu0 0.0
    %3812 = vmatpush.msra.mxu0 0.0
    %3813 = vmatpush.msra.mxu0 0.0
    %3814 = vmatpush.msra.mxu0 0.0
    %3815 = vmatpush.msra.mxu0 0.0
    %3816 = vmatpush.msra.mxu0 0.0
    %3817 = vmatpush.msra.mxu0 0.0
    %3818 = vmatpush.msra.mxu0 %v3081
    %3819 = vmatpush.msra.mxu0 %v3080
    %3820 = vmatpush.msra.mxu0 %v3079
    %3821 = vmatpush.msra.mxu0 %v3078
    %3822 = vmatmul.f32.gmra.mxu0 %v2018
    %v3823 = vpop.f32.mrf.mxu0
    %v3824 = vadd.f32 %v3804, %v3823
    %3825 = vdwg.mxu0
    %v3826 = vadd.f32 %v3824, %v3132
    %v3827 = vtanh.pop %v3826
    %v3828 = vmul.f32 %v3781, %v3658
    %v3829 = vsub.f32 1.0, %v3781
    %v3830 = vmul.f32 %v3829, %v3827
    %v3831 = vadd.f32 %v3828, %v3830
    %v3833 = vsel %vm491, %v3831, 0
    %3835 = vmatpush.msra.mxu0 0.0
    %3836 = vmatpush.msra.mxu0 0.0
    %3837 = vmatpush.msra.mxu0 0.0
    %3838 = vmatpush.msra.mxu0 0.0
    %3839 = vmatpush.msra.mxu0 0.0
    %3840 = vmatpush.msra.mxu0 0.0
    %3841 = vmatpush.msra.mxu0 0.0
    %3842 = vmatpush.msra.mxu0 0.0
    %3843 = vmatpush.msra.mxu0 0.0
    %3844 = vmatpush.msra.mxu0 0.0
    %3845 = vmatpush.msra.mxu0 0.0
    %3846 = vmatpush.msra.mxu0 0.0
    %3847 = vmatpush.msra.mxu0 %v2941
    %3848 = vmatpush.msra.mxu0 %v2940
    %3849 = vmatpush.msra.mxu0 %v2939
    %3850 = vmatpush.msra.mxu0 %v2938
    %3851 = vmatmul.f32.gmra.mxu0 %v3833
    %v3852 = vpop.f32.mrf.mxu0
    %v3853 = vadd.f32 0.0, %v3852
    %3854 = vdwg.mxu0
    %3855 = vmatpush.msra.mxu0 0.0
    %3856 = vmatpush.msra.mxu0 0.0
    %3857 = vmatpush.msra.mxu0 0.0
    %3858 = vmatpush.msra.mxu0 0.0
    %3859 = vmatpush.msra.mxu0 0.0
    %3860 = vmatpush.msra.mxu0 0.0
    %3861 = vmatpush.msra.mxu0 0.0
    %3862 = vmatpush.msra.mxu0 0.0
    %3863 = vmatpush.msra.mxu0 0.0
    %3864 = vmatpush.msra.mxu0 0.0
    %3865 = vmatpush.msra.mxu0 0.0
    %3866 = vmatpush.msra.mxu0 0.0
    %3867 = vmatpush.msra.mxu0 %v2937
    %3868 = vmatpush.msra.mxu0 %v2936
    %3869 = vmatpush.msra.mxu0 %v2935
    %3870 = vmatpush.msra.mxu0 %v2934
    %3871 = vmatmul.f32.gmra.mxu0 %v2327
    %v3872 = vpop.f32.mrf.mxu0
    %v3873 = vadd.f32 %v3853, %v3872
    %3874 = vdwg.mxu0
    %v3875 = vadd.f32 %v3873, %v2984
    %v3876 = vxor.u32 %v3875, 2147483648
    %v3877 = vmul.f32 %v3876, 1.442695
    %v3878 = vpow.pop %v3877
    %v3879 = vadd.f32 %v3878, 1.0
    %v3880 = vrcp.pop %v3879
    %v3881 = vmul.f32 %v3879, %v3880
    %v3882 = vsub.f32 1.0, %v3881
    %v3883 = vmul.f32 %v3880, %v3882
    %v3884 = vadd.f32 %v3880, %v3883
    %vm3885 = vweird.f32 %v3879
    %vm3886 = vweird.f32 %v3880
    %vm3887 = vmor %vm3885, %vm3886
    %v3888 = vsel %vm3887, %v3880, %v3884
    %v3889 = vand.u32 2147483647, %v3879
    %vm3890 = vcmp.eq.f32.partialorder %v3889, 8.507059e+37
    %v3891 = vand.u32 %v3879, 2147483648
    %v3892 = vor.u32 1.1754944e-38, %v3891
    %v3893 = vsel %vm3890, %v3892, %v3888
    %v3894 = vmul.f32 1.0, %v3893
    %3895 = vmatpush.msra.mxu0 0.0
    %3896 = vmatpush.msra.mxu0 0.0
    %3897 = vmatpush.msra.mxu0 0.0
    %3898 = vmatpush.msra.mxu0 0.0
    %3899 = vmatpush.msra.mxu0 0.0
    %3900 = vmatpush.msra.mxu0 0.0
    %3901 = vmatpush.msra.mxu0 0.0
    %3902 = vmatpush.msra.mxu0 0.0
    %3903 = vmatpush.msra.mxu0 0.0
    %3904 = vmatpush.msra.mxu0 0.0
    %3905 = vmatpush.msra.mxu0 0.0
    %3906 = vmatpush.msra.mxu0 0.0
    %3907 = vmatpush.msra.mxu0 %v3013
    %3908 = vmatpush.msra.mxu0 %v3012
    %3909 = vmatpush.msra.mxu0 %v3011
    %3910 = vmatpush.msra.mxu0 %v3010
    %3911 = vmatmul.f32.gmra.mxu0 %v3833
    %v3912 = vpop.f32.mrf.mxu0
    %v3913 = vadd.f32 0.0, %v3912
    %3914 = vdwg.mxu0
    %3915 = vmatpush.msra.mxu0 0.0
    %3916 = vmatpush.msra.mxu0 0.0
    %3917 = vmatpush.msra.mxu0 0.0
    %3918 = vmatpush.msra.mxu0 0.0
    %3919 = vmatpush.msra.mxu0 0.0
    %3920 = vmatpush.msra.mxu0 0.0
    %3921 = vmatpush.msra.mxu0 0.0
    %3922 = vmatpush.msra.mxu0 0.0
    %3923 = vmatpush.msra.mxu0 0.0
    %3924 = vmatpush.msra.mxu0 0.0
    %3925 = vmatpush.msra.mxu0 0.0
    %3926 = vmatpush.msra.mxu0 0.0
    %3927 = vmatpush.msra.mxu0 %v3009
    %3928 = vmatpush.msra.mxu0 %v3008
    %3929 = vmatpush.msra.mxu0 %v3007
    %3930 = vmatpush.msra.mxu0 %v3006
    %3931 = vmatmul.f32.gmra.mxu0 %v2327
    %v3932 = vpop.f32.mrf.mxu0
    %v3933 = vadd.f32 %v3913, %v3932
    %3934 = vdwg.mxu0
    %v3935 = vadd.f32 %v3933, %v3056
    %v3936 = vxor.u32 %v3935, 2147483648
    %v3937 = vmul.f32 %v3936, 1.442695
    %v3938 = vpow.pop %v3937
    %v3939 = vadd.f32 %v3938, 1.0
    %v3940 = vrcp.pop %v3939
    %v3941 = vmul.f32 %v3939, %v3940
    %v3942 = vsub.f32 1.0, %v3941
    %v3943 = vmul.f32 %v3940, %v3942
    %v3944 = vadd.f32 %v3940, %v3943
    %vm3945 = vweird.f32 %v3939
    %vm3946 = vweird.f32 %v3940
    %vm3947 = vmor %vm3945, %vm3946
    %v3948 = vsel %vm3947, %v3940, %v3944
    %v3949 = vand.u32 2147483647, %v3939
    %vm3950 = vcmp.eq.f32.partialorder %v3949, 8.507059e+37
    %v3951 = vand.u32 %v3939, 2147483648
    %v3952 = vor.u32 1.1754944e-38, %v3951
    %v3953 = vsel %vm3950, %v3952, %v3948
    %v3954 = vmul.f32 1.0, %v3953
    %v3955 = vmul.f32 %v3894, %v3831
    %v3957 = vsel %vm491, %v3955, 0
    %3959 = vmatpush.msra.mxu0 0.0
    %3960 = vmatpush.msra.mxu0 0.0
    %3961 = vmatpush.msra.mxu0 0.0
    %3962 = vmatpush.msra.mxu0 0.0
    %3963 = vmatpush.msra.mxu0 0.0
    %3964 = vmatpush.msra.mxu0 0.0
    %3965 = vmatpush.msra.mxu0 0.0
    %3966 = vmatpush.msra.mxu0 0.0
    %3967 = vmatpush.msra.mxu0 0.0
    %3968 = vmatpush.msra.mxu0 0.0
    %3969 = vmatpush.msra.mxu0 0.0
    %3970 = vmatpush.msra.mxu0 0.0
    %3971 = vmatpush.msra.mxu0 %v3086
    %3972 = vmatpush.msra.mxu0 %v3085
    %3973 = vmatpush.msra.mxu0 %v3084
    %3974 = vmatpush.msra.mxu0 %v3083
    %3975 = vmatmul.f32.gmra.mxu0 %v3957
    %v3976 = vpop.f32.mrf.mxu0
    %v3977 = vadd.f32 0.0, %v3976
    %3978 = vdwg.mxu0
    %3979 = vmatpush.msra.mxu0 0.0
    %3980 = vmatpush.msra.mxu0 0.0
    %3981 = vmatpush.msra.mxu0 0.0
    %3982 = vmatpush.msra.mxu0 0.0
    %3983 = vmatpush.msra.mxu0 0.0
    %3984 = vmatpush.msra.mxu0 0.0
    %3985 = vmatpush.msra.mxu0 0.0
    %3986 = vmatpush.msra.mxu0 0.0
    %3987 = vmatpush.msra.mxu0 0.0
    %3988 = vmatpush.msra.mxu0 0.0
    %3989 = vmatpush.msra.mxu0 0.0
    %3990 = vmatpush.msra.mxu0 0.0
    %3991 = vmatpush.msra.mxu0 %v3081
    %3992 = vmatpush.msra.mxu0 %v3080
    %3993 = vmatpush.msra.mxu0 %v3079
    %3994 = vmatpush.msra.mxu0 %v3078
    %3995 = vmatmul.f32.gmra.mxu0 %v2327
    %v3996 = vpop.f32.mrf.mxu0
    %v3997 = vadd.f32 %v3977, %v3996
    %3998 = vdwg.mxu0
    %v3999 = vadd.f32 %v3997, %v3132
    %v4000 = vtanh.pop %v3999
    %v4001 = vmul.f32 %v3954, %v3831
    %v4002 = vsub.f32 1.0, %v3954
    %v4003 = vmul.f32 %v4002, %v4000
    %v4004 = vadd.f32 %v4001, %v4003
    %v4006 = vsel %vm491, %v4004, 0
    %4008 = vmatpush.msra.mxu0 0.0
    %4009 = vmatpush.msra.mxu0 0.0
    %4010 = vmatpush.msra.mxu0 0.0
    %4011 = vmatpush.msra.mxu0 0.0
    %4012 = vmatpush.msra.mxu0 0.0
    %4013 = vmatpush.msra.mxu0 0.0
    %4014 = vmatpush.msra.mxu0 0.0
    %4015 = vmatpush.msra.mxu0 0.0
    %4016 = vmatpush.msra.mxu0 0.0
    %4017 = vmatpush.msra.mxu0 0.0
    %4018 = vmatpush.msra.mxu0 0.0
    %4019 = vmatpush.msra.mxu0 0.0
    %4020 = vmatpush.msra.mxu0 %v2941
    %4021 = vmatpush.msra.mxu0 %v2940
    %4022 = vmatpush.msra.mxu0 %v2939
    %4023 = vmatpush.msra.mxu0 %v2938
    %4024 = vmatmul.f32.gmra.mxu0 %v4006
    %v4025 = vpop.f32.mrf.mxu0
    %v4026 = vadd.f32 0.0, %v4025
    %4027 = vdwg.mxu0
    %4028 = vmatpush.msra.mxu0 0.0
    %4029 = vmatpush.msra.mxu0 0.0
    %4030 = vmatpush.msra.mxu0 0.0
    %4031 = vmatpush.msra.mxu0 0.0
    %4032 = vmatpush.msra.mxu0 0.0
    %4033 = vmatpush.msra.mxu0 0.0
    %4034 = vmatpush.msra.mxu0 0.0
    %4035 = vmatpush.msra.mxu0 0.0
    %4036 = vmatpush.msra.mxu0 0.0
    %4037 = vmatpush.msra.mxu0 0.0
    %4038 = vmatpush.msra.mxu0 0.0
    %4039 = vmatpush.msra.mxu0 0.0
    %4040 = vmatpush.msra.mxu0 %v2937
    %4041 = vmatpush.msra.mxu0 %v2936
    %4042 = vmatpush.msra.mxu0 %v2935
    %4043 = vmatpush.msra.mxu0 %v2934
    %4044 = vmatmul.f32.gmra.mxu0 %v2636
    %v4045 = vpop.f32.mrf.mxu0
    %v4046 = vadd.f32 %v4026, %v4045
    %4047 = vdwg.mxu0
    %v4048 = vadd.f32 %v4046, %v2984
    %v4049 = vxor.u32 %v4048, 2147483648
    %v4050 = vmul.f32 %v4049, 1.442695
    %v4051 = vpow.pop %v4050
    %v4052 = vadd.f32 %v4051, 1.0
    %v4053 = vrcp.pop %v4052
    %v4054 = vmul.f32 %v4052, %v4053
    %v4055 = vsub.f32 1.0, %v4054
    %v4056 = vmul.f32 %v4053, %v4055
    %v4057 = vadd.f32 %v4053, %v4056
    %vm4058 = vweird.f32 %v4052
    %vm4059 = vweird.f32 %v4053
    %vm4060 = vmor %vm4058, %vm4059
    %v4061 = vsel %vm4060, %v4053, %v4057
    %v4062 = vand.u32 2147483647, %v4052
    %vm4063 = vcmp.eq.f32.partialorder %v4062, 8.507059e+37
    %v4064 = vand.u32 %v4052, 2147483648
    %v4065 = vor.u32 1.1754944e-38, %v4064
    %v4066 = vsel %vm4063, %v4065, %v4061
    %v4067 = vmul.f32 1.0, %v4066
    %4068 = vmatpush.msra.mxu0 0.0
    %4069 = vmatpush.msra.mxu0 0.0
    %4070 = vmatpush.msra.mxu0 0.0
    %4071 = vmatpush.msra.mxu0 0.0
    %4072 = vmatpush.msra.mxu0 0.0
    %4073 = vmatpush.msra.mxu0 0.0
    %4074 = vmatpush.msra.mxu0 0.0
    %4075 = vmatpush.msra.mxu0 0.0
    %4076 = vmatpush.msra.mxu0 0.0
    %4077 = vmatpush.msra.mxu0 0.0
    %4078 = vmatpush.msra.mxu0 0.0
    %4079 = vmatpush.msra.mxu0 0.0
    %4080 = vmatpush.msra.mxu0 %v3013
    %4081 = vmatpush.msra.mxu0 %v3012
    %4082 = vmatpush.msra.mxu0 %v3011
    %4083 = vmatpush.msra.mxu0 %v3010
    %4084 = vmatmul.f32.gmra.mxu0 %v4006
    %v4085 = vpop.f32.mrf.mxu0
    %v4086 = vadd.f32 0.0, %v4085
    %4087 = vdwg.mxu0
    %4088 = vmatpush.msra.mxu0 0.0
    %4089 = vmatpush.msra.mxu0 0.0
    %4090 = vmatpush.msra.mxu0 0.0
    %4091 = vmatpush.msra.mxu0 0.0
    %4092 = vmatpush.msra.mxu0 0.0
    %4093 = vmatpush.msra.mxu0 0.0
    %4094 = vmatpush.msra.mxu0 0.0
    %4095 = vmatpush.msra.mxu0 0.0
    %4096 = vmatpush.msra.mxu0 0.0
    %4097 = vmatpush.msra.mxu0 0.0
    %4098 = vmatpush.msra.mxu0 0.0
    %4099 = vmatpush.msra.mxu0 0.0
    %4100 = vmatpush.msra.mxu0 %v3009
    %4101 = vmatpush.msra.mxu0 %v3008
    %4102 = vmatpush.msra.mxu0 %v3007
    %4103 = vmatpush.msra.mxu0 %v3006
    %4104 = vmatmul.f32.gmra.mxu0 %v2636
    %v4105 = vpop.f32.mrf.mxu0
    %v4106 = vadd.f32 %v4086, %v4105
    %4107 = vdwg.mxu0
    %v4108 = vadd.f32 %v4106, %v3056
    %v4109 = vxor.u32 %v4108, 2147483648
    %v4110 = vmul.f32 %v4109, 1.442695
    %v4111 = vpow.pop %v4110
    %v4112 = vadd.f32 %v4111, 1.0
    %v4113 = vrcp.pop %v4112
    %v4114 = vmul.f32 %v4112, %v4113
    %v4115 = vsub.f32 1.0, %v4114
    %v4116 = vmul.f32 %v4113, %v4115
    %v4117 = vadd.f32 %v4113, %v4116
    %vm4118 = vweird.f32 %v4112
    %vm4119 = vweird.f32 %v4113
    %vm4120 = vmor %vm4118, %vm4119
    %v4121 = vsel %vm4120, %v4113, %v4117
    %v4122 = vand.u32 2147483647, %v4112
    %vm4123 = vcmp.eq.f32.partialorder %v4122, 8.507059e+37
    %v4124 = vand.u32 %v4112, 2147483648
    %v4125 = vor.u32 1.1754944e-38, %v4124
    %v4126 = vsel %vm4123, %v4125, %v4121
    %v4127 = vmul.f32 1.0, %v4126
    %v4128 = vmul.f32 %v4067, %v4004
    %v4130 = vsel %vm491, %v4128, 0
    %4132 = vmatpush.msra.mxu0 0.0
    %4133 = vmatpush.msra.mxu0 0.0
    %4134 = vmatpush.msra.mxu0 0.0
    %4135 = vmatpush.msra.mxu0 0.0
    %4136 = vmatpush.msra.mxu0 0.0
    %4137 = vmatpush.msra.mxu0 0.0
    %4138 = vmatpush.msra.mxu0 0.0
    %4139 = vmatpush.msra.mxu0 0.0
    %4140 = vmatpush.msra.mxu0 0.0
    %4141 = vmatpush.msra.mxu0 0.0
    %4142 = vmatpush.msra.mxu0 0.0
    %4143 = vmatpush.msra.mxu0 0.0
    %4144 = vmatpush.msra.mxu0 %v3086
    %4145 = vmatpush.msra.mxu0 %v3085
    %4146 = vmatpush.msra.mxu0 %v3084
    %4147 = vmatpush.msra.mxu0 %v3083
    %4148 = vmatmul.f32.gmra.mxu0 %v4130
    %v4149 = vpop.f32.mrf.mxu0
    %v4150 = vadd.f32 0.0, %v4149
    %4151 = vdwg.mxu0
    %4152 = vmatpush.msra.mxu0 0.0
    %4153 = vmatpush.msra.mxu0 0.0
    %4154 = vmatpush.msra.mxu0 0.0
    %4155 = vmatpush.msra.mxu0 0.0
    %4156 = vmatpush.msra.mxu0 0.0
    %4157 = vmatpush.msra.mxu0 0.0
    %4158 = vmatpush.msra.mxu0 0.0
    %4159 = vmatpush.msra.mxu0 0.0
    %4160 = vmatpush.msra.mxu0 0.0
    %4161 = vmatpush.msra.mxu0 0.0
    %4162 = vmatpush.msra.mxu0 0.0
    %4163 = vmatpush.msra.mxu0 0.0
    %4164 = vmatpush.msra.mxu0 %v3081
    %4165 = vmatpush.msra.mxu0 %v3080
    %4166 = vmatpush.msra.mxu0 %v3079
    %4167 = vmatpush.msra.mxu0 %v3078
    %4168 = vmatmul.f32.gmra.mxu0 %v2636
    %v4169 = vpop.f32.mrf.mxu0
    %v4170 = vadd.f32 %v4150, %v4169
    %4171 = vdwg.mxu0
    %v4172 = vadd.f32 %v4170, %v3132
    %v4173 = vtanh.pop %v4172
    %v4174 = vmul.f32 %v4127, %v4004
    %v4175 = vsub.f32 1.0, %v4127
    %v4176 = vmul.f32 %v4175, %v4173
    %v4177 = vadd.f32 %v4174, %v4176
    %v4179 = vsel %vm491, %v4177, 0
    %4181 = vmatpush.msra.mxu0 0.0
    %4182 = vmatpush.msra.mxu0 0.0
    %4183 = vmatpush.msra.mxu0 0.0
    %4184 = vmatpush.msra.mxu0 0.0
    %4185 = vmatpush.msra.mxu0 0.0
    %4186 = vmatpush.msra.mxu0 0.0
    %4187 = vmatpush.msra.mxu0 0.0
    %4188 = vmatpush.msra.mxu0 0.0
    %4189 = vmatpush.msra.mxu0 0.0
    %4190 = vmatpush.msra.mxu0 0.0
    %4191 = vmatpush.msra.mxu0 0.0
    %4192 = vmatpush.msra.mxu0 0.0
    %4193 = vmatpush.msra.mxu0 %v2941
    %4194 = vmatpush.msra.mxu0 %v2940
    %4195 = vmatpush.msra.mxu0 %v2939
    %4196 = vmatpush.msra.mxu0 %v2938
    %4197 = vmatmul.f32.gmra.mxu0 %v4179
    %v4198 = vpop.f32.mrf.mxu0
    %v4199 = vadd.f32 0.0, %v4198
    %4200 = vdwg.mxu0
    %v4205 = vrot.slane %v2930, 7
    %v4206 = vrot.slane %v2931, 6
    %v4207 = vsel %vm728, %v4206, %v4205
    %v4208 = vrot.slane %v2932, 5
    %v4209 = vsel %vm731, %v4208, %v4207
    %v4210 = vrot.slane %v2933, 4
    %v4211 = vsel %vm734, %v4210, %v4209
    %v4212 = vsel %vm491, %v4211, 0
    %4214 = vmatpush.msra.mxu0 0.0
    %4215 = vmatpush.msra.mxu0 0.0
    %4216 = vmatpush.msra.mxu0 0.0
    %4217 = vmatpush.msra.mxu0 0.0
    %4218 = vmatpush.msra.mxu0 0.0
    %4219 = vmatpush.msra.mxu0 0.0
    %4220 = vmatpush.msra.mxu0 0.0
    %4221 = vmatpush.msra.mxu0 0.0
    %4222 = vmatpush.msra.mxu0 0.0
    %4223 = vmatpush.msra.mxu0 0.0
    %4224 = vmatpush.msra.mxu0 0.0
    %4225 = vmatpush.msra.mxu0 0.0
    %4226 = vmatpush.msra.mxu0 %v2937
    %4227 = vmatpush.msra.mxu0 %v2936
    %4228 = vmatpush.msra.mxu0 %v2935
    %4229 = vmatpush.msra.mxu0 %v2934
    %4230 = vmatmul.f32.gmra.mxu0 %v4212
    %v4231 = vpop.f32.mrf.mxu0
    %v4232 = vadd.f32 %v4199, %v4231
    %4233 = vdwg.mxu0
    %v4234 = vadd.f32 %v4232, %v2984
    %v4235 = vxor.u32 %v4234, 2147483648
    %v4236 = vmul.f32 %v4235, 1.442695
    %v4237 = vpow.pop %v4236
    %v4238 = vadd.f32 %v4237, 1.0
    %v4239 = vrcp.pop %v4238
    %v4240 = vmul.f32 %v4238, %v4239
    %v4241 = vsub.f32 1.0, %v4240
    %v4242 = vmul.f32 %v4239, %v4241
    %v4243 = vadd.f32 %v4239, %v4242
    %vm4244 = vweird.f32 %v4238
    %vm4245 = vweird.f32 %v4239
    %vm4246 = vmor %vm4244, %vm4245
    %v4247 = vsel %vm4246, %v4239, %v4243
    %v4248 = vand.u32 2147483647, %v4238
    %vm4249 = vcmp.eq.f32.partialorder %v4248, 8.507059e+37
    %v4250 = vand.u32 %v4238, 2147483648
    %v4251 = vor.u32 1.1754944e-38, %v4250
    %v4252 = vsel %vm4249, %v4251, %v4247
    %v4253 = vmul.f32 1.0, %v4252
    %4254 = vmatpush.msra.mxu0 0.0
    %4255 = vmatpush.msra.mxu0 0.0
    %4256 = vmatpush.msra.mxu0 0.0
    %4257 = vmatpush.msra.mxu0 0.0
    %4258 = vmatpush.msra.mxu0 0.0
    %4259 = vmatpush.msra.mxu0 0.0
    %4260 = vmatpush.msra.mxu0 0.0
    %4261 = vmatpush.msra.mxu0 0.0
    %4262 = vmatpush.msra.mxu0 0.0
    %4263 = vmatpush.msra.mxu0 0.0
    %4264 = vmatpush.msra.mxu0 0.0
    %4265 = vmatpush.msra.mxu0 0.0
    %4266 = vmatpush.msra.mxu0 %v3013
    %4267 = vmatpush.msra.mxu0 %v3012
    %4268 = vmatpush.msra.mxu0 %v3011
    %4269 = vmatpush.msra.mxu0 %v3010
    %4270 = vmatmul.f32.gmra.mxu0 %v4179
    %v4271 = vpop.f32.mrf.mxu0
    %v4272 = vadd.f32 0.0, %v4271
    %4273 = vdwg.mxu0
    %4274 = vmatpush.msra.mxu0 0.0
    %4275 = vmatpush.msra.mxu0 0.0
    %4276 = vmatpush.msra.mxu0 0.0
    %4277 = vmatpush.msra.mxu0 0.0
    %4278 = vmatpush.msra.mxu0 0.0
    %4279 = vmatpush.msra.mxu0 0.0
    %4280 = vmatpush.msra.mxu0 0.0
    %4281 = vmatpush.msra.mxu0 0.0
    %4282 = vmatpush.msra.mxu0 0.0
    %4283 = vmatpush.msra.mxu0 0.0
    %4284 = vmatpush.msra.mxu0 0.0
    %4285 = vmatpush.msra.mxu0 0.0
    %4286 = vmatpush.msra.mxu0 %v3009
    %4287 = vmatpush.msra.mxu0 %v3008
    %4288 = vmatpush.msra.mxu0 %v3007
    %4289 = vmatpush.msra.mxu0 %v3006
    %4290 = vmatmul.f32.gmra.mxu0 %v4212
    %v4291 = vpop.f32.mrf.mxu0
    %v4292 = vadd.f32 %v4272, %v4291
    %4293 = vdwg.mxu0
    %v4294 = vadd.f32 %v4292, %v3056
    %v4295 = vxor.u32 %v4294, 2147483648
    %v4296 = vmul.f32 %v4295, 1.442695
    %v4297 = vpow.pop %v4296
    %v4298 = vadd.f32 %v4297, 1.0
    %v4299 = vrcp.pop %v4298
    %v4300 = vmul.f32 %v4298, %v4299
    %v4301 = vsub.f32 1.0, %v4300
    %v4302 = vmul.f32 %v4299, %v4301
    %v4303 = vadd.f32 %v4299, %v4302
    %vm4304 = vweird.f32 %v4298
    %vm4305 = vweird.f32 %v4299
    %vm4306 = vmor %vm4304, %vm4305
    %v4307 = vsel %vm4306, %v4299, %v4303
    %v4308 = vand.u32 2147483647, %v4298
    %vm4309 = vcmp.eq.f32.partialorder %v4308, 8.507059e+37
    %v4310 = vand.u32 %v4298, 2147483648
    %v4311 = vor.u32 1.1754944e-38, %v4310
    %v4312 = vsel %vm4309, %v4311, %v4307
    %v4313 = vmul.f32 1.0, %v4312
    %v4314 = vmul.f32 %v4253, %v4177
    %v4316 = vsel %vm491, %v4314, 0
    %4318 = vmatpush.msra.mxu0 0.0
    %4319 = vmatpush.msra.mxu0 0.0
    %4320 = vmatpush.msra.mxu0 0.0
    %4321 = vmatpush.msra.mxu0 0.0
    %4322 = vmatpush.msra.mxu0 0.0
    %4323 = vmatpush.msra.mxu0 0.0
    %4324 = vmatpush.msra.mxu0 0.0
    %4325 = vmatpush.msra.mxu0 0.0
    %4326 = vmatpush.msra.mxu0 0.0
    %4327 = vmatpush.msra.mxu0 0.0
    %4328 = vmatpush.msra.mxu0 0.0
    %4329 = vmatpush.msra.mxu0 0.0
    %4330 = vmatpush.msra.mxu0 %v3086
    %4331 = vmatpush.msra.mxu0 %v3085
    %4332 = vmatpush.msra.mxu0 %v3084
    %4333 = vmatpush.msra.mxu0 %v3083
    %4334 = vmatmul.f32.gmra.mxu0 %v4316
    %v4335 = vpop.f32.mrf.mxu0
    %v4336 = vadd.f32 0.0, %v4335
    %4337 = vdwg.mxu0
    %4338 = vmatpush.msra.mxu0 0.0
    %4339 = vmatpush.msra.mxu0 0.0
    %4340 = vmatpush.msra.mxu0 0.0
    %4341 = vmatpush.msra.mxu0 0.0
    %4342 = vmatpush.msra.mxu0 0.0
    %4343 = vmatpush.msra.mxu0 0.0
    %4344 = vmatpush.msra.mxu0 0.0
    %4345 = vmatpush.msra.mxu0 0.0
    %4346 = vmatpush.msra.mxu0 0.0
    %4347 = vmatpush.msra.mxu0 0.0
    %4348 = vmatpush.msra.mxu0 0.0
    %4349 = vmatpush.msra.mxu0 0.0
    %4350 = vmatpush.msra.mxu0 %v3081
    %4351 = vmatpush.msra.mxu0 %v3080
    %4352 = vmatpush.msra.mxu0 %v3079
    %4353 = vmatpush.msra.mxu0 %v3078
    %4354 = vmatmul.f32.gmra.mxu0 %v4212
    %v4355 = vpop.f32.mrf.mxu0
    %v4356 = vadd.f32 %v4336, %v4355
    %4357 = vdwg.mxu0
    %v4358 = vadd.f32 %v4356, %v3132
    %v4359 = vtanh.pop %v4358
    %v4360 = vmul.f32 %v4313, %v4177
    %v4361 = vsub.f32 1.0, %v4313
    %v4362 = vmul.f32 %v4361, %v4359
    %v4363 = vadd.f32 %v4360, %v4362
    %4364 = vrot.lane.b32.xlu0 %v4004, 32
    %v4365 = vpop.permute.xlu0 %4364
    %4367 = vrot.lane.b32.xlu0 %v4177, 64
    %v4368 = vpop.permute.xlu0 %4367
    %4371 = vrot.lane.b32.xlu0 %v4363, 96
    %v4372 = vpop.permute.xlu0 %4371
    %v4374 = vsel %vm491, %v3831, %v4365
    %vm4375 = vcmask 523264
    %v4376 = vsel %vm4375, %v4374, %v4368
    %vm4377 = vcmask 785408
    %v4378 = vsel %vm4377, %v4376, %v4372
    %v4379 = vld [vmem:[%s39] sm:$0xff]
    %v4380 = vld [vmem:[%s39 + $0x8] sm:$0xff]
    %v4381 = vld [vmem:[%s39 + $0x10] sm:$0xff]
    %v4382 = vld [vmem:[%s39 + $0x18] sm:$0xff]
    %v4383 = vld [vmem:[%s39 + $0x20] sm:$0xff]
    %v4384 = vld [vmem:[%s39 + $0x28] sm:$0xff]
    %v4385 = vld [vmem:[%s39 + $0x30] sm:$0xff]
    %v4386 = vld [vmem:[%s39 + $0x38] sm:$0xff]
    %v4387 = vld [vmem:[%s39 + $0x40] sm:$0xff]
    %v4388 = vld [vmem:[%s39 + $0x48] sm:$0xff]
    %v4389 = vld [vmem:[%s39 + $0x50] sm:$0xff]
    %v4390 = vld [vmem:[%s39 + $0x58] sm:$0xff]
    %v4391 = vld [vmem:[%s39 + $0x60] sm:$0xff]
    %v4392 = vld [vmem:[%s39 + $0x68] sm:$0xff]
    %v4393 = vld [vmem:[%s39 + $0x70] sm:$0xff]
    %v4394 = vld [vmem:[%s39 + $0x78] sm:$0xff]
    %v4395 = vld [vmem:[#allocation31] sm:$0x1]
    %v4397 = vperm.slane %v4395, 0
    %4399 = vmatpush.msra.mxu0 %v4394
    %4400 = vmatpush.msra.mxu0 %v4393
    %4401 = vmatpush.msra.mxu0 %v4392
    %4402 = vmatpush.msra.mxu0 %v4391
    %4403 = vmatpush.msra.mxu0 %v4390
    %4404 = vmatpush.msra.mxu0 %v4389
    %4405 = vmatpush.msra.mxu0 %v4388
    %4406 = vmatpush.msra.mxu0 %v4387
    %4407 = vmatpush.msra.mxu0 %v4386
    %4408 = vmatpush.msra.mxu0 %v4385
    %4409 = vmatpush.msra.mxu0 %v4384
    %4410 = vmatpush.msra.mxu0 %v4383
    %4411 = vmatpush.msra.mxu0 %v4382
    %4412 = vmatpush.msra.mxu0 %v4381
    %4413 = vmatpush.msra.mxu0 %v4380
    %4414 = vmatpush.msra.mxu0 %v4379
    %4415 = vmatmul.f32.gmra.mxu0 %v4378
    %v4416 = vpop.f32.mrf.mxu0
    %v4417 = vadd.f32 %v4397, %v4416
    %4418 = vdwg.mxu0
    %vm4419 = vcmask 1043456
    %v4420 = vsel %vm4419, %v4417, 0.0
    %4421 = vadd.xlane.f32.xlu0 %v4420
    %v4422 = vpop.xlane.xlu0 %4421
    %v4423 = vrcp.pop 128.0
    %v4424 = vmul.f32 128.0, %v4423
    %v4425 = vsub.f32 1.0, %v4424
    %v4426 = vmul.f32 %v4423, %v4425
    %v4427 = vadd.f32 %v4423, %v4426
    %vm4428 = vweird.f32 %v4423
    %v4429 = vsel %vm4428, %v4423, %v4427
    %v4430 = vmul.f32 %v4422, %v4429
    %v4431 = vmul.f32 %v4417, %v4417
    %v4432 = vsel %vm4419, %v4431, 0.0
    %4433 = vadd.xlane.f32.xlu0 %v4432
    %v4434 = vpop.xlane.xlu0 %4433
    %v4435 = vmul.f32 %v4434, %v4429
    %v4436 = vmul.f32 %v4430, %v4430
    %v4437 = vsub.f32 %v4435, %v4436
    %v4438 = vsub.f32 %v4417, %v4430
    %v4439 = vadd.f32 %v4437, 1e-05
    %v4440 = vrsqrt.pop %v4439
    %v4441 = vmul.f32 %v4440, %v4439
    %v4442 = vmul.f32 %v4441, %v4440
    %v4443 = vmul.f32 0.5, %v4442
    %v4444 = vsub.f32 1.5, %v4443
    %v4445 = vmul.f32 %v4440, %v4444
    %vm4446 = vweird.f32 %v4439
    %vm4447 = vweird.f32 %v4440
    %vm4448 = vmor %vm4446, %vm4447
    %v4449 = vsel %vm4448, %v4440, %v4445
    %v4450 = vmul.f32 %v4438, %v4449
    %v4451 = vtanh.pop %v4450
    %v4452 = vld [vmem:[%s43] sm:$0xff]
    %v4453 = vld [vmem:[%s43 + $0x8] sm:$0xff]
    %v4454 = vld [vmem:[%s43 + $0x10] sm:$0xff]
    %v4455 = vld [vmem:[%s43 + $0x18] sm:$0xff]
    %v4456 = vld [vmem:[%s43 + $0x20] sm:$0xff]
    %v4457 = vld [vmem:[%s43 + $0x28] sm:$0xff]
    %v4458 = vld [vmem:[%s43 + $0x30] sm:$0xff]
    %v4459 = vld [vmem:[%s43 + $0x38] sm:$0xff]
    %v4460 = vld [vmem:[%s43 + $0x40] sm:$0xff]
    %v4461 = vld [vmem:[%s43 + $0x48] sm:$0xff]
    %v4462 = vld [vmem:[%s43 + $0x50] sm:$0xff]
    %v4463 = vld [vmem:[%s43 + $0x58] sm:$0xff]
    %v4464 = vld [vmem:[%s43 + $0x60] sm:$0xff]
    %v4465 = vld [vmem:[%s43 + $0x68] sm:$0xff]
    %v4466 = vld [vmem:[%s43 + $0x70] sm:$0xff]
    %v4467 = vld [vmem:[%s43 + $0x78] sm:$0xff]
    %v4468 = vld [vmem:[%s45] sm:$0x1]
    %v4470 = vperm.slane %v4468, 0
    %4472 = vmatpush.msra.mxu0 %v4467
    %4473 = vmatpush.msra.mxu0 %v4466
    %4474 = vmatpush.msra.mxu0 %v4465
    %4475 = vmatpush.msra.mxu0 %v4464
    %4476 = vmatpush.msra.mxu0 %v4463
    %4477 = vmatpush.msra.mxu0 %v4462
    %4478 = vmatpush.msra.mxu0 %v4461
    %4479 = vmatpush.msra.mxu0 %v4460
    %4480 = vmatpush.msra.mxu0 %v4459
    %4481 = vmatpush.msra.mxu0 %v4458
    %4482 = vmatpush.msra.mxu0 %v4457
    %4483 = vmatpush.msra.mxu0 %v4456
    %4484 = vmatpush.msra.mxu0 %v4455
    %4485 = vmatpush.msra.mxu0 %v4454
    %4486 = vmatpush.msra.mxu0 %v4453
    %4487 = vmatpush.msra.mxu0 %v4452
    %4488 = vmatmul.f32.gmra.mxu0 %v4451
    %v4489 = vpop.f32.mrf.mxu0
    %v4490 = vadd.f32 %v4470, %v4489
    %4491 = vdwg.mxu0
    %v4492 = vsel %vm4419, %v4490, 0.0
    %4493 = vadd.xlane.f32.xlu0 %v4492
    %v4494 = vpop.xlane.xlu0 %4493
    %v4495 = vmul.f32 %v4494, %v4429
    %v4496 = vmul.f32 %v4490, %v4490
    %v4497 = vsel %vm4419, %v4496, 0.0
    %4498 = vadd.xlane.f32.xlu0 %v4497
    %v4499 = vpop.xlane.xlu0 %4498
    %v4500 = vmul.f32 %v4499, %v4429
    %v4501 = vmul.f32 %v4495, %v4495
    %v4502 = vsub.f32 %v4500, %v4501
    %v4503 = vsub.f32 %v4490, %v4495
    %v4504 = vadd.f32 %v4502, 1e-05
    %v4505 = vrsqrt.pop %v4504
    %v4506 = vmul.f32 %v4505, %v4504
    %v4507 = vmul.f32 %v4506, %v4505
    %v4508 = vmul.f32 0.5, %v4507
    %v4509 = vsub.f32 1.5, %v4508
    %v4510 = vmul.f32 %v4505, %v4509
    %vm4511 = vweird.f32 %v4504
    %vm4512 = vweird.f32 %v4505
    %vm4513 = vmor %vm4511, %vm4512
    %v4514 = vsel %vm4513, %v4505, %v4510
    %v4515 = vmul.f32 %v4503, %v4514
    %v4516 = vtanh.pop %v4515
    %v4517 = vld [vmem:[%s47] sm:$0xff]
    %v4518 = vld [vmem:[%s47 + $0x8] sm:$0xff]
    %v4519 = vld [vmem:[%s47 + $0x10] sm:$0xff]
    %v4520 = vld [vmem:[%s47 + $0x18] sm:$0xff]
    %v4521 = vld [vmem:[%s47 + $0x20] sm:$0xff]
    %v4522 = vld [vmem:[%s47 + $0x28] sm:$0xff]
    %v4523 = vld [vmem:[%s47 + $0x30] sm:$0xff]
    %v4524 = vld [vmem:[%s47 + $0x38] sm:$0xff]
    %v4525 = vld [vmem:[%s47 + $0x40] sm:$0xff]
    %v4526 = vld [vmem:[%s47 + $0x48] sm:$0xff]
    %v4527 = vld [vmem:[%s47 + $0x50] sm:$0xff]
    %v4528 = vld [vmem:[%s47 + $0x58] sm:$0xff]
    %v4529 = vld [vmem:[%s47 + $0x60] sm:$0xff]
    %v4530 = vld [vmem:[%s47 + $0x68] sm:$0xff]
    %v4531 = vld [vmem:[%s47 + $0x70] sm:$0xff]
    %v4532 = vld [vmem:[%s47 + $0x78] sm:$0xff]
    %v4533 = vld [vmem:[%s49] sm:$0x1]
    %v4535 = vperm.slane %v4533, 0
    %4537 = vmatpush.msra.mxu0 %v4532
    %4538 = vmatpush.msra.mxu0 %v4531
    %4539 = vmatpush.msra.mxu0 %v4530
    %4540 = vmatpush.msra.mxu0 %v4529
    %4541 = vmatpush.msra.mxu0 %v4528
    %4542 = vmatpush.msra.mxu0 %v4527
    %4543 = vmatpush.msra.mxu0 %v4526
    %4544 = vmatpush.msra.mxu0 %v4525
    %4545 = vmatpush.msra.mxu0 %v4524
    %4546 = vmatpush.msra.mxu0 %v4523
    %4547 = vmatpush.msra.mxu0 %v4522
    %4548 = vmatpush.msra.mxu0 %v4521
    %4549 = vmatpush.msra.mxu0 %v4520
    %4550 = vmatpush.msra.mxu0 %v4519
    %4551 = vmatpush.msra.mxu0 %v4518
    %4552 = vmatpush.msra.mxu0 %v4517
    %4553 = vmatmul.f32.gmra.mxu0 %v4516
    %v4554 = vpop.f32.mrf.mxu0
    %v4555 = vadd.f32 %v4535, %v4554
    %4556 = vdwg.mxu0
    %vm4557 = vcmask 519168
    %v4558 = vsel %vm4557, %v4555, 0.0
    %4559 = vadd.xlane.f32.xlu0 %v4558
    %v4560 = vpop.xlane.xlu0 %4559
    %v4561 = vrcp.pop 64.0
    %v4562 = vmul.f32 64.0, %v4561
    %v4563 = vsub.f32 1.0, %v4562
    %v4564 = vmul.f32 %v4561, %v4563
    %v4565 = vadd.f32 %v4561, %v4564
    %vm4566 = vweird.f32 %v4561
    %v4567 = vsel %vm4566, %v4561, %v4565
    %v4568 = vmul.f32 %v4560, %v4567
    %v4569 = vmul.f32 %v4555, %v4555
    %v4570 = vsel %vm4557, %v4569, 0.0
    %4571 = vadd.xlane.f32.xlu0 %v4570
    %v4572 = vpop.xlane.xlu0 %4571
    %v4573 = vmul.f32 %v4572, %v4567
    %v4574 = vmul.f32 %v4568, %v4568
    %v4575 = vsub.f32 %v4573, %v4574
    %v4576 = vsub.f32 %v4555, %v4568
    %v4577 = vadd.f32 %v4575, 1e-05
    %v4578 = vrsqrt.pop %v4577
    %v4579 = vmul.f32 %v4578, %v4577
    %v4580 = vmul.f32 %v4579, %v4578
    %v4581 = vmul.f32 0.5, %v4580
    %v4582 = vsub.f32 1.5, %v4581
    %v4583 = vmul.f32 %v4578, %v4582
    %vm4584 = vweird.f32 %v4577
    %vm4585 = vweird.f32 %v4578
    %vm4586 = vmor %vm4584, %vm4585
    %v4587 = vsel %vm4586, %v4578, %v4583
    %v4588 = vmul.f32 %v4576, %v4587
    %v4589 = vtanh.pop %v4588
    %v4590 = vld [vmem:[#allocation32] sm:$0xff]
    %v4591 = vld [vmem:[#allocation32 + $0x8] sm:$0xff]
    %v4592 = vld [vmem:[#allocation32 + $0x10] sm:$0xff]
    %v4593 = vld [vmem:[#allocation32 + $0x18] sm:$0xff]
    %v4594 = vld [vmem:[#allocation32 + $0x20] sm:$0xff]
    %v4595 = vld [vmem:[#allocation32 + $0x28] sm:$0xff]
    %v4596 = vld [vmem:[#allocation32 + $0x30] sm:$0xff]
    %v4597 = vld [vmem:[#allocation32 + $0x38] sm:$0xff]
    %v4598 = vld [vmem:[%s53] sm:$0x1]
    %v4600 = vperm.slane %v4598, 0
    %v4603 = vsel %vm4375, %v4589, 0
    %4605 = vmatpush.msra.mxu0 0.0
    %4606 = vmatpush.msra.mxu0 0.0
    %4607 = vmatpush.msra.mxu0 0.0
    %4608 = vmatpush.msra.mxu0 0.0
    %4609 = vmatpush.msra.mxu0 0.0
    %4610 = vmatpush.msra.mxu0 0.0
    %4611 = vmatpush.msra.mxu0 0.0
    %4612 = vmatpush.msra.mxu0 0.0
    %4613 = vmatpush.msra.mxu0 %v4597
    %4614 = vmatpush.msra.mxu0 %v4596
    %4615 = vmatpush.msra.mxu0 %v4595
    %4616 = vmatpush.msra.mxu0 %v4594
    %4617 = vmatpush.msra.mxu0 %v4593
    %4618 = vmatpush.msra.mxu0 %v4592
    %4619 = vmatpush.msra.mxu0 %v4591
    %4620 = vmatpush.msra.mxu0 %v4590
    %4621 = vmatmul.f32.gmra.mxu0 %v4603
    %v4622 = vpop.f32.mrf.mxu0
    %v4623 = vadd.f32 %v4600, %v4622
    %4624 = vdwg.mxu0
    %v4625 = vsel %vm4557, %v4623, 0.0
    %4626 = vadd.xlane.f32.xlu0 %v4625
    %v4627 = vpop.xlane.xlu0 %4626
    %v4628 = vmul.f32 %v4627, %v4567
    %v4629 = vmul.f32 %v4623, %v4623
    %v4630 = vsel %vm4557, %v4629, 0.0
    %4631 = vadd.xlane.f32.xlu0 %v4630
    %v4632 = vpop.xlane.xlu0 %4631
    %v4633 = vmul.f32 %v4632, %v4567
    %v4634 = vmul.f32 %v4628, %v4628
    %v4635 = vsub.f32 %v4633, %v4634
    %v4636 = vsub.f32 %v4623, %v4628
    %v4637 = vadd.f32 %v4635, 1e-05
    %v4638 = vrsqrt.pop %v4637
    %v4639 = vmul.f32 %v4638, %v4637
    %v4640 = vmul.f32 %v4639, %v4638
    %v4641 = vmul.f32 0.5, %v4640
    %v4642 = vsub.f32 1.5, %v4641
    %v4643 = vmul.f32 %v4638, %v4642
    %vm4644 = vweird.f32 %v4637
    %vm4645 = vweird.f32 %v4638
    %vm4646 = vmor %vm4644, %vm4645
    %v4647 = vsel %vm4646, %v4638, %v4643
    %v4648 = vmul.f32 %v4636, %v4647
    %v4649 = vtanh.pop %v4648
    %v4650 = vld [vmem:[%s55] sm:$0xff]
    %v4651 = vld [vmem:[%s55 + $0x8] sm:$0xff]
    %v4652 = vld [vmem:[%s55 + $0x10] sm:$0xff]
    %v4653 = vld [vmem:[%s55 + $0x18] sm:$0xff]
    %v4654 = vld [vmem:[%s55 + $0x20] sm:$0xff]
    %v4655 = vld [vmem:[%s55 + $0x28] sm:$0xff]
    %v4656 = vld [vmem:[%s55 + $0x30] sm:$0xff]
    %v4657 = vld [vmem:[%s55 + $0x38] sm:$0xff]
    %v4658 = vld [vmem:[#allocation2] sm:$0x1]
    %v4660 = vperm.slane %v4658, 0
    %v4663 = vsel %vm4375, %v4649, 0
    %4665 = vmatpush.msra.mxu0 0.0
    %4666 = vmatpush.msra.mxu0 0.0
    %4667 = vmatpush.msra.mxu0 0.0
    %4668 = vmatpush.msra.mxu0 0.0
    %4669 = vmatpush.msra.mxu0 0.0
    %4670 = vmatpush.msra.mxu0 0.0
    %4671 = vmatpush.msra.mxu0 0.0
    %4672 = vmatpush.msra.mxu0 0.0
    %4673 = vmatpush.msra.mxu0 %v4657
    %4674 = vmatpush.msra.mxu0 %v4656
    %4675 = vmatpush.msra.mxu0 %v4655
    %4676 = vmatpush.msra.mxu0 %v4654
    %4677 = vmatpush.msra.mxu0 %v4653
    %4678 = vmatpush.msra.mxu0 %v4652
    %4679 = vmatpush.msra.mxu0 %v4651
    %4680 = vmatpush.msra.mxu0 %v4650
    %4681 = vmatmul.f32.gmra.mxu0 %v4663
    %v4682 = vpop.f32.mrf.mxu0
    %v4683 = vadd.f32 %v4660, %v4682
    %4684 = vdwg.mxu0
    %vm4685 = vcmask 3072
    %4686 = vst.msk [vmem:[%s59] sm:$0xf] %vm4685, %v4683
    // Predicated region
    $region198: #{gru_forward.1} parent=1 // pred_check
      _
    $region199: #{gru_forward.1} parent=1 // pred_check_branch
      %4688 = sbr.rel (0) target = $region201
    $region200: #{gru_forward.1} parent=1 // pred_region
      _
    $region201: #{gru_forward.1} parent=1 // pred_fallthru
      _
    // Predicated region
    $region202: #{gru_forward.1} parent=1 // pred_check
      _
    $region203: #{gru_forward.1} parent=1 // pred_check_branch
      %4690 = sbr.rel (0) target = $region205
    $region204: #{gru_forward.1} parent=1 // pred_region
      _
    $region205: #{gru_forward.1} parent=1 // pred_fallthru
      _
    %4691 = vsyncpa [#allocation4], 1
    %4692 = vsyncpa [#allocation6], 1
    %4693 = vsyncpa [#allocation9], 1
    %4694 = vsyncpa [#allocation12], 1
    %4695 = vsyncpa [#allocation15], 1
    %4696 = vsyncpa [#allocation18], 1
    %4697 = vsyncpa [#allocation21], 1
    %4698 = vsyncpa [#allocation24], 1
    %4699 = vsyncpa [#allocation27], 1
    %4700 = vsyncpa [#allocation30], 1
    %4701 = vsyncpa [#allocation33], 1

</llo_original>
